<compile_context>
chip_gen: v7x
topology: tpu7x:2x2x1
jax: 0.10.0
libtpu: 0.0.40
codegen_flags: <defaults>
</compile_context>

<pallas_src>
import functools

import jax
import jax.numpy as jnp
from jax import lax
from jax.experimental import pallas as pl
from jax.experimental.pallas import tpu as pltpu

EPS = 1e-5
# MXU operand dtype.  Set to jnp.bfloat16 on v6e/v7x for ~2x matmul throughput
# (accumulation stays f32 via preferred_element_type).  Kept f32 here so the
# strict 1e-3 self-check against the f32 reference holds.
MXU_DTYPE = jnp.float32
VMEM_LIMIT = 32 * 1024 * 1024


# ------------------------------ helpers ------------------------------------ #

def _pick_rows(total, target=512):
    """Largest row-tile <= target that divides `total` (prefer multiples of 8)."""
    if total <= target:
        return total
    for t in range(target, 7, -1):
        if total % t == 0 and t % 8 == 0:
            return t
    for t in range(target, 0, -1):
        if total % t == 0:
            return t
    return total


def _tap_matmuls(x, w_ref, H, W, d, cin):
    """9 shifted-window MXU matmuls of a padded (H+2d, W+2d, Cin) image."""
    acc = None
    for kh in range(3):
        for kw in range(3):
            tap = x[kh * d:kh * d + H, kw * d:kw * d + W, :]      # (H, W, Cin)
            contrib = jnp.dot(tap.reshape(H * W, cin),
                              w_ref[kh * 3 + kw].astype(MXU_DTYPE),
                              preferred_element_type=jnp.float32)
            acc = contrib if acc is None else acc + contrib
    return acc                                                     # (H*W, Cout) f32


# ----------------------------- Pallas kernels ------------------------------ #

def _maxpool_kernel(x00_ref, x01_ref, x10_ref, x11_ref, o_ref):
    # 2x2 max-pool, stride 2: elementwise max of four strided views, presented
    # as lane-dense (rows, Wp*C) slabs.
    o_ref[...] = jnp.maximum(jnp.maximum(x00_ref[...], x01_ref[...]),
                             jnp.maximum(x10_ref[...], x11_ref[...]))


def _conv_stats_kernel(xp_ref, w_ref, y_ref, sum_ref, sq_ref, *, H, W, d, cin, cout):
    # One batch element per grid step.
    #   xp_ref : (1, H+2d, W+2d, Cin)  zero-padded image
    #   w_ref  : (9, Cin, Cout)        3x3 weights, tap-major (kh, kw)
    #   y_ref  : (1, H*W, Cout)        raw conv output (pre-BN, bias-free)
    #   sum_ref/sq_ref : (1, 1, Cout)  per-image channel sum / sum-of-squares
    x = xp_ref[0].astype(MXU_DTYPE)
    acc = _tap_matmuls(x, w_ref, H, W, d, cin)
    y_ref[0] = acc
    sum_ref[...] = jnp.sum(acc, axis=0, keepdims=True).reshape(1, 1, cout)
    sq_ref[...] = jnp.sum(acc * acc, axis=0, keepdims=True).reshape(1, 1, cout)


def _act_conv_stats_kernel(yp_ref, s_ref, t_ref, w_ref, y_ref, sum_ref, sq_ref,
                           *, H, W, d, cin, cout):
    # Fused: (folded BN affine + ReLU of the previous layer) -> conv -> stats.
    #   yp_ref : (1, H+2d, W+2d, Cin)  zero-padded RAW previous conv output
    #   s_ref/t_ref : (1, Cin)         previous layer's folded BN scale / shift
    yprev = yp_ref[0]                                              # (Hp2, Wp2, Cin)
    act = jnp.maximum(yprev * s_ref[...] + t_ref[...], 0.0)
    # Re-zero the halo: padding must happen AFTER the activation, but the input
    # was padded before it (max(0*s + t, 0) != 0 in general at the border).
    Hp2, Wp2 = H + 2 * d, W + 2 * d
    r = lax.broadcasted_iota(jnp.int32, (Hp2, Wp2, 1), 0)
    c = lax.broadcasted_iota(jnp.int32, (Hp2, Wp2, 1), 1)
    inside = (r >= d) & (r < d + H) & (c >= d) & (c < d + W)
    x = jnp.where(inside, act, 0.0).astype(MXU_DTYPE)
    acc = _tap_matmuls(x, w_ref, H, W, d, cin)
    y_ref[0] = acc
    sum_ref[...] = jnp.sum(acc, axis=0, keepdims=True).reshape(1, 1, cout)
    sq_ref[...] = jnp.sum(acc * acc, axis=0, keepdims=True).reshape(1, 1, cout)


def _bn_relu_kernel(y_ref, s_ref, t_ref, o_ref):
    # Folded BN affine + ReLU:  max(y * s + t, 0)  on a lane-dense slab.
    o_ref[...] = jnp.maximum(y_ref[...] * s_ref[...] + t_ref[...], 0.0)


# ----------------------------- JAX wrappers -------------------------------- #

def maxpool2x2(x_nhwc):
    N, H, W, C = x_nhwc.shape
    Hp, Wp = H // 2, W // 2
    R, L = N * Hp, Wp * C
    views = [x_nhwc[:, i::2, j::2, :].reshape(R, L)
             for i in (0, 1) for j in (0, 1)]
    tile = _pick_rows(R)
    spec = pl.BlockSpec((tile, L), lambda r: (r, 0))
    out = pl.pallas_call(
        _maxpool_kernel,
        out_shape=jax.ShapeDtypeStruct((R, L), x_nhwc.dtype),
        grid=(R // tile,),
        in_specs=[spec] * 4,
        out_specs=spec,
        compiler_params=pltpu.CompilerParams(
            dimension_semantics=("parallel",), vmem_limit_bytes=VMEM_LIMIT),
    )(*views)
    return out.reshape(N, Hp, Wp, C)


def _conv_outs_and_specs(N, M, Cout):
    out_shape = (jax.ShapeDtypeStruct((N, M, Cout), jnp.float32),
                 jax.ShapeDtypeStruct((N, 1, Cout), jnp.float32),
                 jax.ShapeDtypeStruct((N, 1, Cout), jnp.float32))
    out_specs = (pl.BlockSpec((1, M, Cout), lambda n: (n, 0, 0)),
                 pl.BlockSpec((1, 1, Cout), lambda n: (n, 0, 0)),
                 pl.BlockSpec((1, 1, Cout), lambda n: (n, 0, 0)))
    return out_shape, out_specs


def conv3x3_stats(xp, w_hwio, H, W, d):
    """Dilated 3x3 conv (bias-free) + per-image BN partials on a padded input."""
    N, Hp2, Wp2, Cin = xp.shape
    Cout = w_hwio.shape[-1]
    M = H * W
    wmat = w_hwio.reshape(9, Cin, Cout)
    kern = functools.partial(_conv_stats_kernel, H=H, W=W, d=d, cin=Cin, cout=Cout)
    flops = 2 * N * M * 9 * Cin * Cout
    bytes_accessed = 4 * (N * Hp2 * Wp2 * Cin + 9 * Cin * Cout
                          + N * M * Cout + 2 * N * Cout)
    out_shape, out_specs = _conv_outs_and_specs(N, M, Cout)
    return pl.pallas_call(
        kern,
        out_shape=out_shape,
        grid=(N,),
        in_specs=[pl.BlockSpec((1, Hp2, Wp2, Cin), lambda n: (n, 0, 0, 0)),
                  pl.BlockSpec((9, Cin, Cout), lambda n: (0, 0, 0))],
        out_specs=out_specs,
        compiler_params=pltpu.CompilerParams(
            dimension_semantics=("parallel",), vmem_limit_bytes=VMEM_LIMIT),
        cost_estimate=pl.CostEstimate(flops=flops, transcendentals=0,
                                      bytes_accessed=bytes_accessed),
    )(xp, wmat)


def conv3x3_stats_fused_act(yp_raw, scale_prev, shift_prev, w_hwio, H, W, d):
    """(BN affine + ReLU of previous layer) fused into the next dilated conv."""
    N, Hp2, Wp2, Cin = yp_raw.shape
    Cout = w_hwio.shape[-1]
    M = H * W
    wmat = w_hwio.reshape(9, Cin, Cout)
    s_row = scale_prev.reshape(1, Cin).astype(jnp.float32)
    t_row = shift_prev.reshape(1, Cin).astype(jnp.float32)
    kern = functools.partial(_act_conv_stats_kernel, H=H, W=W, d=d, cin=Cin, cout=Cout)
    flops = 2 * N * M * 9 * Cin * Cout
    bytes_accessed = 4 * (N * Hp2 * Wp2 * Cin + 9 * Cin * Cout + 2 * Cin
                          + N * M * Cout + 2 * N * Cout)
    out_shape, out_specs = _conv_outs_and_specs(N, M, Cout)
    return pl.pallas_call(
        kern,
        out_shape=out_shape,
        grid=(N,),
        in_specs=[pl.BlockSpec((1, Hp2, Wp2, Cin), lambda n: (n, 0, 0, 0)),
                  pl.BlockSpec((1, Cin), lambda n: (0, 0)),
                  pl.BlockSpec((1, Cin), lambda n: (0, 0)),
                  pl.BlockSpec((9, Cin, Cout), lambda n: (0, 0, 0))],
        out_specs=out_specs,
        compiler_params=pltpu.CompilerParams(
            dimension_semantics=("parallel",), vmem_limit_bytes=VMEM_LIMIT),
        cost_estimate=pl.CostEstimate(flops=flops, transcendentals=0,
                                      bytes_accessed=bytes_accessed),
    )(yp_raw, s_row, t_row, wmat)


def bn_relu_apply(y_flat, scale, shift, N, H, W, Cout):
    """y -> max(y*scale + shift, 0), lane-dense over (N*H, W*Cout) slabs."""
    R, L = N * H, W * Cout
    y2d = y_flat.reshape(R, L)
    s_row = jnp.tile(scale, W).reshape(1, L)
    t_row = jnp.tile(shift, W).reshape(1, L)
    tile = _pick_rows(R)
    out = pl.pallas_call(
        _bn_relu_kernel,
        out_shape=jax.ShapeDtypeStruct((R, L), jnp.float32),
        grid=(R // tile,),
        in_specs=[pl.BlockSpec((tile, L), lambda r: (r, 0)),
                  pl.BlockSpec((1, L), lambda r: (0, 0)),
                  pl.BlockSpec((1, L), lambda r: (0, 0))],
        out_specs=pl.BlockSpec((tile, L), lambda r: (r, 0)),
        compiler_params=pltpu.CompilerParams(
            dimension_semantics=("parallel",), vmem_limit_bytes=VMEM_LIMIT),
    )(y2d, s_row, t_row)
    return out.reshape(N, H, W, Cout)


def _fold_bn(ssum, ssq, gamma, beta, cnt):
    """Fold training-mode BN into one per-channel scale/shift (biased var)."""
    mean = jnp.sum(ssum, axis=(0, 1)) / cnt
    var = jnp.maximum(jnp.sum(ssq, axis=(0, 1)) / cnt - mean * mean, 0.0)
    scale = gamma * lax.rsqrt(var + EPS)
    shift = beta - mean * scale
    return scale, shift


def down_conv_forward(x_nchw, params, dilation=1):
    """DownConv.forward: MaxPool2d(2) -> (Conv3x3 -> BN -> ReLU) x 2.  NCHW in/out."""
    x = jnp.transpose(x_nchw, (0, 2, 3, 1))                # NCHW -> NHWC
    N, H0, W0, _ = x.shape
    if H0 % 2 or W0 % 2:                                   # MaxPool2d(2) floors
        x = x[:, :2 * (H0 // 2), :2 * (W0 // 2), :]
    x = maxpool2x2(x)
    N, H, W, _ = x.shape
    d = dilation
    cnt = jnp.float32(N * H * W)
    (w1, _b1, g1, be1), (w2, _b2, g2, be2) = params
    C1, C2 = w1.shape[-1], w2.shape[-1]

    # NOTE: conv biases are intentionally NOT added -- training-mode BN subtracts
    # the per-channel mean of (conv + b), so they cancel exactly.

    # Layer 1: pad pooled input, conv + per-image BN partials.
    xp = jnp.pad(x, ((0, 0), (d, d), (d, d), (0, 0)))
    y1, s1, q1 = conv3x3_stats(xp, w1, H, W, d)            # y1: raw conv output
    scale1, shift1 = _fold_bn(s1, q1, g1, be1, cnt)

    # Layer 2: fused (BN+ReLU of y1) -> conv + partials (no activation round-trip).
    y1p = jnp.pad(y1.reshape(N, H, W, C1), ((0, 0), (d, d), (d, d), (0, 0)))
    y2, s2, q2 = conv3x3_stats_fused_act(y1p, scale1, shift1, w2, H, W, d)
    scale2, shift2 = _fold_bn(s2, q2, g2, be2, cnt)

    out = bn_relu_apply(y2, scale2, shift2, N, H, W, C2)
    return jnp.transpose(out, (0, 3, 1, 2))                # NHWC -> NCHW


# ---------------------- pure-JAX reference (for check) --------------------- #

def ref_forward(x_nchw, params, dilation=1):
    x = jnp.transpose(x_nchw, (0, 2, 3, 1))
    x = lax.reduce_window(x, -jnp.inf, lax.max, (1, 2, 2, 1), (1, 2, 2, 1), "VALID")
    d = dilation
    for (w, b, g, be) in params:
        y = lax.conv_general_dilated(
            x, w, window_strides=(1, 1), padding=((d, d), (d, d)),
            rhs_dilation=(d, d),
            dimension_numbers=("NHWC", "HWIO", "NHWC")) + b
        mean = jnp.mean(y, axis=(0, 1, 2), keepdims=True)
        var = jnp.mean((y - mean) ** 2, axis=(0, 1, 2), keepdims=True)
        y = (y - mean) / jnp.sqrt(var + EPS) * g + be
        x = jnp.maximum(y, 0.0)
    return jnp.transpose(x, (0, 3, 1, 2))


# --------------------------------- main ------------------------------------ #

if __name__ == "__main__":
    key = jax.random.PRNGKey(0)
    in_channels, out_channels, dilation = 4, 8, 1
    N, H, W = 2, 16, 16

    ks = jax.random.split(key, 9)
    x = jax.random.normal(ks[0], (N, in_channels, H, W), jnp.float32)

    # Conv weights in HWIO (= torch OIHW transposed to (kh, kw, ci, co)); BN gamma/beta.
    def conv_params(kw_key, kb_key, kg_key, kbe_key, cin, cout):
        w = 0.1 * jax.random.normal(kw_key, (3, 3, cin, cout), jnp.float32)
        b = 0.1 * jax.random.normal(kb_key, (cout,), jnp.float32)
        g = 1.0 + 0.1 * jax.random.normal(kg_key, (cout,), jnp.float32)
        be = 0.1 * jax.random.normal(kbe_key, (cout,), jnp.float32)
        return (w, b, g, be)

    params = [
        conv_params(ks[1], ks[2], ks[3], ks[4], in_channels, out_channels),
        conv_params(ks[5], ks[6], ks[7], ks[8], out_channels, out_channels),
    ]

    fwd = jax.jit(lambda xx, pp: down_conv_forward(xx, pp, dilation))
    out = jax.block_until_ready(fwd(x, params))
    ref = jax.block_until_ready(ref_forward(x, params, dilation))

    assert out.shape == (N, out_channels, H // 2, W // 2), out.shape
    assert jnp.allclose(out, ref, rtol=1e-3, atol=1e-3), \
        float(jnp.max(jnp.abs(out - ref)))
    print("KERNEL_OK")
</pallas_src>

<mosaic_0001>
module attributes {stable_mosaic.version = 11 : i64} {
  func.func @_maxpool_kernel(%arg0: i32, %arg1: memref<16x32xf32, #tpu.memory_space<vmem>>, %arg2: memref<16x32xf32, #tpu.memory_space<vmem>>, %arg3: memref<16x32xf32, #tpu.memory_space<vmem>>, %arg4: memref<16x32xf32, #tpu.memory_space<vmem>>, %arg5: memref<16x32xf32, #tpu.memory_space<vmem>>) attributes {dimension_semantics = [#tpu.dimension_semantics<parallel>], iteration_bounds = array<i64: 1>, scalar_prefetch = 0 : i64, scratch_operands = 0 : i64, tpu.core_type = #tpu.core_type<tc>, window_params = [{transform_indices = @transform_0, window_bounds = array<i64: 16, 32>}, {transform_indices = @transform_1, window_bounds = array<i64: 16, 32>}, {transform_indices = @transform_2, window_bounds = array<i64: 16, 32>}, {transform_indices = @transform_3, window_bounds = array<i64: 16, 32>}, {transform_indices = @transform_4, window_bounds = array<i64: 16, 32>}]} {
    %c0 = arith.constant 0 : index
    %c0_0 = arith.constant 0 : index
    %0 = vector.load %arg1[%c0, %c0_0] : memref<16x32xf32, #tpu.memory_space<vmem>>, vector<16x32xf32>
    %c0_1 = arith.constant 0 : index
    %c0_2 = arith.constant 0 : index
    %1 = vector.load %arg2[%c0_1, %c0_2] : memref<16x32xf32, #tpu.memory_space<vmem>>, vector<16x32xf32>
    %2 = arith.maximumf %0, %1 : vector<16x32xf32>
    %c0_3 = arith.constant 0 : index
    %c0_4 = arith.constant 0 : index
    %3 = vector.load %arg3[%c0_3, %c0_4] : memref<16x32xf32, #tpu.memory_space<vmem>>, vector<16x32xf32>
    %c0_5 = arith.constant 0 : index
    %c0_6 = arith.constant 0 : index
    %4 = vector.load %arg4[%c0_5, %c0_6] : memref<16x32xf32, #tpu.memory_space<vmem>>, vector<16x32xf32>
    %5 = arith.maximumf %3, %4 : vector<16x32xf32>
    %6 = arith.maximumf %2, %5 : vector<16x32xf32>
    %c0_7 = arith.constant 0 : index
    %c0_8 = arith.constant 0 : index
    %7 = vector.load %arg5[%c0_7, %c0_8] : memref<16x32xf32, #tpu.memory_space<vmem>>, vector<16x32xf32>
    tpu.vector_store %arg5[%c0_7, %c0_8], %6 {strides = array<i32>} : memref<16x32xf32, #tpu.memory_space<vmem>>, vector<16x32xf32>,
    return
  }
  func.func @transform_0(%arg0: i32) -> (i32, i32) {
    %c0_i32 = arith.constant 0 : i32
    %c0_i32_0 = arith.constant 0 : i32
    return %arg0, %c0_i32 : i32, i32
  }
  func.func @transform_1(%arg0: i32) -> (i32, i32) {
    %c0_i32 = arith.constant 0 : i32
    %c0_i32_0 = arith.constant 0 : i32
    return %arg0, %c0_i32 : i32, i32
  }
  func.func @transform_2(%arg0: i32) -> (i32, i32) {
    %c0_i32 = arith.constant 0 : i32
    %c0_i32_0 = arith.constant 0 : i32
    return %arg0, %c0_i32 : i32, i32
  }
  func.func @transform_3(%arg0: i32) -> (i32, i32) {
    %c0_i32 = arith.constant 0 : i32
    %c0_i32_0 = arith.constant 0 : i32
    return %arg0, %c0_i32 : i32, i32
  }
  func.func @transform_4(%arg0: i32) -> (i32, i32) {
    %c0_i32 = arith.constant 0 : i32
    %c0_i32_0 = arith.constant 0 : i32
    return %arg0, %c0_i32 : i32, i32
  }
}

module attributes {stable_mosaic.version = 11 : i64} {
  func.func @_conv_stats_kernel(%arg0: i32, %arg1: memref<1x10x10x4xf32, #tpu.memory_space<vmem>>, %arg2: memref<9x4x8xf32, #tpu.memory_space<vmem>>, %arg3: memref<1x64x8xf32, #tpu.memory_space<vmem>>, %arg4: memref<1x1x8xf32, #tpu.memory_space<vmem>>, %arg5: memref<1x1x8xf32, #tpu.memory_space<vmem>>) attributes {dimension_semantics = [#tpu.dimension_semantics<parallel>], iteration_bounds = array<i64: 2>, scalar_prefetch = 0 : i64, scratch_operands = 0 : i64, tpu.core_type = #tpu.core_type<tc>, window_params = [{transform_indices = @transform_0, window_bounds = array<i64: 1, 10, 10, 4>}, {pipeline_mode = #tpu.pipeline_mode<synchronous>, transform_indices = @transform_1, window_bounds = array<i64: 9, 4, 8>}, {transform_indices = @transform_2, window_bounds = array<i64: 1, 64, 8>}, {transform_indices = @transform_3, window_bounds = array<i64: 1, 1, 8>}, {transform_indices = @transform_4, window_bounds = array<i64: 1, 1, 8>}]} {
    %c0 = arith.constant 0 : index
    %c0_0 = arith.constant 0 : index
    %c0_1 = arith.constant 0 : index
    %c0_2 = arith.constant 0 : index
    %0 = vector.load %arg1[%c0, %c0_0, %c0_1, %c0_2] : memref<1x10x10x4xf32, #tpu.memory_space<vmem>>, vector<1x10x10x4xf32>
    %1 = vector.shape_cast %0 : vector<1x10x10x4xf32> to vector<10x10x4xf32>
    %2 = vector.extract_strided_slice %1 {offsets = [0, 0, 0], sizes = [8, 8, 4], strides = [1, 1, 1]} : vector<10x10x4xf32> to vector<8x8x4xf32>
    %3 = vector.shape_cast %2 : vector<8x8x4xf32> to vector<64x4xf32>
    %c0_3 = arith.constant 0 : index
    %c0_4 = arith.constant 0 : index
    %c0_5 = arith.constant 0 : index
    %4 = vector.load %arg2[%c0_3, %c0_4, %c0_5] : memref<9x4x8xf32, #tpu.memory_space<vmem>>, vector<1x4x8xf32>
    %5 = vector.shape_cast %4 : vector<1x4x8xf32> to vector<4x8xf32>
    %cst = arith.constant dense<0.000000e+00> : vector<64x8xf32>
    %6 = tpu.matmul %3, %5, %cst {dimension_numbers = #tpu.dot_dimension_numbers<[1], [0], [0], [1], [0, 0, 1, 1], [], []>} : vector<64x4xf32>, vector<4x8xf32>, vector<64x8xf32> -> vector<64x8xf32>
    %7 = vector.extract_strided_slice %1 {offsets = [0, 1, 0], sizes = [8, 8, 4], strides = [1, 1, 1]} : vector<10x10x4xf32> to vector<8x8x4xf32>
    %8 = vector.shape_cast %7 : vector<8x8x4xf32> to vector<64x4xf32>
    %c1 = arith.constant 1 : index
    %c0_6 = arith.constant 0 : index
    %c0_7 = arith.constant 0 : index
    %9 = vector.load %arg2[%c1, %c0_6, %c0_7] : memref<9x4x8xf32, #tpu.memory_space<vmem>>, vector<1x4x8xf32>
    %10 = vector.shape_cast %9 : vector<1x4x8xf32> to vector<4x8xf32>
    %cst_8 = arith.constant dense<0.000000e+00> : vector<64x8xf32>
    %11 = tpu.matmul %8, %10, %cst_8 {dimension_numbers = #tpu.dot_dimension_numbers<[1], [0], [0], [1], [0, 0, 1, 1], [], []>} : vector<64x4xf32>, vector<4x8xf32>, vector<64x8xf32> -> vector<64x8xf32>
    %12 = arith.addf %6, %11 : vector<64x8xf32>
    %13 = vector.extract_strided_slice %1 {offsets = [0, 2, 0], sizes = [8, 8, 4], strides = [1, 1, 1]} : vector<10x10x4xf32> to vector<8x8x4xf32>
    %14 = vector.shape_cast %13 : vector<8x8x4xf32> to vector<64x4xf32>
    %c2 = arith.constant 2 : index
    %c0_9 = arith.constant 0 : index
    %c0_10 = arith.constant 0 : index
    %15 = vector.load %arg2[%c2, %c0_9, %c0_10] : memref<9x4x8xf32, #tpu.memory_space<vmem>>, vector<1x4x8xf32>
    %16 = vector.shape_cast %15 : vector<1x4x8xf32> to vector<4x8xf32>
    %cst_11 = arith.constant dense<0.000000e+00> : vector<64x8xf32>
    %17 = tpu.matmul %14, %16, %cst_11 {dimension_numbers = #tpu.dot_dimension_numbers<[1], [0], [0], [1], [0, 0, 1, 1], [], []>} : vector<64x4xf32>, vector<4x8xf32>, vector<64x8xf32> -> vector<64x8xf32>
    %18 = arith.addf %12, %17 : vector<64x8xf32>
    %19 = vector.extract_strided_slice %1 {offsets = [1, 0, 0], sizes = [8, 8, 4], strides = [1, 1, 1]} : vector<10x10x4xf32> to vector<8x8x4xf32>
    %20 = vector.shape_cast %19 : vector<8x8x4xf32> to vector<64x4xf32>
    %c3 = arith.constant 3 : index
    %c0_12 = arith.constant 0 : index
    %c0_13 = arith.constant 0 : index
    %21 = vector.load %arg2[%c3, %c0_12, %c0_13] : memref<9x4x8xf32, #tpu.memory_space<vmem>>, vector<1x4x8xf32>
    %22 = vector.shape_cast %21 : vector<1x4x8xf32> to vector<4x8xf32>
    %cst_14 = arith.constant dense<0.000000e+00> : vector<64x8xf32>
    %23 = tpu.matmul %20, %22, %cst_14 {dimension_numbers = #tpu.dot_dimension_numbers<[1], [0], [0], [1], [0, 0, 1, 1], [], []>} : vector<64x4xf32>, vector<4x8xf32>, vector<64x8xf32> -> vector<64x8xf32>
    %24 = arith.addf %18, %23 : vector<64x8xf32>
    %25 = vector.extract_strided_slice %1 {offsets = [1, 1, 0], sizes = [8, 8, 4], strides = [1, 1, 1]} : vector<10x10x4xf32> to vector<8x8x4xf32>
    %26 = vector.shape_cast %25 : vector<8x8x4xf32> to vector<64x4xf32>
    %c4 = arith.constant 4 : index
    %c0_15 = arith.constant 0 : index
    %c0_16 = arith.constant 0 : index
    %27 = vector.load %arg2[%c4, %c0_15, %c0_16] : memref<9x4x8xf32, #tpu.memory_space<vmem>>, vector<1x4x8xf32>
    %28 = vector.shape_cast %27 : vector<1x4x8xf32> to vector<4x8xf32>
    %cst_17 = arith.constant dense<0.000000e+00> : vector<64x8xf32>
    %29 = tpu.matmul %26, %28, %cst_17 {dimension_numbers = #tpu.dot_dimension_numbers<[1], [0], [0], [1], [0, 0, 1, 1], [], []>} : vector<64x4xf32>, vector<4x8xf32>, vector<64x8xf32> -> vector<64x8xf32>
    %30 = arith.addf %24, %29 : vector<64x8xf32>
    %31 = vector.extract_strided_slice %1 {offsets = [1, 2, 0], sizes = [8, 8, 4], strides = [1, 1, 1]} : vector<10x10x4xf32> to vector<8x8x4xf32>
    %32 = vector.shape_cast %31 : vector<8x8x4xf32> to vector<64x4xf32>
    %c5 = arith.constant 5 : index
    %c0_18 = arith.constant 0 : index
    %c0_19 = arith.constant 0 : index
    %33 = vector.load %arg2[%c5, %c0_18, %c0_19] : memref<9x4x8xf32, #tpu.memory_space<vmem>>, vector<1x4x8xf32>
    %34 = vector.shape_cast %33 : vector<1x4x8xf32> to vector<4x8xf32>
    %cst_20 = arith.constant dense<0.000000e+00> : vector<64x8xf32>
    %35 = tpu.matmul %32, %34, %cst_20 {dimension_numbers = #tpu.dot_dimension_numbers<[1], [0], [0], [1], [0, 0, 1, 1], [], []>} : vector<64x4xf32>, vector<4x8xf32>, vector<64x8xf32> -> vector<64x8xf32>
    %36 = arith.addf %30, %35 : vector<64x8xf32>
    %37 = vector.extract_strided_slice %1 {offsets = [2, 0, 0], sizes = [8, 8, 4], strides = [1, 1, 1]} : vector<10x10x4xf32> to vector<8x8x4xf32>
    %38 = vector.shape_cast %37 : vector<8x8x4xf32> to vector<64x4xf32>
    %c6 = arith.constant 6 : index
    %c0_21 = arith.constant 0 : index
    %c0_22 = arith.constant 0 : index
    %39 = vector.load %arg2[%c6, %c0_21, %c0_22] : memref<9x4x8xf32, #tpu.memory_space<vmem>>, vector<1x4x8xf32>
    %40 = vector.shape_cast %39 : vector<1x4x8xf32> to vector<4x8xf32>
    %cst_23 = arith.constant dense<0.000000e+00> : vector<64x8xf32>
    %41 = tpu.matmul %38, %40, %cst_23 {dimension_numbers = #tpu.dot_dimension_numbers<[1], [0], [0], [1], [0, 0, 1, 1], [], []>} : vector<64x4xf32>, vector<4x8xf32>, vector<64x8xf32> -> vector<64x8xf32>
    %42 = arith.addf %36, %41 : vector<64x8xf32>
    %43 = vector.extract_strided_slice %1 {offsets = [2, 1, 0], sizes = [8, 8, 4], strides = [1, 1, 1]} : vector<10x10x4xf32> to vector<8x8x4xf32>
    %44 = vector.shape_cast %43 : vector<8x8x4xf32> to vector<64x4xf32>
    %c7 = arith.constant 7 : index
    %c0_24 = arith.constant 0 : index
    %c0_25 = arith.constant 0 : index
    %45 = vector.load %arg2[%c7, %c0_24, %c0_25] : memref<9x4x8xf32, #tpu.memory_space<vmem>>, vector<1x4x8xf32>
    %46 = vector.shape_cast %45 : vector<1x4x8xf32> to vector<4x8xf32>
    %cst_26 = arith.constant dense<0.000000e+00> : vector<64x8xf32>
    %47 = tpu.matmul %44, %46, %cst_26 {dimension_numbers = #tpu.dot_dimension_numbers<[1], [0], [0], [1], [0, 0, 1, 1], [], []>} : vector<64x4xf32>, vector<4x8xf32>, vector<64x8xf32> -> vector<64x8xf32>
    %48 = arith.addf %42, %47 : vector<64x8xf32>
    %49 = vector.extract_strided_slice %1 {offsets = [2, 2, 0], sizes = [8, 8, 4], strides = [1, 1, 1]} : vector<10x10x4xf32> to vector<8x8x4xf32>
    %50 = vector.shape_cast %49 : vector<8x8x4xf32> to vector<64x4xf32>
    %c8 = arith.constant 8 : index
    %c0_27 = arith.constant 0 : index
    %c0_28 = arith.constant 0 : index
    %51 = vector.load %arg2[%c8, %c0_27, %c0_28] : memref<9x4x8xf32, #tpu.memory_space<vmem>>, vector<1x4x8xf32>
    %52 = vector.shape_cast %51 : vector<1x4x8xf32> to vector<4x8xf32>
    %cst_29 = arith.constant dense<0.000000e+00> : vector<64x8xf32>
    %53 = tpu.matmul %50, %52, %cst_29 {dimension_numbers = #tpu.dot_dimension_numbers<[1], [0], [0], [1], [0, 0, 1, 1], [], []>} : vector<64x4xf32>, vector<4x8xf32>, vector<64x8xf32> -> vector<64x8xf32>
    %54 = arith.addf %48, %53 : vector<64x8xf32>
    %c0_30 = arith.constant 0 : index
    %c0_31 = arith.constant 0 : index
    %c0_32 = arith.constant 0 : index
    %55 = vector.load %arg3[%c0_30, %c0_31, %c0_32] : memref<1x64x8xf32, #tpu.memory_space<vmem>>, vector<1x64x8xf32>
    %56 = vector.shape_cast %55 : vector<1x64x8xf32> to vector<64x8xf32>
    %57 = vector.shape_cast %54 : vector<64x8xf32> to vector<1x64x8xf32>
    tpu.vector_store %arg3[%c0_30, %c0_31, %c0_32], %57 {strides = array<i32>} : memref<1x64x8xf32, #tpu.memory_space<vmem>>, vector<1x64x8xf32>,
    %cst_33 = arith.constant dense<0.000000e+00> : vector<8xf32>
    %58 = vector.multi_reduction <add>, %54, %cst_33 [0] : vector<64x8xf32> to vector<8xf32>
    %59 = vector.shape_cast %58 : vector<8xf32> to vector<1x8xf32>
    %60 = vector.shape_cast %59 : vector<1x8xf32> to vector<1x1x8xf32>
    %c0_34 = arith.constant 0 : index
    %c0_35 = arith.constant 0 : index
    %c0_36 = arith.constant 0 : index
    %61 = vector.load %arg4[%c0_34, %c0_35, %c0_36] : memref<1x1x8xf32, #tpu.memory_space<vmem>>, vector<1x1x8xf32>
    tpu.vector_store %arg4[%c0_34, %c0_35, %c0_36], %60 {strides = array<i32>} : memref<1x1x8xf32, #tpu.memory_space<vmem>>, vector<1x1x8xf32>,
    %62 = arith.mulf %54, %54 : vector<64x8xf32>
    %cst_37 = arith.constant dense<0.000000e+00> : vector<8xf32>
    %63 = vector.multi_reduction <add>, %62, %cst_37 [0] : vector<64x8xf32> to vector<8xf32>
    %64 = vector.shape_cast %63 : vector<8xf32> to vector<1x8xf32>
    %65 = vector.shape_cast %64 : vector<1x8xf32> to vector<1x1x8xf32>
    %c0_38 = arith.constant 0 : index
    %c0_39 = arith.constant 0 : index
    %c0_40 = arith.constant 0 : index
    %66 = vector.load %arg5[%c0_38, %c0_39, %c0_40] : memref<1x1x8xf32, #tpu.memory_space<vmem>>, vector<1x1x8xf32>
    tpu.vector_store %arg5[%c0_38, %c0_39, %c0_40], %65 {strides = array<i32>} : memref<1x1x8xf32, #tpu.memory_space<vmem>>, vector<1x1x8xf32>,
    return
  }
  func.func @transform_0(%arg0: i32) -> (i32, i32, i32, i32) {
    %c0_i32 = arith.constant 0 : i32
    %c0_i32_0 = arith.constant 0 : i32
    %c0_i32_1 = arith.constant 0 : i32
    %c0_i32_2 = arith.constant 0 : i32
    return %arg0, %c0_i32, %c0_i32_0, %c0_i32_1 : i32, i32, i32, i32
  }
  func.func @transform_1(%arg0: i32) -> (i32, i32, i32) {
    %c0_i32 = arith.constant 0 : i32
    %c0_i32_0 = arith.constant 0 : i32
    %c0_i32_1 = arith.constant 0 : i32
    %c0_i32_2 = arith.constant 0 : i32
    return %c0_i32, %c0_i32_0, %c0_i32_1 : i32, i32, i32
  }
  func.func @transform_2(%arg0: i32) -> (i32, i32, i32) {
    %c0_i32 = arith.constant 0 : i32
    %c0_i32_0 = arith.constant 0 : i32
    %c0_i32_1 = arith.constant 0 : i32
    return %arg0, %c0_i32, %c0_i32_0 : i32, i32, i32
  }
  func.func @transform_3(%arg0: i32) -> (i32, i32, i32) {
    %c0_i32 = arith.constant 0 : i32
    %c0_i32_0 = arith.constant 0 : i32
    %c0_i32_1 = arith.constant 0 : i32
    return %arg0, %c0_i32, %c0_i32_0 : i32, i32, i32
  }
  func.func @transform_4(%arg0: i32) -> (i32, i32, i32) {
    %c0_i32 = arith.constant 0 : i32
    %c0_i32_0 = arith.constant 0 : i32
    %c0_i32_1 = arith.constant 0 : i32
    return %arg0, %c0_i32, %c0_i32_0 : i32, i32, i32
  }
}

module attributes {stable_mosaic.version = 11 : i64} {
  func.func @_act_conv_stats_kernel(%arg0: i32, %arg1: memref<1x10x10x8xf32, #tpu.memory_space<vmem>>, %arg2: memref<1x8xf32, #tpu.memory_space<vmem>>, %arg3: memref<1x8xf32, #tpu.memory_space<vmem>>, %arg4: memref<9x8x8xf32, #tpu.memory_space<vmem>>, %arg5: memref<1x64x8xf32, #tpu.memory_space<vmem>>, %arg6: memref<1x1x8xf32, #tpu.memory_space<vmem>>, %arg7: memref<1x1x8xf32, #tpu.memory_space<vmem>>) attributes {dimension_semantics = [#tpu.dimension_semantics<parallel>], iteration_bounds = array<i64: 2>, scalar_prefetch = 0 : i64, scratch_operands = 0 : i64, tpu.core_type = #tpu.core_type<tc>, window_params = [{transform_indices = @transform_0, window_bounds = array<i64: 1, 10, 10, 8>}, {pipeline_mode = #tpu.pipeline_mode<synchronous>, transform_indices = @transform_1, window_bounds = array<i64: 1, 8>}, {pipeline_mode = #tpu.pipeline_mode<synchronous>, transform_indices = @transform_2, window_bounds = array<i64: 1, 8>}, {pipeline_mode = #tpu.pipeline_mode<synchronous>, transform_indices = @transform_3, window_bounds = array<i64: 9, 8, 8>}, {transform_indices = @transform_4, window_bounds = array<i64: 1, 64, 8>}, {transform_indices = @transform_5, window_bounds = array<i64: 1, 1, 8>}, {transform_indices = @transform_6, window_bounds = array<i64: 1, 1, 8>}]} {
    %c0 = arith.constant 0 : index
    %c0_0 = arith.constant 0 : index
    %c0_1 = arith.constant 0 : index
    %c0_2 = arith.constant 0 : index
    %0 = vector.load %arg1[%c0, %c0_0, %c0_1, %c0_2] : memref<1x10x10x8xf32, #tpu.memory_space<vmem>>, vector<1x10x10x8xf32>
    %1 = vector.shape_cast %0 : vector<1x10x10x8xf32> to vector<10x10x8xf32>
    %c0_3 = arith.constant 0 : index
    %c0_4 = arith.constant 0 : index
    %2 = vector.load %arg2[%c0_3, %c0_4] : memref<1x8xf32, #tpu.memory_space<vmem>>, vector<1x8xf32>
    %3 = vector.shape_cast %2 : vector<1x8xf32> to vector<1x1x8xf32>
    %4 = vector.broadcast %3 : vector<1x1x8xf32> to vector<10x10x8xf32>
    %5 = arith.mulf %1, %4 : vector<10x10x8xf32>
    %c0_5 = arith.constant 0 : index
    %c0_6 = arith.constant 0 : index
    %6 = vector.load %arg3[%c0_5, %c0_6] : memref<1x8xf32, #tpu.memory_space<vmem>>, vector<1x8xf32>
    %7 = vector.shape_cast %6 : vector<1x8xf32> to vector<1x1x8xf32>
    %8 = vector.broadcast %7 : vector<1x1x8xf32> to vector<10x10x8xf32>
    %9 = arith.addf %5, %8 : vector<10x10x8xf32>
    %cst = arith.constant 0.000000e+00 : f32
    %10 = vector.broadcast %cst : f32 to vector<10x10x8xf32>
    %11 = arith.maximumf %9, %10 : vector<10x10x8xf32>
    %12 = tpu.iota {dimensions = array<i32: 0>} : vector<10x10x1xi32>
    %13 = tpu.iota {dimensions = array<i32: 1>} : vector<10x10x1xi32>
    %c1_i32 = arith.constant 1 : i32
    %14 = vector.broadcast %c1_i32 : i32 to vector<10x10x1xi32>
    %15 = arith.cmpi sge, %12, %14 : vector<10x10x1xi32>
    %c9_i32 = arith.constant 9 : i32
    %16 = vector.broadcast %c9_i32 : i32 to vector<10x10x1xi32>
    %17 = arith.cmpi slt, %12, %16 : vector<10x10x1xi32>
    %18 = arith.andi %15, %17 : vector<10x10x1xi1>
    %c1_i32_7 = arith.constant 1 : i32
    %19 = vector.broadcast %c1_i32_7 : i32 to vector<10x10x1xi32>
    %20 = arith.cmpi sge, %13, %19 : vector<10x10x1xi32>
    %21 = arith.andi %18, %20 : vector<10x10x1xi1>
    %c9_i32_8 = arith.constant 9 : i32
    %22 = vector.broadcast %c9_i32_8 : i32 to vector<10x10x1xi32>
    %23 = arith.cmpi slt, %13, %22 : vector<10x10x1xi32>
    %24 = arith.andi %21, %23 : vector<10x10x1xi1>
    %cst_9 = arith.constant 0.000000e+00 : f32
    %25 = vector.shape_cast %24 : vector<10x10x1xi1> to vector<10x10x1xi1>
    %26 = vector.broadcast %25 : vector<10x10x1xi1> to vector<10x10x8xi1>
    %27 = vector.broadcast %cst_9 : f32 to vector<10x10x8xf32>
    %28 = arith.select %26, %11, %27 : vector<10x10x8xi1>, vector<10x10x8xf32>
    %29 = vector.extract_strided_slice %28 {offsets = [0, 0, 0], sizes = [8, 8, 8], strides = [1, 1, 1]} : vector<10x10x8xf32> to vector<8x8x8xf32>
    %30 = vector.shape_cast %29 : vector<8x8x8xf32> to vector<64x8xf32>
    %c0_10 = arith.constant 0 : index
    %c0_11 = arith.constant 0 : index
    %c0_12 = arith.constant 0 : index
    %31 = vector.load %arg4[%c0_10, %c0_11, %c0_12] : memref<9x8x8xf32, #tpu.memory_space<vmem>>, vector<1x8x8xf32>
    %32 = vector.shape_cast %31 : vector<1x8x8xf32> to vector<8x8xf32>
    %cst_13 = arith.constant dense<0.000000e+00> : vector<64x8xf32>
    %33 = tpu.matmul %30, %32, %cst_13 {dimension_numbers = #tpu.dot_dimension_numbers<[1], [0], [0], [1], [0, 0, 1, 1], [], []>} : vector<64x8xf32>, vector<8x8xf32>, vector<64x8xf32> -> vector<64x8xf32>
    %34 = vector.extract_strided_slice %28 {offsets = [0, 1, 0], sizes = [8, 8, 8], strides = [1, 1, 1]} : vector<10x10x8xf32> to vector<8x8x8xf32>
    %35 = vector.shape_cast %34 : vector<8x8x8xf32> to vector<64x8xf32>
    %c1 = arith.constant 1 : index
    %c0_14 = arith.constant 0 : index
    %c0_15 = arith.constant 0 : index
    %36 = vector.load %arg4[%c1, %c0_14, %c0_15] : memref<9x8x8xf32, #tpu.memory_space<vmem>>, vector<1x8x8xf32>
    %37 = vector.shape_cast %36 : vector<1x8x8xf32> to vector<8x8xf32>
    %cst_16 = arith.constant dense<0.000000e+00> : vector<64x8xf32>
    %38 = tpu.matmul %35, %37, %cst_16 {dimension_numbers = #tpu.dot_dimension_numbers<[1], [0], [0], [1], [0, 0, 1, 1], [], []>} : vector<64x8xf32>, vector<8x8xf32>, vector<64x8xf32> -> vector<64x8xf32>
    %39 = arith.addf %33, %38 : vector<64x8xf32>
    %40 = vector.extract_strided_slice %28 {offsets = [0, 2, 0], sizes = [8, 8, 8], strides = [1, 1, 1]} : vector<10x10x8xf32> to vector<8x8x8xf32>
    %41 = vector.shape_cast %40 : vector<8x8x8xf32> to vector<64x8xf32>
    %c2 = arith.constant 2 : index
    %c0_17 = arith.constant 0 : index
    %c0_18 = arith.constant 0 : index
    %42 = vector.load %arg4[%c2, %c0_17, %c0_18] : memref<9x8x8xf32, #tpu.memory_space<vmem>>, vector<1x8x8xf32>
    %43 = vector.shape_cast %42 : vector<1x8x8xf32> to vector<8x8xf32>
    %cst_19 = arith.constant dense<0.000000e+00> : vector<64x8xf32>
    %44 = tpu.matmul %41, %43, %cst_19 {dimension_numbers = #tpu.dot_dimension_numbers<[1], [0], [0], [1], [0, 0, 1, 1], [], []>} : vector<64x8xf32>, vector<8x8xf32>, vector<64x8xf32> -> vector<64x8xf32>
    %45 = arith.addf %39, %44 : vector<64x8xf32>
    %46 = vector.extract_strided_slice %28 {offsets = [1, 0, 0], sizes = [8, 8, 8], strides = [1, 1, 1]} : vector<10x10x8xf32> to vector<8x8x8xf32>
    %47 = vector.shape_cast %46 : vector<8x8x8xf32> to vector<64x8xf32>
    %c3 = arith.constant 3 : index
    %c0_20 = arith.constant 0 : index
    %c0_21 = arith.constant 0 : index
    %48 = vector.load %arg4[%c3, %c0_20, %c0_21] : memref<9x8x8xf32, #tpu.memory_space<vmem>>, vector<1x8x8xf32>
    %49 = vector.shape_cast %48 : vector<1x8x8xf32> to vector<8x8xf32>
    %cst_22 = arith.constant dense<0.000000e+00> : vector<64x8xf32>
    %50 = tpu.matmul %47, %49, %cst_22 {dimension_numbers = #tpu.dot_dimension_numbers<[1], [0], [0], [1], [0, 0, 1, 1], [], []>} : vector<64x8xf32>, vector<8x8xf32>, vector<64x8xf32> -> vector<64x8xf32>
    %51 = arith.addf %45, %50 : vector<64x8xf32>
    %52 = vector.extract_strided_slice %28 {offsets = [1, 1, 0], sizes = [8, 8, 8], strides = [1, 1, 1]} : vector<10x10x8xf32> to vector<8x8x8xf32>
    %53 = vector.shape_cast %52 : vector<8x8x8xf32> to vector<64x8xf32>
    %c4 = arith.constant 4 : index
    %c0_23 = arith.constant 0 : index
    %c0_24 = arith.constant 0 : index
    %54 = vector.load %arg4[%c4, %c0_23, %c0_24] : memref<9x8x8xf32, #tpu.memory_space<vmem>>, vector<1x8x8xf32>
    %55 = vector.shape_cast %54 : vector<1x8x8xf32> to vector<8x8xf32>
    %cst_25 = arith.constant dense<0.000000e+00> : vector<64x8xf32>
    %56 = tpu.matmul %53, %55, %cst_25 {dimension_numbers = #tpu.dot_dimension_numbers<[1], [0], [0], [1], [0, 0, 1, 1], [], []>} : vector<64x8xf32>, vector<8x8xf32>, vector<64x8xf32> -> vector<64x8xf32>
    %57 = arith.addf %51, %56 : vector<64x8xf32>
    %58 = vector.extract_strided_slice %28 {offsets = [1, 2, 0], sizes = [8, 8, 8], strides = [1, 1, 1]} : vector<10x10x8xf32> to vector<8x8x8xf32>
    %59 = vector.shape_cast %58 : vector<8x8x8xf32> to vector<64x8xf32>
    %c5 = arith.constant 5 : index
    %c0_26 = arith.constant 0 : index
    %c0_27 = arith.constant 0 : index
    %60 = vector.load %arg4[%c5, %c0_26, %c0_27] : memref<9x8x8xf32, #tpu.memory_space<vmem>>, vector<1x8x8xf32>
    %61 = vector.shape_cast %60 : vector<1x8x8xf32> to vector<8x8xf32>
    %cst_28 = arith.constant dense<0.000000e+00> : vector<64x8xf32>
    %62 = tpu.matmul %59, %61, %cst_28 {dimension_numbers = #tpu.dot_dimension_numbers<[1], [0], [0], [1], [0, 0, 1, 1], [], []>} : vector<64x8xf32>, vector<8x8xf32>, vector<64x8xf32> -> vector<64x8xf32>
    %63 = arith.addf %57, %62 : vector<64x8xf32>
    %64 = vector.extract_strided_slice %28 {offsets = [2, 0, 0], sizes = [8, 8, 8], strides = [1, 1, 1]} : vector<10x10x8xf32> to vector<8x8x8xf32>
    %65 = vector.shape_cast %64 : vector<8x8x8xf32> to vector<64x8xf32>
    %c6 = arith.constant 6 : index
    %c0_29 = arith.constant 0 : index
    %c0_30 = arith.constant 0 : index
    %66 = vector.load %arg4[%c6, %c0_29, %c0_30] : memref<9x8x8xf32, #tpu.memory_space<vmem>>, vector<1x8x8xf32>
    %67 = vector.shape_cast %66 : vector<1x8x8xf32> to vector<8x8xf32>
    %cst_31 = arith.constant dense<0.000000e+00> : vector<64x8xf32>
    %68 = tpu.matmul %65, %67, %cst_31 {dimension_numbers = #tpu.dot_dimension_numbers<[1], [0], [0], [1], [0, 0, 1, 1], [], []>} : vector<64x8xf32>, vector<8x8xf32>, vector<64x8xf32> -> vector<64x8xf32>
    %69 = arith.addf %63, %68 : vector<64x8xf32>
    %70 = vector.extract_strided_slice %28 {offsets = [2, 1, 0], sizes = [8, 8, 8], strides = [1, 1, 1]} : vector<10x10x8xf32> to vector<8x8x8xf32>
    %71 = vector.shape_cast %70 : vector<8x8x8xf32> to vector<64x8xf32>
    %c7 = arith.constant 7 : index
    %c0_32 = arith.constant 0 : index
    %c0_33 = arith.constant 0 : index
    %72 = vector.load %arg4[%c7, %c0_32, %c0_33] : memref<9x8x8xf32, #tpu.memory_space<vmem>>, vector<1x8x8xf32>
    %73 = vector.shape_cast %72 : vector<1x8x8xf32> to vector<8x8xf32>
    %cst_34 = arith.constant dense<0.000000e+00> : vector<64x8xf32>
    %74 = tpu.matmul %71, %73, %cst_34 {dimension_numbers = #tpu.dot_dimension_numbers<[1], [0], [0], [1], [0, 0, 1, 1], [], []>} : vector<64x8xf32>, vector<8x8xf32>, vector<64x8xf32> -> vector<64x8xf32>
    %75 = arith.addf %69, %74 : vector<64x8xf32>
    %76 = vector.extract_strided_slice %28 {offsets = [2, 2, 0], sizes = [8, 8, 8], strides = [1, 1, 1]} : vector<10x10x8xf32> to vector<8x8x8xf32>
    %77 = vector.shape_cast %76 : vector<8x8x8xf32> to vector<64x8xf32>
    %c8 = arith.constant 8 : index
    %c0_35 = arith.constant 0 : index
    %c0_36 = arith.constant 0 : index
    %78 = vector.load %arg4[%c8, %c0_35, %c0_36] : memref<9x8x8xf32, #tpu.memory_space<vmem>>, vector<1x8x8xf32>
    %79 = vector.shape_cast %78 : vector<1x8x8xf32> to vector<8x8xf32>
    %cst_37 = arith.constant dense<0.000000e+00> : vector<64x8xf32>
    %80 = tpu.matmul %77, %79, %cst_37 {dimension_numbers = #tpu.dot_dimension_numbers<[1], [0], [0], [1], [0, 0, 1, 1], [], []>} : vector<64x8xf32>, vector<8x8xf32>, vector<64x8xf32> -> vector<64x8xf32>
    %81 = arith.addf %75, %80 : vector<64x8xf32>
    %c0_38 = arith.constant 0 : index
    %c0_39 = arith.constant 0 : index
    %c0_40 = arith.constant 0 : index
    %82 = vector.load %arg5[%c0_38, %c0_39, %c0_40] : memref<1x64x8xf32, #tpu.memory_space<vmem>>, vector<1x64x8xf32>
    %83 = vector.shape_cast %82 : vector<1x64x8xf32> to vector<64x8xf32>
    %84 = vector.shape_cast %81 : vector<64x8xf32> to vector<1x64x8xf32>
    tpu.vector_store %arg5[%c0_38, %c0_39, %c0_40], %84 {strides = array<i32>} : memref<1x64x8xf32, #tpu.memory_space<vmem>>, vector<1x64x8xf32>,
    %cst_41 = arith.constant dense<0.000000e+00> : vector<8xf32>
    %85 = vector.multi_reduction <add>, %81, %cst_41 [0] : vector<64x8xf32> to vector<8xf32>
    %86 = vector.shape_cast %85 : vector<8xf32> to vector<1x8xf32>
    %87 = vector.shape_cast %86 : vector<1x8xf32> to vector<1x1x8xf32>
    %c0_42 = arith.constant 0 : index
    %c0_43 = arith.constant 0 : index
    %c0_44 = arith.constant 0 : index
    %88 = vector.load %arg6[%c0_42, %c0_43, %c0_44] : memref<1x1x8xf32, #tpu.memory_space<vmem>>, vector<1x1x8xf32>
    tpu.vector_store %arg6[%c0_42, %c0_43, %c0_44], %87 {strides = array<i32>} : memref<1x1x8xf32, #tpu.memory_space<vmem>>, vector<1x1x8xf32>,
    %89 = arith.mulf %81, %81 : vector<64x8xf32>
    %cst_45 = arith.constant dense<0.000000e+00> : vector<8xf32>
    %90 = vector.multi_reduction <add>, %89, %cst_45 [0] : vector<64x8xf32> to vector<8xf32>
    %91 = vector.shape_cast %90 : vector<8xf32> to vector<1x8xf32>
    %92 = vector.shape_cast %91 : vector<1x8xf32> to vector<1x1x8xf32>
    %c0_46 = arith.constant 0 : index
    %c0_47 = arith.constant 0 : index
    %c0_48 = arith.constant 0 : index
    %93 = vector.load %arg7[%c0_46, %c0_47, %c0_48] : memref<1x1x8xf32, #tpu.memory_space<vmem>>, vector<1x1x8xf32>
    tpu.vector_store %arg7[%c0_46, %c0_47, %c0_48], %92 {strides = array<i32>} : memref<1x1x8xf32, #tpu.memory_space<vmem>>, vector<1x1x8xf32>,
    return
  }
  func.func @transform_0(%arg0: i32) -> (i32, i32, i32, i32) {
    %c0_i32 = arith.constant 0 : i32
    %c0_i32_0 = arith.constant 0 : i32
    %c0_i32_1 = arith.constant 0 : i32
    %c0_i32_2 = arith.constant 0 : i32
    return %arg0, %c0_i32, %c0_i32_0, %c0_i32_1 : i32, i32, i32, i32
  }
  func.func @transform_1(%arg0: i32) -> (i32, i32) {
    %c0_i32 = arith.constant 0 : i32
    %c0_i32_0 = arith.constant 0 : i32
    %c0_i32_1 = arith.constant 0 : i32
    return %c0_i32, %c0_i32_0 : i32, i32
  }
  func.func @transform_2(%arg0: i32) -> (i32, i32) {
    %c0_i32 = arith.constant 0 : i32
    %c0_i32_0 = arith.constant 0 : i32
    %c0_i32_1 = arith.constant 0 : i32
    return %c0_i32, %c0_i32_0 : i32, i32
  }
  func.func @transform_3(%arg0: i32) -> (i32, i32, i32) {
    %c0_i32 = arith.constant 0 : i32
    %c0_i32_0 = arith.constant 0 : i32
    %c0_i32_1 = arith.constant 0 : i32
    %c0_i32_2 = arith.constant 0 : i32
    return %c0_i32, %c0_i32_0, %c0_i32_1 : i32, i32, i32
  }
  func.func @transform_4(%arg0: i32) -> (i32, i32, i32) {
    %c0_i32 = arith.constant 0 : i32
    %c0_i32_0 = arith.constant 0 : i32
    %c0_i32_1 = arith.constant 0 : i32
    return %arg0, %c0_i32, %c0_i32_0 : i32, i32, i32
  }
  func.func @transform_5(%arg0: i32) -> (i32, i32, i32) {
    %c0_i32 = arith.constant 0 : i32
    %c0_i32_0 = arith.constant 0 : i32
    %c0_i32_1 = arith.constant 0 : i32
    return %arg0, %c0_i32, %c0_i32_0 : i32, i32, i32
  }
  func.func @transform_6(%arg0: i32) -> (i32, i32, i32) {
    %c0_i32 = arith.constant 0 : i32
    %c0_i32_0 = arith.constant 0 : i32
    %c0_i32_1 = arith.constant 0 : i32
    return %arg0, %c0_i32, %c0_i32_0 : i32, i32, i32
  }
}

module attributes {stable_mosaic.version = 11 : i64} {
  func.func @_bn_relu_kernel(%arg0: i32, %arg1: memref<16x64xf32, #tpu.memory_space<vmem>>, %arg2: memref<1x64xf32, #tpu.memory_space<vmem>>, %arg3: memref<1x64xf32, #tpu.memory_space<vmem>>, %arg4: memref<16x64xf32, #tpu.memory_space<vmem>>) attributes {dimension_semantics = [#tpu.dimension_semantics<parallel>], iteration_bounds = array<i64: 1>, scalar_prefetch = 0 : i64, scratch_operands = 0 : i64, tpu.core_type = #tpu.core_type<tc>, window_params = [{transform_indices = @transform_0, window_bounds = array<i64: 16, 64>}, {pipeline_mode = #tpu.pipeline_mode<synchronous>, transform_indices = @transform_1, window_bounds = array<i64: 1, 64>}, {pipeline_mode = #tpu.pipeline_mode<synchronous>, transform_indices = @transform_2, window_bounds = array<i64: 1, 64>}, {transform_indices = @transform_3, window_bounds = array<i64: 16, 64>}]} {
    %c0 = arith.constant 0 : index
    %c0_0 = arith.constant 0 : index
    %0 = vector.load %arg1[%c0, %c0_0] : memref<16x64xf32, #tpu.memory_space<vmem>>, vector<16x64xf32>
    %c0_1 = arith.constant 0 : index
    %c0_2 = arith.constant 0 : index
    %1 = vector.load %arg2[%c0_1, %c0_2] : memref<1x64xf32, #tpu.memory_space<vmem>>, vector<1x64xf32>
    %2 = vector.broadcast %1 : vector<1x64xf32> to vector<16x64xf32>
    %3 = arith.mulf %0, %2 : vector<16x64xf32>
    %c0_3 = arith.constant 0 : index
    %c0_4 = arith.constant 0 : index
    %4 = vector.load %arg3[%c0_3, %c0_4] : memref<1x64xf32, #tpu.memory_space<vmem>>, vector<1x64xf32>
    %5 = vector.broadcast %4 : vector<1x64xf32> to vector<16x64xf32>
    %6 = arith.addf %3, %5 : vector<16x64xf32>
    %cst = arith.constant 0.000000e+00 : f32
    %7 = vector.broadcast %cst : f32 to vector<16x64xf32>
    %8 = arith.maximumf %6, %7 : vector<16x64xf32>
    %c0_5 = arith.constant 0 : index
    %c0_6 = arith.constant 0 : index
    %9 = vector.load %arg4[%c0_5, %c0_6] : memref<16x64xf32, #tpu.memory_space<vmem>>, vector<16x64xf32>
    tpu.vector_store %arg4[%c0_5, %c0_6], %8 {strides = array<i32>} : memref<16x64xf32, #tpu.memory_space<vmem>>, vector<16x64xf32>,
    return
  }
  func.func @transform_0(%arg0: i32) -> (i32, i32) {
    %c0_i32 = arith.constant 0 : i32
    %c0_i32_0 = arith.constant 0 : i32
    return %arg0, %c0_i32 : i32, i32
  }
  func.func @transform_1(%arg0: i32) -> (i32, i32) {
    %c0_i32 = arith.constant 0 : i32
    %c0_i32_0 = arith.constant 0 : i32
    %c0_i32_1 = arith.constant 0 : i32
    return %c0_i32, %c0_i32_0 : i32, i32
  }
  func.func @transform_2(%arg0: i32) -> (i32, i32) {
    %c0_i32 = arith.constant 0 : i32
    %c0_i32_0 = arith.constant 0 : i32
    %c0_i32_1 = arith.constant 0 : i32
    return %c0_i32, %c0_i32_0 : i32, i32
  }
  func.func @transform_3(%arg0: i32) -> (i32, i32) {
    %c0_i32 = arith.constant 0 : i32
    %c0_i32_0 = arith.constant 0 : i32
    return %arg0, %c0_i32 : i32, i32
  }
}

</mosaic_0001>

<llo_original>
// kernel: _lambda_.4
$region0: #{_lambda_.4}
  #allocation0 [shape = 'u32[]', space=smem, size = 0x4, offset = 0x4, fixed_abs, tag = 'smem constant byte address 0x4 - core index']
  #allocation1 [shape = 'u32[144,128]{1,0:T(1,128)}', space=vmem, size = 0x12000, scoped, tag = 'internal scratch']
  %s0 = inlined_call_operand.vmem [shape: f32[16,32], index: 0, kind: input, shape index: {}]
  %s1 = inlined_call_operand.vmem [shape: f32[16,32], index: 1, kind: input, shape index: {}]
  %s2 = inlined_call_operand.vmem [shape: f32[16,32], index: 2, kind: input, shape index: {}]
  %s3 = inlined_call_operand.vmem [shape: f32[16,32], index: 3, kind: input, shape index: {}]
  %s4 = inlined_call_operand.vmem [shape: f32[16,32], index: 4, kind: output, shape index: {}]
  %s5 = sld [smem:[#allocation0]]
  $region26: #{_lambda_.4} parent=0
    _
  %s7 = ssub.s32 1, %s5
  %s8 = scalar_select 0, %s7, %s5
  // Predicated region
  $region2: #{_lambda_.4} parent=0 // pred_check
    _
  $region3: #{_lambda_.4} parent=0 // pred_check_branch
    %10 = sbr.rel (0) target = $region5
  $region4: #{_lambda_.4} parent=0 // pred_region
    _
  $region5: #{_lambda_.4} parent=0 // pred_fallthru
    _
  // Predicated region
  $region6: #{_lambda_.4} parent=0 // pred_check
    _
  $region7: #{_lambda_.4} parent=0 // pred_check_branch
    %12 = sbr.rel (0) target = $region9
  $region8: #{_lambda_.4} parent=0 // pred_region
    _
  $region9: #{_lambda_.4} parent=0 // pred_fallthru
    _
  // Predicated region
  $region10: #{_lambda_.4} parent=0 // pred_check
    _
  $region11: #{_lambda_.4} parent=0 // pred_check_branch
    %14 = sbr.rel (0) target = $region13
  $region12: #{_lambda_.4} parent=0 // pred_region
    _
  $region13: #{_lambda_.4} parent=0 // pred_fallthru
    _
  // Predicated region
  $region14: #{_lambda_.4} parent=0 // pred_check
    _
  $region15: #{_lambda_.4} parent=0 // pred_check_branch
    %16 = sbr.rel (0) target = $region17
  $region16: #{_lambda_.4} parent=0 // pred_region
    _
  $region17: #{_lambda_.4} parent=0 // pred_fallthru
    _
  %v17 = vld [vmem:[%s0] sm:$0xff]
  %v18 = vld [vmem:[%s0 + $0x8] sm:$0xff]
  %v19 = vld [vmem:[%s1] sm:$0xff]
  %v20 = vld [vmem:[%s1 + $0x8] sm:$0xff]
  %v21 = vmax.f32 %v17, %v19
  %v22 = vmax.f32 %v18, %v20
  %v23 = vld [vmem:[%s2] sm:$0xff]
  %v24 = vld [vmem:[%s2 + $0x8] sm:$0xff]
  %v25 = vld [vmem:[%s3] sm:$0xff]
  %v26 = vld [vmem:[%s3 + $0x8] sm:$0xff]
  %v27 = vmax.f32 %v23, %v25
  %v28 = vmax.f32 %v24, %v26
  %v29 = vmax.f32 %v21, %v27
  %v30 = vmax.f32 %v22, %v28
  %vm31 = vcmask 261120
  %32 = vst.msk [vmem:[%s4] sm:$0xff] %vm31, %v29
  %33 = vst.msk [vmem:[%s4 + $0x8] sm:$0xff] %vm31, %v30
  // Predicated region
  $region18: #{_lambda_.4} parent=0 // pred_check
    _
  $region19: #{_lambda_.4} parent=0 // pred_check_branch
    %35 = sbr.rel (0) target = $region21
  $region20: #{_lambda_.4} parent=0 // pred_region
    _
  $region21: #{_lambda_.4} parent=0 // pred_fallthru
    _
  // Predicated region
  $region22: #{_lambda_.4} parent=0 // pred_check
    _
  $region23: #{_lambda_.4} parent=0 // pred_check_branch
    %37 = sbr.rel (0) target = $region25
  $region24: #{_lambda_.4} parent=0 // pred_region
    _
  $region25: #{_lambda_.4} parent=0 // pred_fallthru
    _

// kernel: tile.18
$region0: #{tile.18}
  #allocation0 [shape = 's32[1]{0}', space=sflag, size = 0x4, scoped, tag = 'scoped memory for tile.18']
  %s0 = inlined_call_operand.vmem [shape: f32[8], index: 0, kind: input, shape index: {}]
  %s1 = inlined_call_operand.vmem [shape: f32[8,8], index: 1, kind: output, shape index: {}]
  // Predicated region
  $region2: #{tile.18} parent=0 // pred_check
    _
  $region3: #{tile.18} parent=0 // pred_check_branch
    %3 = sbr.rel (0) target = $region5
  $region4: #{tile.18} parent=0 // pred_region
    _
  $region5: #{tile.18} parent=0 // pred_fallthru
    _
  %v4 = vld [vmem:[%s0] ss:$0 sm:$0xff]
  %5 = vst [vmem:[%s1] sm:$0xff] %v4

// kernel: tile.19
$region0: #{tile.19}
  %s0 = inlined_call_operand.vmem [shape: f32[8,8], index: 0, kind: input, shape index: {}]
  %s1 = inlined_call_operand.vmem [shape: f32[1,64], index: 1, kind: output, shape index: {}]
  $region1: #{tile.19} parent=0
    #allocation0 [shape = 'u8[4096]{0}', space=vmem, size = 0x1000, scoped, tag = 'scoped mem for output reshape']
    %v2 = vld [vmem:[%s0] sm:$0x1]
    %vm3 = vcmask 64512
    %4 = vst.msk [vmem:[#allocation0] sm:$0x1] %vm3, %v2
    %s5 = scalar_lea.vmem %s0, 7
    %v6 = vld [vmem:[%s5] sm:$0x1]
    %7 = vrot.lane.b32.xlu0 %v6, 56
    %v8 = vpop.permute.xlu0 %7
    %vm9 = vcmask 523712
    %10 = vst.msk [vmem:[#allocation0] sm:$0x1] %vm9, %v8
    %s11 = scalar_lea.vmem %s0, 6
    %v12 = vld [vmem:[%s11] sm:$0x1]
    %13 = vrot.lane.b32.xlu0 %v12, 48
    %v14 = vpop.permute.xlu0 %13
    %vm15 = vcmask 458112
    %16 = vst.msk [vmem:[#allocation0] sm:$0x1] %vm15, %v14
    %s17 = scalar_lea.vmem %s0, 5
    %v18 = vld [vmem:[%s17] sm:$0x1]
    %19 = vrot.lane.b32.xlu0 %v18, 40
    %v20 = vpop.permute.xlu0 %19
    %vm21 = vcmask 392512
    %22 = vst.msk [vmem:[#allocation0] sm:$0x1] %vm21, %v20
    %s23 = scalar_lea.vmem %s0, 4
    %v24 = vld [vmem:[%s23] sm:$0x1]
    %25 = vrot.lane.b32.xlu0 %v24, 32
    %v26 = vpop.permute.xlu0 %25
    %vm27 = vcmask 326912
    %28 = vst.msk [vmem:[#allocation0] sm:$0x1] %vm27, %v26
    %s29 = scalar_lea.vmem %s0, 3
    %v30 = vld [vmem:[%s29] sm:$0x1]
    %31 = vrot.lane.b32.xlu0 %v30, 24
    %v32 = vpop.permute.xlu0 %31
    %vm33 = vcmask 261312
    %34 = vst.msk [vmem:[#allocation0] sm:$0x1] %vm33, %v32
    %s35 = scalar_lea.vmem %s0, 2
    %v36 = vld [vmem:[%s35] sm:$0x1]
    %37 = vrot.lane.b32.xlu0 %v36, 16
    %v38 = vpop.permute.xlu0 %37
    %vm39 = vcmask 195712
    %40 = vst.msk [vmem:[#allocation0] sm:$0x1] %vm39, %v38
    %s41 = scalar_lea.vmem %s0, 1
    %v42 = vld [vmem:[%s41] sm:$0x1]
    %43 = vrot.lane.b32.xlu0 %v42, 8
    %v44 = vpop.permute.xlu0 %43
    %vm45 = vcmask 130112
    %46 = vst.msk [vmem:[#allocation0] sm:$0x1] %vm45, %v44
    %s48 = sshllo.u32 0, 1
    %v50 = vld [vmem:[#allocation0] sm:%s48]
    %s51 = sshllo.u32 0, 1
    %52 = vst [vmem:[%s1] sm:%s51] %v50

// kernel: _lambda_.7
$region0: #{_lambda_.7}
  #allocation0 [shape = 'u32[]', space=smem, size = 0x4, offset = 0x4, fixed_abs, tag = 'smem constant byte address 0x4 - core index']
  #allocation1 [shape = 'u32[144,128]{1,0:T(1,128)}', space=vmem, size = 0x12000, scoped, tag = 'internal scratch']
  %s0 = inlined_call_operand.vmem [shape: f32[16,64], index: 0, kind: input, shape index: {}]
  %s1 = inlined_call_operand.vmem [shape: f32[1,64], index: 1, kind: input, shape index: {}]
  %s2 = inlined_call_operand.vmem [shape: f32[1,64], index: 2, kind: input, shape index: {}]
  %s3 = inlined_call_operand.vmem [shape: f32[16,64], index: 3, kind: output, shape index: {}]
  %s4 = sld [smem:[#allocation0]]
  $region22: #{_lambda_.7} parent=0
    _
  %s6 = ssub.s32 1, %s4
  %s7 = scalar_select 0, %s6, %s4
  // Predicated region
  $region2: #{_lambda_.7} parent=0 // pred_check
    _
  $region3: #{_lambda_.7} parent=0 // pred_check_branch
    %9 = sbr.rel (0) target = $region5
  $region4: #{_lambda_.7} parent=0 // pred_region
    _
  $region5: #{_lambda_.7} parent=0 // pred_fallthru
    _
  // Predicated region
  $region6: #{_lambda_.7} parent=0 // pred_check
    _
  $region7: #{_lambda_.7} parent=0 // pred_check_branch
    %11 = sbr.rel (0) target = $region9
  $region8: #{_lambda_.7} parent=0 // pred_region
    _
  $region9: #{_lambda_.7} parent=0 // pred_fallthru
    _
  // Predicated region
  $region10: #{_lambda_.7} parent=0 // pred_check
    _
  $region11: #{_lambda_.7} parent=0 // pred_check_branch
    %13 = sbr.rel (0) target = $region13
  $region12: #{_lambda_.7} parent=0 // pred_region
    _
  $region13: #{_lambda_.7} parent=0 // pred_fallthru
    _
  %v14 = vld [vmem:[%s0] sm:$0xff]
  %v15 = vld [vmem:[%s0 + $0x8] sm:$0xff]
  %v16 = vld [vmem:[%s1] sm:$0x1]
  %v18 = vlaneseq
  %v19 = vshrl.u32 %v18, 7
  %v20 = vsub.s32 0, %v19
  %v21 = vrot.slane %v16, %v20
  %v23 = vmul.f32 %v14, %v21
  %v24 = vmul.f32 %v15, %v21
  %v25 = vld [vmem:[%s2] sm:$0x1]
  %v27 = vlaneseq
  %v28 = vshrl.u32 %v27, 7
  %v29 = vsub.s32 0, %v28
  %v30 = vrot.slane %v25, %v29
  %v32 = vadd.f32 %v23, %v30
  %v33 = vadd.f32 %v24, %v30
  %v34 = vmax.f32 %v32, 0.0
  %v35 = vmax.f32 %v33, 0.0
  %vm36 = vcmask 523264
  %37 = vst.msk [vmem:[%s3] sm:$0xff] %vm36, %v34
  %38 = vst.msk [vmem:[%s3 + $0x8] sm:$0xff] %vm36, %v35
  // Predicated region
  $region14: #{_lambda_.7} parent=0 // pred_check
    _
  $region15: #{_lambda_.7} parent=0 // pred_check_branch
    %40 = sbr.rel (0) target = $region17
  $region16: #{_lambda_.7} parent=0 // pred_region
    _
  $region17: #{_lambda_.7} parent=0 // pred_fallthru
    _
  // Predicated region
  $region18: #{_lambda_.7} parent=0 // pred_check
    _
  $region19: #{_lambda_.7} parent=0 // pred_check_branch
    %42 = sbr.rel (0) target = $region21
  $region20: #{_lambda_.7} parent=0 // pred_region
    _
  $region21: #{_lambda_.7} parent=0 // pred_fallthru
    _

// kernel: _lambda_.5
$region0: #{_lambda_.5}
  #allocation0 [shape = 'u32[]', space=smem, size = 0x4, offset = 0x4, fixed_abs, tag = 'smem constant byte address 0x4 - core index']
  #allocation1 [shape = 'u32[144,128]{1,0:T(1,128)}', space=vmem, size = 0x12000, scoped, tag = 'internal scratch']
  %s0 = inlined_call_operand.vmem [shape: f32[2,10,10,4], index: 0, kind: input, shape index: {}]
  %s1 = inlined_call_operand.vmem [shape: f32[9,4,8], index: 1, kind: input, shape index: {}]
  %s2 = inlined_call_operand.vmem [shape: f32[2,64,8], index: 2, kind: output, shape index: {0}]
  %s3 = inlined_call_operand.vmem [shape: f32[2,1,8], index: 3, kind: output, shape index: {1}]
  %s4 = inlined_call_operand.vmem [shape: f32[2,1,8], index: 4, kind: output, shape index: {2}]
  %5 = xla_tuple %s2, %s3, %s4
  %s6 = sld [smem:[#allocation0]]
  $region57: #{_lambda_.5} parent=0
    _
  %s8 = ssub.s32 1, %s6
  %s9 = scalar_select 0, %s8, %s6
  loop: start=0, step=1, limit=4
  $region2: #{_lambda_.5} parent=0 // loop_pre_header
    _
  $region3: #{_lambda_.5} parent=0 // loop_header
    %s11 = sphi 0, %s15
    %p12 = scmp.ge.s32.totalorder %s11, 4
    %s21 = sphi 0, %s23
    %s24 = sphi 0, %s21
    %s25 = sphi 0, %s24
    %s41 = sphi 0, %s25
    %s45 = sphi 0, %s45
    %s47 = sphi 0, %s45
    %s48 = sphi 0, %s47
    %s62 = sphi 0, %s48
    %s68 = sphi 0, %s70
    %s71 = sphi 0, %s68
    %s72 = sphi 0, %s71
    %s88 = sphi 0, %s72
    %s94 = sphi 0, %s96
    %s97 = sphi 0, %s94
    %s98 = sphi 0, %s97
    %s114 = sphi 0, %s98
    %s120 = sphi 0, %s122
    %s123 = sphi 0, %s120
    %s124 = sphi 0, %s123
    %s140 = sphi 0, %s124
  $region4: #{_lambda_.5} parent=0 // loop_header_branch
    %14 = sbr.rel (%p12) target = $region8
  $region5: #{_lambda_.5} parent=0 // loop_body
    %s16 = ssub.s32 %s11, 1
    %s17 = ssub.s32 %s11, 2
    %s18 = sadd.s32 %s11, 1
    %s19 = ssub.s32 %s11, %s18
    %p20 = scmp.eq.s32.totalorder %s19, 0
    %s22 = sadd.s32 %s21, 1
    %s23 = scalar_select %p20, %s21, %s22
    %p26 = pneg %p20
    %p27 = scmp.eq.s32.totalorder %s11, 1
    %p28 = por %p26, %p27
    %p29 = scmp.ne.s32.totalorder %s21, %s24
    %p30 = scmp.eq.s32.totalorder %s11, 0
    %p31 = por %p29, %p30
    %p32 = scmp.ne.s32.totalorder %s21, %s24
    %p33 = scmp.eq.s32.totalorder %s16, 1
    %p34 = por %p32, %p33
    %p35 = scmp.ne.s32.totalorder %s24, %s25
    %p36 = scmp.eq.s32.totalorder %s16, 0
    %p37 = por %p35, %p36
    %p38 = scmp.ne.s32.totalorder %s24, %s25
    %p39 = scmp.eq.s32.totalorder %s17, 1
    %p40 = por %p38, %p39
    %p42 = scmp.ne.s32.totalorder %s25, %s41
    %p43 = scmp.eq.s32.totalorder %s17, 0
    %p44 = por %p42, %p43
    %s46 = sadd.s32 %s45, 1
    %p49 = scmp.eq.s32.totalorder %s11, 1
    %p50 = scmp.ne.s32.totalorder %s45, %s47
    %p51 = scmp.eq.s32.totalorder %s11, 0
    %p52 = por %p50, %p51
    %p53 = scmp.ne.s32.totalorder %s45, %s47
    %p54 = scmp.eq.s32.totalorder %s16, 1
    %p55 = por %p53, %p54
    %p56 = scmp.ne.s32.totalorder %s47, %s48
    %p57 = scmp.eq.s32.totalorder %s16, 0
    %p58 = por %p56, %p57
    %p59 = scmp.ne.s32.totalorder %s47, %s48
    %p60 = scmp.eq.s32.totalorder %s17, 1
    %p61 = por %p59, %p60
    %p63 = scmp.ne.s32.totalorder %s48, %s62
    %p64 = scmp.eq.s32.totalorder %s17, 0
    %p65 = por %p63, %p64
    %s66 = ssub.s32 %s11, %s18
    %p67 = scmp.eq.s32.totalorder %s66, 0
    %s69 = sadd.s32 %s68, 1
    %s70 = scalar_select %p67, %s68, %s69
    %p73 = pneg %p67
    %p74 = scmp.eq.s32.totalorder %s11, 1
    %p75 = por %p73, %p74
    %p76 = scmp.ne.s32.totalorder %s68, %s71
    %p77 = scmp.eq.s32.totalorder %s11, 0
    %p78 = por %p76, %p77
    %p79 = scmp.ne.s32.totalorder %s68, %s71
    %p80 = scmp.eq.s32.totalorder %s16, 1
    %p81 = por %p79, %p80
    %p82 = scmp.ne.s32.totalorder %s71, %s72
    %p83 = scmp.eq.s32.totalorder %s16, 0
    %p84 = por %p82, %p83
    %p85 = scmp.ne.s32.totalorder %s71, %s72
    %p86 = scmp.eq.s32.totalorder %s17, 1
    %p87 = por %p85, %p86
    %p89 = scmp.ne.s32.totalorder %s72, %s88
    %p90 = scmp.eq.s32.totalorder %s17, 0
    %p91 = por %p89, %p90
    %s92 = ssub.s32 %s11, %s18
    %p93 = scmp.eq.s32.totalorder %s92, 0
    %s95 = sadd.s32 %s94, 1
    %s96 = scalar_select %p93, %s94, %s95
    %p99 = pneg %p93
    %p100 = scmp.eq.s32.totalorder %s11, 1
    %p101 = por %p99, %p100
    %p102 = scmp.ne.s32.totalorder %s94, %s97
    %p103 = scmp.eq.s32.totalorder %s11, 0
    %p104 = por %p102, %p103
    %p105 = scmp.ne.s32.totalorder %s94, %s97
    %p106 = scmp.eq.s32.totalorder %s16, 1
    %p107 = por %p105, %p106
    %p108 = scmp.ne.s32.totalorder %s97, %s98
    %p109 = scmp.eq.s32.totalorder %s16, 0
    %p110 = por %p108, %p109
    %p111 = scmp.ne.s32.totalorder %s97, %s98
    %p112 = scmp.eq.s32.totalorder %s17, 1
    %p113 = por %p111, %p112
    %p115 = scmp.ne.s32.totalorder %s98, %s114
    %p116 = scmp.eq.s32.totalorder %s17, 0
    %p117 = por %p115, %p116
    %s118 = ssub.s32 %s11, %s18
    %p119 = scmp.eq.s32.totalorder %s118, 0
    %s121 = sadd.s32 %s120, 1
    %s122 = scalar_select %p119, %s120, %s121
    %p125 = pneg %p119
    %p126 = scmp.eq.s32.totalorder %s11, 1
    %p127 = por %p125, %p126
    %p128 = scmp.ne.s32.totalorder %s120, %s123
    %p129 = scmp.eq.s32.totalorder %s11, 0
    %p130 = por %p128, %p129
    %p131 = scmp.ne.s32.totalorder %s120, %s123
    %p132 = scmp.eq.s32.totalorder %s16, 1
    %p133 = por %p131, %p132
    %p134 = scmp.ne.s32.totalorder %s123, %s124
    %p135 = scmp.eq.s32.totalorder %s16, 0
    %p136 = por %p134, %p135
    %p137 = scmp.ne.s32.totalorder %s123, %s124
    %p138 = scmp.eq.s32.totalorder %s17, 1
    %p139 = por %p137, %p138
    %p141 = scmp.ne.s32.totalorder %s124, %s140
    %p142 = scmp.eq.s32.totalorder %s17, 0
    %p143 = por %p141, %p142
    %p144 = scmp.le.s32.totalorder 1, %s11
    %p145 = scmp.lt.s32.totalorder %s11, 3
    %p146 = pnand %p144, %p145
    %p147 = pneg %p146
    // Predicated region
    $region9: #{_lambda_.5} parent=5 // pred_check
      _
    $region10: #{_lambda_.5} parent=5 // pred_check_branch
      %149 = sbr.rel (%p146) target = $region12
    $region11: #{_lambda_.5} parent=5 // pred_region
      %s150 = ssub.s32 %s11, 1
      // Predicated region
      $region13: #{_lambda_.5} parent=11 // pred_check
        %p151 = pneg %p58
      $region14: #{_lambda_.5} parent=11 // pred_check_branch
        %153 = sbr.rel (%p151) target = $region16
      $region15: #{_lambda_.5} parent=11 // pred_region
        _
      $region16: #{_lambda_.5} parent=11 // pred_fallthru
        _
    $region12: #{_lambda_.5} parent=5 // pred_fallthru
      _
    %p154 = scmp.lt.s32.totalorder %s11, 2
    // Predicated region
    $region17: #{_lambda_.5} parent=5 // pred_check
      %p155 = pneg %p154
    $region18: #{_lambda_.5} parent=5 // pred_check_branch
      %157 = sbr.rel (%p155) target = $region20
    $region19: #{_lambda_.5} parent=5 // pred_region
      // Predicated region
      $region21: #{_lambda_.5} parent=19 // pred_check
        %p158 = pneg %p31
      $region22: #{_lambda_.5} parent=19 // pred_check_branch
        %160 = sbr.rel (%p158) target = $region24
      $region23: #{_lambda_.5} parent=19 // pred_region
        %p161 = scmp.lt.s32.totalorder %s11, 1
        %s162 = scalar_select %p161, %s11, 1
        %s163 = smul.addr %s162, 20
        %s164 = smul.addr %s163, 8
        %s165 = scalar_lea.vmem %s0, %s164
      $region24: #{_lambda_.5} parent=19 // pred_fallthru
        _
    $region20: #{_lambda_.5} parent=5 // pred_fallthru
      _
    %p166 = scmp.le.s32.totalorder 1, %s11
    %p167 = scmp.lt.s32.totalorder %s11, 3
    %p168 = pnand %p166, %p167
    %p169 = pneg %p168
    // Predicated region
    $region25: #{_lambda_.5} parent=5 // pred_check
      _
    $region26: #{_lambda_.5} parent=5 // pred_check_branch
      %171 = sbr.rel (%p168) target = $region28
    $region27: #{_lambda_.5} parent=5 // pred_region
      %s172 = ssub.s32 %s11, 1
      %p173 = scmp.lt.s32.totalorder %s16, 1
      %s174 = scalar_select %p173, %s16, 1
      %s175 = smul.addr %s174, 20
      %s176 = smul.addr %s175, 8
      %s177 = scalar_lea.vmem %s0, %s176
      %p178 = pneg %p37
      %p179 = pneg %p34
      %p180 = pneg %p58
      %p181 = pneg %p55
      %p182 = pneg %p84
      %p183 = pneg %p81
      %p184 = scmp.lt.s32.totalorder %s16, 1
      %s185 = scalar_select %p184, %s16, 1
      %s186 = smul.addr %s185, 8
      %s187 = smul.addr %s186, 8
      %s188 = scalar_lea.vmem %s2, %s187
      %p189 = pneg %p110
      %p190 = pneg %p107
      %p191 = scmp.lt.s32.totalorder %s16, 1
      %s192 = scalar_select %p191, %s16, 1
      %s193 = scalar_lea.vmem %s3, %s192
      %p194 = pneg %p136
      %p195 = pneg %p133
      %p196 = scmp.lt.s32.totalorder %s16, 1
      %s197 = scalar_select %p196, %s16, 1
      %s198 = scalar_lea.vmem %s4, %s197
      %p199 = scmp.lt.s32.totalorder %s16, 1
      %s200 = scalar_select %p199, %s16, 1
      %s201 = smul.addr %s200, 20
      %s202 = smul.addr %s201, 8
      %s203 = scalar_lea.vmem %s0, %s202
      %p204 = scmp.lt.s32.totalorder %s16, 1
      %s205 = scalar_select %p204, %s16, 1
      %s206 = smul.addr %s205, 8
      %s207 = smul.addr %s206, 8
      %s208 = scalar_lea.vmem %s2, %s207
      %p209 = scmp.lt.s32.totalorder %s16, 1
      %s210 = scalar_select %p209, %s16, 1
      %s211 = scalar_lea.vmem %s3, %s210
      %p212 = scmp.lt.s32.totalorder %s16, 1
      %s213 = scalar_select %p212, %s16, 1
      %s214 = scalar_lea.vmem %s4, %s213
      %v215 = vld [vmem:[%s203] sm:$0xff]
      %v216 = vld [vmem:[%s203 + $0x8] sm:$0x3]
      %v217 = vld [vmem:[%s203 + $0x10] sm:$0xff]
      %v218 = vld [vmem:[%s203 + $0x18] sm:$0x3]
      %v219 = vld [vmem:[%s203 + $0x20] sm:$0xff]
      %v220 = vld [vmem:[%s203 + $0x28] sm:$0x3]
      %v221 = vld [vmem:[%s203 + $0x30] sm:$0xff]
      %v222 = vld [vmem:[%s203 + $0x38] sm:$0x3]
      %v223 = vld [vmem:[%s203 + $0x40] sm:$0xff]
      %v224 = vld [vmem:[%s203 + $0x48] sm:$0x3]
      %v225 = vld [vmem:[%s203 + $0x50] sm:$0xff]
      %v226 = vld [vmem:[%s203 + $0x58] sm:$0x3]
      %v227 = vld [vmem:[%s203 + $0x60] sm:$0xff]
      %v228 = vld [vmem:[%s203 + $0x68] sm:$0x3]
      %v229 = vld [vmem:[%s203 + $0x70] sm:$0xff]
      %v230 = vld [vmem:[%s203 + $0x78] sm:$0x3]
      %v231 = vld [vmem:[%s203 + $0x80] sm:$0xff]
      %v232 = vld [vmem:[%s203 + $0x88] sm:$0x3]
      %v233 = vld [vmem:[%s203 + $0x90] sm:$0xff]
      %v234 = vld [vmem:[%s203 + $0x98] sm:$0x3]
      %v235 = vld [vmem:[%s1] sm:$0xf]
      %vm252 = vcmask 1046528
      %v253 = vrot.slane %v215, 1
      %v254 = vrot.slane %v216, 1
      %v255 = vsel %vm252, %v253, %v254
      %v256 = vrot.slane %v217, 1
      %v257 = vrot.slane %v218, 1
      %v258 = vsel %vm252, %v256, %v257
      %v259 = vrot.slane %v219, 1
      %v260 = vrot.slane %v220, 1
      %v261 = vsel %vm252, %v259, %v260
      %v262 = vrot.slane %v221, 1
      %v263 = vrot.slane %v222, 1
      %v264 = vsel %vm252, %v262, %v263
      %v265 = vrot.slane %v223, 1
      %v266 = vrot.slane %v224, 1
      %v267 = vsel %vm252, %v265, %v266
      %v268 = vrot.slane %v225, 1
      %v269 = vrot.slane %v226, 1
      %v270 = vsel %vm252, %v268, %v269
      %v271 = vrot.slane %v227, 1
      %v272 = vrot.slane %v228, 1
      %v273 = vsel %vm252, %v271, %v272
      %v274 = vrot.slane %v229, 1
      %v275 = vrot.slane %v230, 1
      %v276 = vsel %vm252, %v274, %v275
      %s277 = scalar_lea.vmem %s1, 4
      %v278 = vld [vmem:[%s277] sm:$0xf]
      %vm279 = vcmask 31744
      %v280 = vsel %vm279, %v255, 0
      %v282 = vsel %vm279, %v258, 0
      %v284 = vsel %vm279, %v261, 0
      %v286 = vsel %vm279, %v264, 0
      %v288 = vsel %vm279, %v267, 0
      %v290 = vsel %vm279, %v270, 0
      %v292 = vsel %vm279, %v273, 0
      %v294 = vsel %vm279, %v276, 0
      %vm296 = vcmask 1043456
      %v298 = vsel %vm296, %v278, 0
      %300 = vmatprep.subr.mxu0 0.0
      %301 = vmatpush1.msra.mxu0 %v298
      %302 = vmatprep.subr.mxu0 0.0
      %303 = vmatpush1.msra.mxu0 0.0
      %304 = vmatprep.subr.mxu0 0.0
      %305 = vmatpush1.msra.mxu0 0.0
      %306 = vmatprep.subr.mxu0 0.0
      %307 = vmatpush1.msra.mxu0 0.0
      %308 = vmatprep.subr.mxu0 0.0
      %309 = vmatpush1.msra.mxu0 0.0
      %310 = vmatprep.subr.mxu0 0.0
      %311 = vmatpush1.msra.mxu0 0.0
      %312 = vmatprep.subr.mxu0 0.0
      %313 = vmatpush1.msra.mxu0 0.0
      %314 = vmatprep.subr.mxu0 0.0
      %315 = vmatpush1.msra.mxu0 0.0
      %316 = vmatprep.subr.mxu0 0.0
      %317 = vmatpush1.msra.mxu0 0.0
      %318 = vmatprep.subr.mxu0 0.0
      %319 = vmatpush1.msra.mxu0 0.0
      %320 = vmatprep.subr.mxu0 0.0
      %321 = vmatpush1.msra.mxu0 0.0
      %322 = vmatprep.subr.mxu0 0.0
      %323 = vmatpush1.msra.mxu0 0.0
      %324 = vmatprep.subr.mxu0 0.0
      %325 = vmatpush1.msra.mxu0 0.0
      %326 = vmatprep.subr.mxu0 0.0
      %327 = vmatpush1.msra.mxu0 0.0
      %328 = vmatprep.subr.mxu0 0.0
      %329 = vmatpush1.msra.mxu0 0.0
      %330 = vmatprep.subr.mxu0 0.0
      %331 = vmatpush1.msra.mxu0 0.0
      %332 = vmatprep.subr.mxu0 0.0
      %333 = vmatpush1.msra.mxu0 0.0
      %334 = vmatprep.subr.mxu0 0.0
      %335 = vmatpush1.msra.mxu0 0.0
      %336 = vmatprep.subr.mxu0 0.0
      %337 = vmatpush1.msra.mxu0 0.0
      %338 = vmatprep.subr.mxu0 0.0
      %339 = vmatpush1.msra.mxu0 0.0
      %340 = vmatprep.subr.mxu0 0.0
      %341 = vmatpush1.msra.mxu0 0.0
      %342 = vmatprep.subr.mxu0 0.0
      %343 = vmatpush1.msra.mxu0 0.0
      %344 = vmatprep.subr.mxu0 0.0
      %345 = vmatpush1.msra.mxu0 0.0
      %346 = vmatprep.subr.mxu0 0.0
      %347 = vmatpush1.msra.mxu0 0.0
      %348 = vmatprep.subr.mxu0 0.0
      %349 = vmatpush1.msra.mxu0 0.0
      %350 = vmatprep.subr.mxu0 0.0
      %351 = vmatpush1.msra.mxu0 0.0
      %352 = vmatprep.subr.mxu0 0.0
      %353 = vmatpush1.msra.mxu0 0.0
      %354 = vmatprep.subr.mxu0 0.0
      %355 = vmatpush1.msra.mxu0 0.0
      %356 = vmatprep.subr.mxu0 0.0
      %357 = vmatpush1.msra.mxu0 0.0
      %358 = vmatprep.subr.mxu0 0.0
      %359 = vmatpush1.msra.mxu0 0.0
      %360 = vmatprep.subr.mxu0 0.0
      %361 = vmatpush1.msra.mxu0 0.0
      %362 = vmatprep.subr.mxu0 0.0
      %363 = vmatpush1.msra.mxu0 0.0
      %364 = vmatprep.mubr.f32.mxu0 0.0
      %365 = vmatmul.mubr.f32.gmra.mrb[0].mxu0 %v280
      %v366 = vpop.f32.mrb[0].mxu0
      %v367 = vadd.f32 0.0, %v366
      %v368 = vpop.f32.mrb[0].mxu0
      %369 = vmatprep.mubr.f32.mxu0 0.0
      %370 = vmatmul.mubr.f32.gmra.mrb[0].mxu0 %v282
      %v371 = vpop.f32.mrb[0].mxu0
      %v372 = vadd.f32 0.0, %v371
      %v373 = vpop.f32.mrb[0].mxu0
      %374 = vmatprep.mubr.f32.mxu0 0.0
      %375 = vmatmul.mubr.f32.gmra.mrb[0].mxu0 %v284
      %v376 = vpop.f32.mrb[0].mxu0
      %v377 = vadd.f32 0.0, %v376
      %v378 = vpop.f32.mrb[0].mxu0
      %379 = vmatprep.mubr.f32.mxu0 0.0
      %380 = vmatmul.mubr.f32.gmra.mrb[0].mxu0 %v286
      %v381 = vpop.f32.mrb[0].mxu0
      %v382 = vadd.f32 0.0, %v381
      %v383 = vpop.f32.mrb[0].mxu0
      %384 = vmatprep.mubr.f32.mxu0 0.0
      %385 = vmatmul.mubr.f32.gmra.mrb[0].mxu0 %v288
      %v386 = vpop.f32.mrb[0].mxu0
      %v387 = vadd.f32 0.0, %v386
      %v388 = vpop.f32.mrb[0].mxu0
      %389 = vmatprep.mubr.f32.mxu0 0.0
      %390 = vmatmul.mubr.f32.gmra.mrb[0].mxu0 %v290
      %v391 = vpop.f32.mrb[0].mxu0
      %v392 = vadd.f32 0.0, %v391
      %v393 = vpop.f32.mrb[0].mxu0
      %394 = vmatprep.mubr.f32.mxu0 0.0
      %395 = vmatmul.mubr.f32.gmra.mrb[0].mxu0 %v292
      %v396 = vpop.f32.mrb[0].mxu0
      %v397 = vadd.f32 0.0, %v396
      %v398 = vpop.f32.mrb[0].mxu0
      %399 = vmatprep.mubr.f32.mxu0 0.0
      %400 = vmatmul.mubr.f32.gmra.mrb[0].mxu0 %v294
      %v401 = vpop.f32.mrb[0].mxu0
      %v402 = vadd.f32 0.0, %v401
      %v403 = vpop.f32.mrb[0].mxu0
      %404 = vdwg.mxu0
      %v405 = vsel %vm279, %v215, 0
      %v407 = vsel %vm279, %v217, 0
      %v409 = vsel %vm279, %v219, 0
      %v411 = vsel %vm279, %v221, 0
      %v413 = vsel %vm279, %v223, 0
      %v415 = vsel %vm279, %v225, 0
      %v417 = vsel %vm279, %v227, 0
      %v419 = vsel %vm279, %v229, 0
      %v422 = vsel %vm296, %v235, 0
      %424 = vmatprep.subr.mxu0 0.0
      %425 = vmatpush1.msra.mxu0 %v422
      %426 = vmatprep.subr.mxu0 0.0
      %427 = vmatpush1.msra.mxu0 0.0
      %428 = vmatprep.subr.mxu0 0.0
      %429 = vmatpush1.msra.mxu0 0.0
      %430 = vmatprep.subr.mxu0 0.0
      %431 = vmatpush1.msra.mxu0 0.0
      %432 = vmatprep.subr.mxu0 0.0
      %433 = vmatpush1.msra.mxu0 0.0
      %434 = vmatprep.subr.mxu0 0.0
      %435 = vmatpush1.msra.mxu0 0.0
      %436 = vmatprep.subr.mxu0 0.0
      %437 = vmatpush1.msra.mxu0 0.0
      %438 = vmatprep.subr.mxu0 0.0
      %439 = vmatpush1.msra.mxu0 0.0
      %440 = vmatprep.subr.mxu0 0.0
      %441 = vmatpush1.msra.mxu0 0.0
      %442 = vmatprep.subr.mxu0 0.0
      %443 = vmatpush1.msra.mxu0 0.0
      %444 = vmatprep.subr.mxu0 0.0
      %445 = vmatpush1.msra.mxu0 0.0
      %446 = vmatprep.subr.mxu0 0.0
      %447 = vmatpush1.msra.mxu0 0.0
      %448 = vmatprep.subr.mxu0 0.0
      %449 = vmatpush1.msra.mxu0 0.0
      %450 = vmatprep.subr.mxu0 0.0
      %451 = vmatpush1.msra.mxu0 0.0
      %452 = vmatprep.subr.mxu0 0.0
      %453 = vmatpush1.msra.mxu0 0.0
      %454 = vmatprep.subr.mxu0 0.0
      %455 = vmatpush1.msra.mxu0 0.0
      %456 = vmatprep.subr.mxu0 0.0
      %457 = vmatpush1.msra.mxu0 0.0
      %458 = vmatprep.subr.mxu0 0.0
      %459 = vmatpush1.msra.mxu0 0.0
      %460 = vmatprep.subr.mxu0 0.0
      %461 = vmatpush1.msra.mxu0 0.0
      %462 = vmatprep.subr.mxu0 0.0
      %463 = vmatpush1.msra.mxu0 0.0
      %464 = vmatprep.subr.mxu0 0.0
      %465 = vmatpush1.msra.mxu0 0.0
      %466 = vmatprep.subr.mxu0 0.0
      %467 = vmatpush1.msra.mxu0 0.0
      %468 = vmatprep.subr.mxu0 0.0
      %469 = vmatpush1.msra.mxu0 0.0
      %470 = vmatprep.subr.mxu0 0.0
      %471 = vmatpush1.msra.mxu0 0.0
      %472 = vmatprep.subr.mxu0 0.0
      %473 = vmatpush1.msra.mxu0 0.0
      %474 = vmatprep.subr.mxu0 0.0
      %475 = vmatpush1.msra.mxu0 0.0
      %476 = vmatprep.subr.mxu0 0.0
      %477 = vmatpush1.msra.mxu0 0.0
      %478 = vmatprep.subr.mxu0 0.0
      %479 = vmatpush1.msra.mxu0 0.0
      %480 = vmatprep.subr.mxu0 0.0
      %481 = vmatpush1.msra.mxu0 0.0
      %482 = vmatprep.subr.mxu0 0.0
      %483 = vmatpush1.msra.mxu0 0.0
      %484 = vmatprep.subr.mxu0 0.0
      %485 = vmatpush1.msra.mxu0 0.0
      %486 = vmatprep.subr.mxu0 0.0
      %487 = vmatpush1.msra.mxu0 0.0
      %488 = vmatprep.mubr.f32.mxu0 0.0
      %489 = vmatmul.mubr.f32.gmra.mrb[0].mxu0 %v405
      %v490 = vpop.f32.mrb[0].mxu0
      %v491 = vadd.f32 %v367, %v490
      %v492 = vpop.f32.mrb[0].mxu0
      %493 = vmatprep.mubr.f32.mxu0 0.0
      %494 = vmatmul.mubr.f32.gmra.mrb[0].mxu0 %v407
      %v495 = vpop.f32.mrb[0].mxu0
      %v496 = vadd.f32 %v372, %v495
      %v497 = vpop.f32.mrb[0].mxu0
      %498 = vmatprep.mubr.f32.mxu0 0.0
      %499 = vmatmul.mubr.f32.gmra.mrb[0].mxu0 %v409
      %v500 = vpop.f32.mrb[0].mxu0
      %v501 = vadd.f32 %v377, %v500
      %v502 = vpop.f32.mrb[0].mxu0
      %503 = vmatprep.mubr.f32.mxu0 0.0
      %504 = vmatmul.mubr.f32.gmra.mrb[0].mxu0 %v411
      %v505 = vpop.f32.mrb[0].mxu0
      %v506 = vadd.f32 %v382, %v505
      %v507 = vpop.f32.mrb[0].mxu0
      %508 = vmatprep.mubr.f32.mxu0 0.0
      %509 = vmatmul.mubr.f32.gmra.mrb[0].mxu0 %v413
      %v510 = vpop.f32.mrb[0].mxu0
      %v511 = vadd.f32 %v387, %v510
      %v512 = vpop.f32.mrb[0].mxu0
      %513 = vmatprep.mubr.f32.mxu0 0.0
      %514 = vmatmul.mubr.f32.gmra.mrb[0].mxu0 %v415
      %v515 = vpop.f32.mrb[0].mxu0
      %v516 = vadd.f32 %v392, %v515
      %v517 = vpop.f32.mrb[0].mxu0
      %518 = vmatprep.mubr.f32.mxu0 0.0
      %519 = vmatmul.mubr.f32.gmra.mrb[0].mxu0 %v417
      %v520 = vpop.f32.mrb[0].mxu0
      %v521 = vadd.f32 %v397, %v520
      %v522 = vpop.f32.mrb[0].mxu0
      %523 = vmatprep.mubr.f32.mxu0 0.0
      %524 = vmatmul.mubr.f32.gmra.mrb[0].mxu0 %v419
      %v525 = vpop.f32.mrb[0].mxu0
      %v526 = vadd.f32 %v402, %v525
      %v527 = vpop.f32.mrb[0].mxu0
      %528 = vdwg.mxu0
      %vm529 = vcmask 1045504
      %v530 = vrot.slane %v215, 2
      %v531 = vrot.slane %v216, 2
      %v532 = vsel %vm529, %v530, %v531
      %v533 = vrot.slane %v217, 2
      %v534 = vrot.slane %v218, 2
      %v535 = vsel %vm529, %v533, %v534
      %v536 = vrot.slane %v219, 2
      %v537 = vrot.slane %v220, 2
      %v538 = vsel %vm529, %v536, %v537
      %v539 = vrot.slane %v221, 2
      %v540 = vrot.slane %v222, 2
      %v541 = vsel %vm529, %v539, %v540
      %v542 = vrot.slane %v223, 2
      %v543 = vrot.slane %v224, 2
      %v544 = vsel %vm529, %v542, %v543
      %v545 = vrot.slane %v225, 2
      %v546 = vrot.slane %v226, 2
      %v547 = vsel %vm529, %v545, %v546
      %v548 = vrot.slane %v227, 2
      %v549 = vrot.slane %v228, 2
      %v550 = vsel %vm529, %v548, %v549
      %v551 = vrot.slane %v229, 2
      %v552 = vrot.slane %v230, 2
      %v553 = vsel %vm529, %v551, %v552
      %s554 = scalar_lea.vmem %s1, 8
      %v555 = vld [vmem:[%s554] sm:$0xf]
      %v556 = vsel %vm279, %v532, 0
      %v558 = vsel %vm279, %v535, 0
      %v560 = vsel %vm279, %v538, 0
      %v562 = vsel %vm279, %v541, 0
      %v564 = vsel %vm279, %v544, 0
      %v566 = vsel %vm279, %v547, 0
      %v568 = vsel %vm279, %v550, 0
      %v570 = vsel %vm279, %v553, 0
      %v573 = vsel %vm296, %v555, 0
      %575 = vmatprep.subr.mxu0 0.0
      %576 = vmatpush1.msra.mxu0 %v573
      %577 = vmatprep.subr.mxu0 0.0
      %578 = vmatpush1.msra.mxu0 0.0
      %579 = vmatprep.subr.mxu0 0.0
      %580 = vmatpush1.msra.mxu0 0.0
      %581 = vmatprep.subr.mxu0 0.0
      %582 = vmatpush1.msra.mxu0 0.0
      %583 = vmatprep.subr.mxu0 0.0
      %584 = vmatpush1.msra.mxu0 0.0
      %585 = vmatprep.subr.mxu0 0.0
      %586 = vmatpush1.msra.mxu0 0.0
      %587 = vmatprep.subr.mxu0 0.0
      %588 = vmatpush1.msra.mxu0 0.0
      %589 = vmatprep.subr.mxu0 0.0
      %590 = vmatpush1.msra.mxu0 0.0
      %591 = vmatprep.subr.mxu0 0.0
      %592 = vmatpush1.msra.mxu0 0.0
      %593 = vmatprep.subr.mxu0 0.0
      %594 = vmatpush1.msra.mxu0 0.0
      %595 = vmatprep.subr.mxu0 0.0
      %596 = vmatpush1.msra.mxu0 0.0
      %597 = vmatprep.subr.mxu0 0.0
      %598 = vmatpush1.msra.mxu0 0.0
      %599 = vmatprep.subr.mxu0 0.0
      %600 = vmatpush1.msra.mxu0 0.0
      %601 = vmatprep.subr.mxu0 0.0
      %602 = vmatpush1.msra.mxu0 0.0
      %603 = vmatprep.subr.mxu0 0.0
      %604 = vmatpush1.msra.mxu0 0.0
      %605 = vmatprep.subr.mxu0 0.0
      %606 = vmatpush1.msra.mxu0 0.0
      %607 = vmatprep.subr.mxu0 0.0
      %608 = vmatpush1.msra.mxu0 0.0
      %609 = vmatprep.subr.mxu0 0.0
      %610 = vmatpush1.msra.mxu0 0.0
      %611 = vmatprep.subr.mxu0 0.0
      %612 = vmatpush1.msra.mxu0 0.0
      %613 = vmatprep.subr.mxu0 0.0
      %614 = vmatpush1.msra.mxu0 0.0
      %615 = vmatprep.subr.mxu0 0.0
      %616 = vmatpush1.msra.mxu0 0.0
      %617 = vmatprep.subr.mxu0 0.0
      %618 = vmatpush1.msra.mxu0 0.0
      %619 = vmatprep.subr.mxu0 0.0
      %620 = vmatpush1.msra.mxu0 0.0
      %621 = vmatprep.subr.mxu0 0.0
      %622 = vmatpush1.msra.mxu0 0.0
      %623 = vmatprep.subr.mxu0 0.0
      %624 = vmatpush1.msra.mxu0 0.0
      %625 = vmatprep.subr.mxu0 0.0
      %626 = vmatpush1.msra.mxu0 0.0
      %627 = vmatprep.subr.mxu0 0.0
      %628 = vmatpush1.msra.mxu0 0.0
      %629 = vmatprep.subr.mxu0 0.0
      %630 = vmatpush1.msra.mxu0 0.0
      %631 = vmatprep.subr.mxu0 0.0
      %632 = vmatpush1.msra.mxu0 0.0
      %633 = vmatprep.subr.mxu0 0.0
      %634 = vmatpush1.msra.mxu0 0.0
      %635 = vmatprep.subr.mxu0 0.0
      %636 = vmatpush1.msra.mxu0 0.0
      %637 = vmatprep.subr.mxu0 0.0
      %638 = vmatpush1.msra.mxu0 0.0
      %639 = vmatprep.mubr.f32.mxu0 0.0
      %640 = vmatmul.mubr.f32.gmra.mrb[0].mxu0 %v556
      %v641 = vpop.f32.mrb[0].mxu0
      %v642 = vadd.f32 0.0, %v641
      %v643 = vpop.f32.mrb[0].mxu0
      %644 = vmatprep.mubr.f32.mxu0 0.0
      %645 = vmatmul.mubr.f32.gmra.mrb[0].mxu0 %v558
      %v646 = vpop.f32.mrb[0].mxu0
      %v647 = vadd.f32 0.0, %v646
      %v648 = vpop.f32.mrb[0].mxu0
      %649 = vmatprep.mubr.f32.mxu0 0.0
      %650 = vmatmul.mubr.f32.gmra.mrb[0].mxu0 %v560
      %v651 = vpop.f32.mrb[0].mxu0
      %v652 = vadd.f32 0.0, %v651
      %v653 = vpop.f32.mrb[0].mxu0
      %654 = vmatprep.mubr.f32.mxu0 0.0
      %655 = vmatmul.mubr.f32.gmra.mrb[0].mxu0 %v562
      %v656 = vpop.f32.mrb[0].mxu0
      %v657 = vadd.f32 0.0, %v656
      %v658 = vpop.f32.mrb[0].mxu0
      %659 = vmatprep.mubr.f32.mxu0 0.0
      %660 = vmatmul.mubr.f32.gmra.mrb[0].mxu0 %v564
      %v661 = vpop.f32.mrb[0].mxu0
      %v662 = vadd.f32 0.0, %v661
      %v663 = vpop.f32.mrb[0].mxu0
      %664 = vmatprep.mubr.f32.mxu0 0.0
      %665 = vmatmul.mubr.f32.gmra.mrb[0].mxu0 %v566
      %v666 = vpop.f32.mrb[0].mxu0
      %v667 = vadd.f32 0.0, %v666
      %v668 = vpop.f32.mrb[0].mxu0
      %669 = vmatprep.mubr.f32.mxu0 0.0
      %670 = vmatmul.mubr.f32.gmra.mrb[0].mxu0 %v568
      %v671 = vpop.f32.mrb[0].mxu0
      %v672 = vadd.f32 0.0, %v671
      %v673 = vpop.f32.mrb[0].mxu0
      %674 = vmatprep.mubr.f32.mxu0 0.0
      %675 = vmatmul.mubr.f32.gmra.mrb[0].mxu0 %v570
      %v676 = vpop.f32.mrb[0].mxu0
      %v677 = vadd.f32 0.0, %v676
      %v678 = vpop.f32.mrb[0].mxu0
      %679 = vdwg.mxu0
      %v680 = vadd.f32 %v491, %v642
      %v681 = vadd.f32 %v496, %v647
      %v682 = vadd.f32 %v501, %v652
      %v683 = vadd.f32 %v506, %v657
      %v684 = vadd.f32 %v511, %v662
      %v685 = vadd.f32 %v516, %v667
      %v686 = vadd.f32 %v521, %v672
      %v687 = vadd.f32 %v526, %v677
      %s688 = scalar_lea.vmem %s1, 12
      %v689 = vld [vmem:[%s688] sm:$0xf]
      %v691 = vsel %vm279, %v231, 0
      %v694 = vsel %vm296, %v689, 0
      %696 = vmatprep.subr.mxu0 0.0
      %697 = vmatpush1.msra.mxu0 %v694
      %698 = vmatprep.subr.mxu0 0.0
      %699 = vmatpush1.msra.mxu0 0.0
      %700 = vmatprep.subr.mxu0 0.0
      %701 = vmatpush1.msra.mxu0 0.0
      %702 = vmatprep.subr.mxu0 0.0
      %703 = vmatpush1.msra.mxu0 0.0
      %704 = vmatprep.subr.mxu0 0.0
      %705 = vmatpush1.msra.mxu0 0.0
      %706 = vmatprep.subr.mxu0 0.0
      %707 = vmatpush1.msra.mxu0 0.0
      %708 = vmatprep.subr.mxu0 0.0
      %709 = vmatpush1.msra.mxu0 0.0
      %710 = vmatprep.subr.mxu0 0.0
      %711 = vmatpush1.msra.mxu0 0.0
      %712 = vmatprep.subr.mxu0 0.0
      %713 = vmatpush1.msra.mxu0 0.0
      %714 = vmatprep.subr.mxu0 0.0
      %715 = vmatpush1.msra.mxu0 0.0
      %716 = vmatprep.subr.mxu0 0.0
      %717 = vmatpush1.msra.mxu0 0.0
      %718 = vmatprep.subr.mxu0 0.0
      %719 = vmatpush1.msra.mxu0 0.0
      %720 = vmatprep.subr.mxu0 0.0
      %721 = vmatpush1.msra.mxu0 0.0
      %722 = vmatprep.subr.mxu0 0.0
      %723 = vmatpush1.msra.mxu0 0.0
      %724 = vmatprep.subr.mxu0 0.0
      %725 = vmatpush1.msra.mxu0 0.0
      %726 = vmatprep.subr.mxu0 0.0
      %727 = vmatpush1.msra.mxu0 0.0
      %728 = vmatprep.subr.mxu0 0.0
      %729 = vmatpush1.msra.mxu0 0.0
      %730 = vmatprep.subr.mxu0 0.0
      %731 = vmatpush1.msra.mxu0 0.0
      %732 = vmatprep.subr.mxu0 0.0
      %733 = vmatpush1.msra.mxu0 0.0
      %734 = vmatprep.subr.mxu0 0.0
      %735 = vmatpush1.msra.mxu0 0.0
      %736 = vmatprep.subr.mxu0 0.0
      %737 = vmatpush1.msra.mxu0 0.0
      %738 = vmatprep.subr.mxu0 0.0
      %739 = vmatpush1.msra.mxu0 0.0
      %740 = vmatprep.subr.mxu0 0.0
      %741 = vmatpush1.msra.mxu0 0.0
      %742 = vmatprep.subr.mxu0 0.0
      %743 = vmatpush1.msra.mxu0 0.0
      %744 = vmatprep.subr.mxu0 0.0
      %745 = vmatpush1.msra.mxu0 0.0
      %746 = vmatprep.subr.mxu0 0.0
      %747 = vmatpush1.msra.mxu0 0.0
      %748 = vmatprep.subr.mxu0 0.0
      %749 = vmatpush1.msra.mxu0 0.0
      %750 = vmatprep.subr.mxu0 0.0
      %751 = vmatpush1.msra.mxu0 0.0
      %752 = vmatprep.subr.mxu0 0.0
      %753 = vmatpush1.msra.mxu0 0.0
      %754 = vmatprep.subr.mxu0 0.0
      %755 = vmatpush1.msra.mxu0 0.0
      %756 = vmatprep.subr.mxu0 0.0
      %757 = vmatpush1.msra.mxu0 0.0
      %758 = vmatprep.subr.mxu0 0.0
      %759 = vmatpush1.msra.mxu0 0.0
      %760 = vmatprep.mubr.f32.mxu0 0.0
      %761 = vmatmul.mubr.f32.gmra.mrb[0].mxu0 %v407
      %v762 = vpop.f32.mrb[0].mxu0
      %v763 = vadd.f32 0.0, %v762
      %v764 = vpop.f32.mrb[0].mxu0
      %765 = vmatprep.mubr.f32.mxu0 0.0
      %766 = vmatmul.mubr.f32.gmra.mrb[0].mxu0 %v409
      %v767 = vpop.f32.mrb[0].mxu0
      %v768 = vadd.f32 0.0, %v767
      %v769 = vpop.f32.mrb[0].mxu0
      %770 = vmatprep.mubr.f32.mxu0 0.0
      %771 = vmatmul.mubr.f32.gmra.mrb[0].mxu0 %v411
      %v772 = vpop.f32.mrb[0].mxu0
      %v773 = vadd.f32 0.0, %v772
      %v774 = vpop.f32.mrb[0].mxu0
      %775 = vmatprep.mubr.f32.mxu0 0.0
      %776 = vmatmul.mubr.f32.gmra.mrb[0].mxu0 %v413
      %v777 = vpop.f32.mrb[0].mxu0
      %v778 = vadd.f32 0.0, %v777
      %v779 = vpop.f32.mrb[0].mxu0
      %780 = vmatprep.mubr.f32.mxu0 0.0
      %781 = vmatmul.mubr.f32.gmra.mrb[0].mxu0 %v415
      %v782 = vpop.f32.mrb[0].mxu0
      %v783 = vadd.f32 0.0, %v782
      %v784 = vpop.f32.mrb[0].mxu0
      %785 = vmatprep.mubr.f32.mxu0 0.0
      %786 = vmatmul.mubr.f32.gmra.mrb[0].mxu0 %v417
      %v787 = vpop.f32.mrb[0].mxu0
      %v788 = vadd.f32 0.0, %v787
      %v789 = vpop.f32.mrb[0].mxu0
      %790 = vmatprep.mubr.f32.mxu0 0.0
      %791 = vmatmul.mubr.f32.gmra.mrb[0].mxu0 %v419
      %v792 = vpop.f32.mrb[0].mxu0
      %v793 = vadd.f32 0.0, %v792
      %v794 = vpop.f32.mrb[0].mxu0
      %795 = vmatprep.mubr.f32.mxu0 0.0
      %796 = vmatmul.mubr.f32.gmra.mrb[0].mxu0 %v691
      %v797 = vpop.f32.mrb[0].mxu0
      %v798 = vadd.f32 0.0, %v797
      %v799 = vpop.f32.mrb[0].mxu0
      %800 = vdwg.mxu0
      %v801 = vadd.f32 %v680, %v763
      %v802 = vadd.f32 %v681, %v768
      %v803 = vadd.f32 %v682, %v773
      %v804 = vadd.f32 %v683, %v778
      %v805 = vadd.f32 %v684, %v783
      %v806 = vadd.f32 %v685, %v788
      %v807 = vadd.f32 %v686, %v793
      %v808 = vadd.f32 %v687, %v798
      %v810 = vrot.slane %v231, 1
      %v811 = vrot.slane %v232, 1
      %v812 = vsel %vm252, %v810, %v811
      %s813 = scalar_lea.vmem %s1, 16
      %v814 = vld [vmem:[%s813] sm:$0xf]
      %v815 = vsel %vm279, %v812, 0
      %v818 = vsel %vm296, %v814, 0
      %820 = vmatprep.subr.mxu0 0.0
      %821 = vmatpush1.msra.mxu0 %v818
      %822 = vmatprep.subr.mxu0 0.0
      %823 = vmatpush1.msra.mxu0 0.0
      %824 = vmatprep.subr.mxu0 0.0
      %825 = vmatpush1.msra.mxu0 0.0
      %826 = vmatprep.subr.mxu0 0.0
      %827 = vmatpush1.msra.mxu0 0.0
      %828 = vmatprep.subr.mxu0 0.0
      %829 = vmatpush1.msra.mxu0 0.0
      %830 = vmatprep.subr.mxu0 0.0
      %831 = vmatpush1.msra.mxu0 0.0
      %832 = vmatprep.subr.mxu0 0.0
      %833 = vmatpush1.msra.mxu0 0.0
      %834 = vmatprep.subr.mxu0 0.0
      %835 = vmatpush1.msra.mxu0 0.0
      %836 = vmatprep.subr.mxu0 0.0
      %837 = vmatpush1.msra.mxu0 0.0
      %838 = vmatprep.subr.mxu0 0.0
      %839 = vmatpush1.msra.mxu0 0.0
      %840 = vmatprep.subr.mxu0 0.0
      %841 = vmatpush1.msra.mxu0 0.0
      %842 = vmatprep.subr.mxu0 0.0
      %843 = vmatpush1.msra.mxu0 0.0
      %844 = vmatprep.subr.mxu0 0.0
      %845 = vmatpush1.msra.mxu0 0.0
      %846 = vmatprep.subr.mxu0 0.0
      %847 = vmatpush1.msra.mxu0 0.0
      %848 = vmatprep.subr.mxu0 0.0
      %849 = vmatpush1.msra.mxu0 0.0
      %850 = vmatprep.subr.mxu0 0.0
      %851 = vmatpush1.msra.mxu0 0.0
      %852 = vmatprep.subr.mxu0 0.0
      %853 = vmatpush1.msra.mxu0 0.0
      %854 = vmatprep.subr.mxu0 0.0
      %855 = vmatpush1.msra.mxu0 0.0
      %856 = vmatprep.subr.mxu0 0.0
      %857 = vmatpush1.msra.mxu0 0.0
      %858 = vmatprep.subr.mxu0 0.0
      %859 = vmatpush1.msra.mxu0 0.0
      %860 = vmatprep.subr.mxu0 0.0
      %861 = vmatpush1.msra.mxu0 0.0
      %862 = vmatprep.subr.mxu0 0.0
      %863 = vmatpush1.msra.mxu0 0.0
      %864 = vmatprep.subr.mxu0 0.0
      %865 = vmatpush1.msra.mxu0 0.0
      %866 = vmatprep.subr.mxu0 0.0
      %867 = vmatpush1.msra.mxu0 0.0
      %868 = vmatprep.subr.mxu0 0.0
      %869 = vmatpush1.msra.mxu0 0.0
      %870 = vmatprep.subr.mxu0 0.0
      %871 = vmatpush1.msra.mxu0 0.0
      %872 = vmatprep.subr.mxu0 0.0
      %873 = vmatpush1.msra.mxu0 0.0
      %874 = vmatprep.subr.mxu0 0.0
      %875 = vmatpush1.msra.mxu0 0.0
      %876 = vmatprep.subr.mxu0 0.0
      %877 = vmatpush1.msra.mxu0 0.0
      %878 = vmatprep.subr.mxu0 0.0
      %879 = vmatpush1.msra.mxu0 0.0
      %880 = vmatprep.subr.mxu0 0.0
      %881 = vmatpush1.msra.mxu0 0.0
      %882 = vmatprep.subr.mxu0 0.0
      %883 = vmatpush1.msra.mxu0 0.0
      %884 = vmatprep.mubr.f32.mxu0 0.0
      %885 = vmatmul.mubr.f32.gmra.mrb[0].mxu0 %v282
      %v886 = vpop.f32.mrb[0].mxu0
      %v887 = vadd.f32 0.0, %v886
      %v888 = vpop.f32.mrb[0].mxu0
      %889 = vmatprep.mubr.f32.mxu0 0.0
      %890 = vmatmul.mubr.f32.gmra.mrb[0].mxu0 %v284
      %v891 = vpop.f32.mrb[0].mxu0
      %v892 = vadd.f32 0.0, %v891
      %v893 = vpop.f32.mrb[0].mxu0
      %894 = vmatprep.mubr.f32.mxu0 0.0
      %895 = vmatmul.mubr.f32.gmra.mrb[0].mxu0 %v286
      %v896 = vpop.f32.mrb[0].mxu0
      %v897 = vadd.f32 0.0, %v896
      %v898 = vpop.f32.mrb[0].mxu0
      %899 = vmatprep.mubr.f32.mxu0 0.0
      %900 = vmatmul.mubr.f32.gmra.mrb[0].mxu0 %v288
      %v901 = vpop.f32.mrb[0].mxu0
      %v902 = vadd.f32 0.0, %v901
      %v903 = vpop.f32.mrb[0].mxu0
      %904 = vmatprep.mubr.f32.mxu0 0.0
      %905 = vmatmul.mubr.f32.gmra.mrb[0].mxu0 %v290
      %v906 = vpop.f32.mrb[0].mxu0
      %v907 = vadd.f32 0.0, %v906
      %v908 = vpop.f32.mrb[0].mxu0
      %909 = vmatprep.mubr.f32.mxu0 0.0
      %910 = vmatmul.mubr.f32.gmra.mrb[0].mxu0 %v292
      %v911 = vpop.f32.mrb[0].mxu0
      %v912 = vadd.f32 0.0, %v911
      %v913 = vpop.f32.mrb[0].mxu0
      %914 = vmatprep.mubr.f32.mxu0 0.0
      %915 = vmatmul.mubr.f32.gmra.mrb[0].mxu0 %v294
      %v916 = vpop.f32.mrb[0].mxu0
      %v917 = vadd.f32 0.0, %v916
      %v918 = vpop.f32.mrb[0].mxu0
      %919 = vmatprep.mubr.f32.mxu0 0.0
      %920 = vmatmul.mubr.f32.gmra.mrb[0].mxu0 %v815
      %v921 = vpop.f32.mrb[0].mxu0
      %v922 = vadd.f32 0.0, %v921
      %v923 = vpop.f32.mrb[0].mxu0
      %924 = vdwg.mxu0
      %v925 = vadd.f32 %v801, %v887
      %v926 = vadd.f32 %v802, %v892
      %v927 = vadd.f32 %v803, %v897
      %v928 = vadd.f32 %v804, %v902
      %v929 = vadd.f32 %v805, %v907
      %v930 = vadd.f32 %v806, %v912
      %v931 = vadd.f32 %v807, %v917
      %v932 = vadd.f32 %v808, %v922
      %v933 = vrot.slane %v231, 2
      %v934 = vrot.slane %v232, 2
      %v935 = vsel %vm529, %v933, %v934
      %s936 = scalar_lea.vmem %s1, 20
      %v937 = vld [vmem:[%s936] sm:$0xf]
      %v938 = vsel %vm279, %v935, 0
      %v941 = vsel %vm296, %v937, 0
      %943 = vmatprep.subr.mxu0 0.0
      %944 = vmatpush1.msra.mxu0 %v941
      %945 = vmatprep.subr.mxu0 0.0
      %946 = vmatpush1.msra.mxu0 0.0
      %947 = vmatprep.subr.mxu0 0.0
      %948 = vmatpush1.msra.mxu0 0.0
      %949 = vmatprep.subr.mxu0 0.0
      %950 = vmatpush1.msra.mxu0 0.0
      %951 = vmatprep.subr.mxu0 0.0
      %952 = vmatpush1.msra.mxu0 0.0
      %953 = vmatprep.subr.mxu0 0.0
      %954 = vmatpush1.msra.mxu0 0.0
      %955 = vmatprep.subr.mxu0 0.0
      %956 = vmatpush1.msra.mxu0 0.0
      %957 = vmatprep.subr.mxu0 0.0
      %958 = vmatpush1.msra.mxu0 0.0
      %959 = vmatprep.subr.mxu0 0.0
      %960 = vmatpush1.msra.mxu0 0.0
      %961 = vmatprep.subr.mxu0 0.0
      %962 = vmatpush1.msra.mxu0 0.0
      %963 = vmatprep.subr.mxu0 0.0
      %964 = vmatpush1.msra.mxu0 0.0
      %965 = vmatprep.subr.mxu0 0.0
      %966 = vmatpush1.msra.mxu0 0.0
      %967 = vmatprep.subr.mxu0 0.0
      %968 = vmatpush1.msra.mxu0 0.0
      %969 = vmatprep.subr.mxu0 0.0
      %970 = vmatpush1.msra.mxu0 0.0
      %971 = vmatprep.subr.mxu0 0.0
      %972 = vmatpush1.msra.mxu0 0.0
      %973 = vmatprep.subr.mxu0 0.0
      %974 = vmatpush1.msra.mxu0 0.0
      %975 = vmatprep.subr.mxu0 0.0
      %976 = vmatpush1.msra.mxu0 0.0
      %977 = vmatprep.subr.mxu0 0.0
      %978 = vmatpush1.msra.mxu0 0.0
      %979 = vmatprep.subr.mxu0 0.0
      %980 = vmatpush1.msra.mxu0 0.0
      %981 = vmatprep.subr.mxu0 0.0
      %982 = vmatpush1.msra.mxu0 0.0
      %983 = vmatprep.subr.mxu0 0.0
      %984 = vmatpush1.msra.mxu0 0.0
      %985 = vmatprep.subr.mxu0 0.0
      %986 = vmatpush1.msra.mxu0 0.0
      %987 = vmatprep.subr.mxu0 0.0
      %988 = vmatpush1.msra.mxu0 0.0
      %989 = vmatprep.subr.mxu0 0.0
      %990 = vmatpush1.msra.mxu0 0.0
      %991 = vmatprep.subr.mxu0 0.0
      %992 = vmatpush1.msra.mxu0 0.0
      %993 = vmatprep.subr.mxu0 0.0
      %994 = vmatpush1.msra.mxu0 0.0
      %995 = vmatprep.subr.mxu0 0.0
      %996 = vmatpush1.msra.mxu0 0.0
      %997 = vmatprep.subr.mxu0 0.0
      %998 = vmatpush1.msra.mxu0 0.0
      %999 = vmatprep.subr.mxu0 0.0
      %1000 = vmatpush1.msra.mxu0 0.0
      %1001 = vmatprep.subr.mxu0 0.0
      %1002 = vmatpush1.msra.mxu0 0.0
      %1003 = vmatprep.subr.mxu0 0.0
      %1004 = vmatpush1.msra.mxu0 0.0
      %1005 = vmatprep.subr.mxu0 0.0
      %1006 = vmatpush1.msra.mxu0 0.0
      %1007 = vmatprep.mubr.f32.mxu0 0.0
      %1008 = vmatmul.mubr.f32.gmra.mrb[0].mxu0 %v558
      %v1009 = vpop.f32.mrb[0].mxu0
      %v1010 = vadd.f32 0.0, %v1009
      %v1011 = vpop.f32.mrb[0].mxu0
      %1012 = vmatprep.mubr.f32.mxu0 0.0
      %1013 = vmatmul.mubr.f32.gmra.mrb[0].mxu0 %v560
      %v1014 = vpop.f32.mrb[0].mxu0
      %v1015 = vadd.f32 0.0, %v1014
      %v1016 = vpop.f32.mrb[0].mxu0
      %1017 = vmatprep.mubr.f32.mxu0 0.0
      %1018 = vmatmul.mubr.f32.gmra.mrb[0].mxu0 %v562
      %v1019 = vpop.f32.mrb[0].mxu0
      %v1020 = vadd.f32 0.0, %v1019
      %v1021 = vpop.f32.mrb[0].mxu0
      %1022 = vmatprep.mubr.f32.mxu0 0.0
      %1023 = vmatmul.mubr.f32.gmra.mrb[0].mxu0 %v564
      %v1024 = vpop.f32.mrb[0].mxu0
      %v1025 = vadd.f32 0.0, %v1024
      %v1026 = vpop.f32.mrb[0].mxu0
      %1027 = vmatprep.mubr.f32.mxu0 0.0
      %1028 = vmatmul.mubr.f32.gmra.mrb[0].mxu0 %v566
      %v1029 = vpop.f32.mrb[0].mxu0
      %v1030 = vadd.f32 0.0, %v1029
      %v1031 = vpop.f32.mrb[0].mxu0
      %1032 = vmatprep.mubr.f32.mxu0 0.0
      %1033 = vmatmul.mubr.f32.gmra.mrb[0].mxu0 %v568
      %v1034 = vpop.f32.mrb[0].mxu0
      %v1035 = vadd.f32 0.0, %v1034
      %v1036 = vpop.f32.mrb[0].mxu0
      %1037 = vmatprep.mubr.f32.mxu0 0.0
      %1038 = vmatmul.mubr.f32.gmra.mrb[0].mxu0 %v570
      %v1039 = vpop.f32.mrb[0].mxu0
      %v1040 = vadd.f32 0.0, %v1039
      %v1041 = vpop.f32.mrb[0].mxu0
      %1042 = vmatprep.mubr.f32.mxu0 0.0
      %1043 = vmatmul.mubr.f32.gmra.mrb[0].mxu0 %v938
      %v1044 = vpop.f32.mrb[0].mxu0
      %v1045 = vadd.f32 0.0, %v1044
      %v1046 = vpop.f32.mrb[0].mxu0
      %1047 = vdwg.mxu0
      %v1048 = vadd.f32 %v925, %v1010
      %v1049 = vadd.f32 %v926, %v1015
      %v1050 = vadd.f32 %v927, %v1020
      %v1051 = vadd.f32 %v928, %v1025
      %v1052 = vadd.f32 %v929, %v1030
      %v1053 = vadd.f32 %v930, %v1035
      %v1054 = vadd.f32 %v931, %v1040
      %v1055 = vadd.f32 %v932, %v1045
      %s1056 = scalar_lea.vmem %s1, 24
      %v1057 = vld [vmem:[%s1056] sm:$0xf]
      %v1059 = vsel %vm279, %v233, 0
      %v1062 = vsel %vm296, %v1057, 0
      %1064 = vmatprep.subr.mxu0 0.0
      %1065 = vmatpush1.msra.mxu0 %v1062
      %1066 = vmatprep.subr.mxu0 0.0
      %1067 = vmatpush1.msra.mxu0 0.0
      %1068 = vmatprep.subr.mxu0 0.0
      %1069 = vmatpush1.msra.mxu0 0.0
      %1070 = vmatprep.subr.mxu0 0.0
      %1071 = vmatpush1.msra.mxu0 0.0
      %1072 = vmatprep.subr.mxu0 0.0
      %1073 = vmatpush1.msra.mxu0 0.0
      %1074 = vmatprep.subr.mxu0 0.0
      %1075 = vmatpush1.msra.mxu0 0.0
      %1076 = vmatprep.subr.mxu0 0.0
      %1077 = vmatpush1.msra.mxu0 0.0
      %1078 = vmatprep.subr.mxu0 0.0
      %1079 = vmatpush1.msra.mxu0 0.0
      %1080 = vmatprep.subr.mxu0 0.0
      %1081 = vmatpush1.msra.mxu0 0.0
      %1082 = vmatprep.subr.mxu0 0.0
      %1083 = vmatpush1.msra.mxu0 0.0
      %1084 = vmatprep.subr.mxu0 0.0
      %1085 = vmatpush1.msra.mxu0 0.0
      %1086 = vmatprep.subr.mxu0 0.0
      %1087 = vmatpush1.msra.mxu0 0.0
      %1088 = vmatprep.subr.mxu0 0.0
      %1089 = vmatpush1.msra.mxu0 0.0
      %1090 = vmatprep.subr.mxu0 0.0
      %1091 = vmatpush1.msra.mxu0 0.0
      %1092 = vmatprep.subr.mxu0 0.0
      %1093 = vmatpush1.msra.mxu0 0.0
      %1094 = vmatprep.subr.mxu0 0.0
      %1095 = vmatpush1.msra.mxu0 0.0
      %1096 = vmatprep.subr.mxu0 0.0
      %1097 = vmatpush1.msra.mxu0 0.0
      %1098 = vmatprep.subr.mxu0 0.0
      %1099 = vmatpush1.msra.mxu0 0.0
      %1100 = vmatprep.subr.mxu0 0.0
      %1101 = vmatpush1.msra.mxu0 0.0
      %1102 = vmatprep.subr.mxu0 0.0
      %1103 = vmatpush1.msra.mxu0 0.0
      %1104 = vmatprep.subr.mxu0 0.0
      %1105 = vmatpush1.msra.mxu0 0.0
      %1106 = vmatprep.subr.mxu0 0.0
      %1107 = vmatpush1.msra.mxu0 0.0
      %1108 = vmatprep.subr.mxu0 0.0
      %1109 = vmatpush1.msra.mxu0 0.0
      %1110 = vmatprep.subr.mxu0 0.0
      %1111 = vmatpush1.msra.mxu0 0.0
      %1112 = vmatprep.subr.mxu0 0.0
      %1113 = vmatpush1.msra.mxu0 0.0
      %1114 = vmatprep.subr.mxu0 0.0
      %1115 = vmatpush1.msra.mxu0 0.0
      %1116 = vmatprep.subr.mxu0 0.0
      %1117 = vmatpush1.msra.mxu0 0.0
      %1118 = vmatprep.subr.mxu0 0.0
      %1119 = vmatpush1.msra.mxu0 0.0
      %1120 = vmatprep.subr.mxu0 0.0
      %1121 = vmatpush1.msra.mxu0 0.0
      %1122 = vmatprep.subr.mxu0 0.0
      %1123 = vmatpush1.msra.mxu0 0.0
      %1124 = vmatprep.subr.mxu0 0.0
      %1125 = vmatpush1.msra.mxu0 0.0
      %1126 = vmatprep.subr.mxu0 0.0
      %1127 = vmatpush1.msra.mxu0 0.0
      %1128 = vmatprep.mubr.f32.mxu0 0.0
      %1129 = vmatmul.mubr.f32.gmra.mrb[0].mxu0 %v409
      %v1130 = vpop.f32.mrb[0].mxu0
      %v1131 = vadd.f32 0.0, %v1130
      %v1132 = vpop.f32.mrb[0].mxu0
      %1133 = vmatprep.mubr.f32.mxu0 0.0
      %1134 = vmatmul.mubr.f32.gmra.mrb[0].mxu0 %v411
      %v1135 = vpop.f32.mrb[0].mxu0
      %v1136 = vadd.f32 0.0, %v1135
      %v1137 = vpop.f32.mrb[0].mxu0
      %1138 = vmatprep.mubr.f32.mxu0 0.0
      %1139 = vmatmul.mubr.f32.gmra.mrb[0].mxu0 %v413
      %v1140 = vpop.f32.mrb[0].mxu0
      %v1141 = vadd.f32 0.0, %v1140
      %v1142 = vpop.f32.mrb[0].mxu0
      %1143 = vmatprep.mubr.f32.mxu0 0.0
      %1144 = vmatmul.mubr.f32.gmra.mrb[0].mxu0 %v415
      %v1145 = vpop.f32.mrb[0].mxu0
      %v1146 = vadd.f32 0.0, %v1145
      %v1147 = vpop.f32.mrb[0].mxu0
      %1148 = vmatprep.mubr.f32.mxu0 0.0
      %1149 = vmatmul.mubr.f32.gmra.mrb[0].mxu0 %v417
      %v1150 = vpop.f32.mrb[0].mxu0
      %v1151 = vadd.f32 0.0, %v1150
      %v1152 = vpop.f32.mrb[0].mxu0
      %1153 = vmatprep.mubr.f32.mxu0 0.0
      %1154 = vmatmul.mubr.f32.gmra.mrb[0].mxu0 %v419
      %v1155 = vpop.f32.mrb[0].mxu0
      %v1156 = vadd.f32 0.0, %v1155
      %v1157 = vpop.f32.mrb[0].mxu0
      %1158 = vmatprep.mubr.f32.mxu0 0.0
      %1159 = vmatmul.mubr.f32.gmra.mrb[0].mxu0 %v691
      %v1160 = vpop.f32.mrb[0].mxu0
      %v1161 = vadd.f32 0.0, %v1160
      %v1162 = vpop.f32.mrb[0].mxu0
      %1163 = vmatprep.mubr.f32.mxu0 0.0
      %1164 = vmatmul.mubr.f32.gmra.mrb[0].mxu0 %v1059
      %v1165 = vpop.f32.mrb[0].mxu0
      %v1166 = vadd.f32 0.0, %v1165
      %v1167 = vpop.f32.mrb[0].mxu0
      %1168 = vdwg.mxu0
      %v1169 = vadd.f32 %v1048, %v1131
      %v1170 = vadd.f32 %v1049, %v1136
      %v1171 = vadd.f32 %v1050, %v1141
      %v1172 = vadd.f32 %v1051, %v1146
      %v1173 = vadd.f32 %v1052, %v1151
      %v1174 = vadd.f32 %v1053, %v1156
      %v1175 = vadd.f32 %v1054, %v1161
      %v1176 = vadd.f32 %v1055, %v1166
      %v1178 = vrot.slane %v233, 1
      %v1179 = vrot.slane %v234, 1
      %v1180 = vsel %vm252, %v1178, %v1179
      %s1181 = scalar_lea.vmem %s1, 28
      %v1182 = vld [vmem:[%s1181] sm:$0xf]
      %v1183 = vsel %vm279, %v1180, 0
      %v1186 = vsel %vm296, %v1182, 0
      %1188 = vmatprep.subr.mxu0 0.0
      %1189 = vmatpush1.msra.mxu0 %v1186
      %1190 = vmatprep.subr.mxu0 0.0
      %1191 = vmatpush1.msra.mxu0 0.0
      %1192 = vmatprep.subr.mxu0 0.0
      %1193 = vmatpush1.msra.mxu0 0.0
      %1194 = vmatprep.subr.mxu0 0.0
      %1195 = vmatpush1.msra.mxu0 0.0
      %1196 = vmatprep.subr.mxu0 0.0
      %1197 = vmatpush1.msra.mxu0 0.0
      %1198 = vmatprep.subr.mxu0 0.0
      %1199 = vmatpush1.msra.mxu0 0.0
      %1200 = vmatprep.subr.mxu0 0.0
      %1201 = vmatpush1.msra.mxu0 0.0
      %1202 = vmatprep.subr.mxu0 0.0
      %1203 = vmatpush1.msra.mxu0 0.0
      %1204 = vmatprep.subr.mxu0 0.0
      %1205 = vmatpush1.msra.mxu0 0.0
      %1206 = vmatprep.subr.mxu0 0.0
      %1207 = vmatpush1.msra.mxu0 0.0
      %1208 = vmatprep.subr.mxu0 0.0
      %1209 = vmatpush1.msra.mxu0 0.0
      %1210 = vmatprep.subr.mxu0 0.0
      %1211 = vmatpush1.msra.mxu0 0.0
      %1212 = vmatprep.subr.mxu0 0.0
      %1213 = vmatpush1.msra.mxu0 0.0
      %1214 = vmatprep.subr.mxu0 0.0
      %1215 = vmatpush1.msra.mxu0 0.0
      %1216 = vmatprep.subr.mxu0 0.0
      %1217 = vmatpush1.msra.mxu0 0.0
      %1218 = vmatprep.subr.mxu0 0.0
      %1219 = vmatpush1.msra.mxu0 0.0
      %1220 = vmatprep.subr.mxu0 0.0
      %1221 = vmatpush1.msra.mxu0 0.0
      %1222 = vmatprep.subr.mxu0 0.0
      %1223 = vmatpush1.msra.mxu0 0.0
      %1224 = vmatprep.subr.mxu0 0.0
      %1225 = vmatpush1.msra.mxu0 0.0
      %1226 = vmatprep.subr.mxu0 0.0
      %1227 = vmatpush1.msra.mxu0 0.0
      %1228 = vmatprep.subr.mxu0 0.0
      %1229 = vmatpush1.msra.mxu0 0.0
      %1230 = vmatprep.subr.mxu0 0.0
      %1231 = vmatpush1.msra.mxu0 0.0
      %1232 = vmatprep.subr.mxu0 0.0
      %1233 = vmatpush1.msra.mxu0 0.0
      %1234 = vmatprep.subr.mxu0 0.0
      %1235 = vmatpush1.msra.mxu0 0.0
      %1236 = vmatprep.subr.mxu0 0.0
      %1237 = vmatpush1.msra.mxu0 0.0
      %1238 = vmatprep.subr.mxu0 0.0
      %1239 = vmatpush1.msra.mxu0 0.0
      %1240 = vmatprep.subr.mxu0 0.0
      %1241 = vmatpush1.msra.mxu0 0.0
      %1242 = vmatprep.subr.mxu0 0.0
      %1243 = vmatpush1.msra.mxu0 0.0
      %1244 = vmatprep.subr.mxu0 0.0
      %1245 = vmatpush1.msra.mxu0 0.0
      %1246 = vmatprep.subr.mxu0 0.0
      %1247 = vmatpush1.msra.mxu0 0.0
      %1248 = vmatprep.subr.mxu0 0.0
      %1249 = vmatpush1.msra.mxu0 0.0
      %1250 = vmatprep.subr.mxu0 0.0
      %1251 = vmatpush1.msra.mxu0 0.0
      %1252 = vmatprep.mubr.f32.mxu0 0.0
      %1253 = vmatmul.mubr.f32.gmra.mrb[0].mxu0 %v284
      %v1254 = vpop.f32.mrb[0].mxu0
      %v1255 = vadd.f32 0.0, %v1254
      %v1256 = vpop.f32.mrb[0].mxu0
      %1257 = vmatprep.mubr.f32.mxu0 0.0
      %1258 = vmatmul.mubr.f32.gmra.mrb[0].mxu0 %v286
      %v1259 = vpop.f32.mrb[0].mxu0
      %v1260 = vadd.f32 0.0, %v1259
      %v1261 = vpop.f32.mrb[0].mxu0
      %1262 = vmatprep.mubr.f32.mxu0 0.0
      %1263 = vmatmul.mubr.f32.gmra.mrb[0].mxu0 %v288
      %v1264 = vpop.f32.mrb[0].mxu0
      %v1265 = vadd.f32 0.0, %v1264
      %v1266 = vpop.f32.mrb[0].mxu0
      %1267 = vmatprep.mubr.f32.mxu0 0.0
      %1268 = vmatmul.mubr.f32.gmra.mrb[0].mxu0 %v290
      %v1269 = vpop.f32.mrb[0].mxu0
      %v1270 = vadd.f32 0.0, %v1269
      %v1271 = vpop.f32.mrb[0].mxu0
      %1272 = vmatprep.mubr.f32.mxu0 0.0
      %1273 = vmatmul.mubr.f32.gmra.mrb[0].mxu0 %v292
      %v1274 = vpop.f32.mrb[0].mxu0
      %v1275 = vadd.f32 0.0, %v1274
      %v1276 = vpop.f32.mrb[0].mxu0
      %1277 = vmatprep.mubr.f32.mxu0 0.0
      %1278 = vmatmul.mubr.f32.gmra.mrb[0].mxu0 %v294
      %v1279 = vpop.f32.mrb[0].mxu0
      %v1280 = vadd.f32 0.0, %v1279
      %v1281 = vpop.f32.mrb[0].mxu0
      %1282 = vmatprep.mubr.f32.mxu0 0.0
      %1283 = vmatmul.mubr.f32.gmra.mrb[0].mxu0 %v815
      %v1284 = vpop.f32.mrb[0].mxu0
      %v1285 = vadd.f32 0.0, %v1284
      %v1286 = vpop.f32.mrb[0].mxu0
      %1287 = vmatprep.mubr.f32.mxu0 0.0
      %1288 = vmatmul.mubr.f32.gmra.mrb[0].mxu0 %v1183
      %v1289 = vpop.f32.mrb[0].mxu0
      %v1290 = vadd.f32 0.0, %v1289
      %v1291 = vpop.f32.mrb[0].mxu0
      %1292 = vdwg.mxu0
      %v1293 = vadd.f32 %v1169, %v1255
      %v1294 = vadd.f32 %v1170, %v1260
      %v1295 = vadd.f32 %v1171, %v1265
      %v1296 = vadd.f32 %v1172, %v1270
      %v1297 = vadd.f32 %v1173, %v1275
      %v1298 = vadd.f32 %v1174, %v1280
      %v1299 = vadd.f32 %v1175, %v1285
      %v1300 = vadd.f32 %v1176, %v1290
      %v1301 = vrot.slane %v233, 2
      %v1302 = vrot.slane %v234, 2
      %v1303 = vsel %vm529, %v1301, %v1302
      %s1304 = scalar_lea.vmem %s1, 32
      %v1305 = vld [vmem:[%s1304] sm:$0xf]
      %v1306 = vsel %vm279, %v1303, 0
      %v1309 = vsel %vm296, %v1305, 0
      %1311 = vmatprep.subr.mxu0 0.0
      %1312 = vmatpush1.msra.mxu0 %v1309
      %1313 = vmatprep.subr.mxu0 0.0
      %1314 = vmatpush1.msra.mxu0 0.0
      %1315 = vmatprep.subr.mxu0 0.0
      %1316 = vmatpush1.msra.mxu0 0.0
      %1317 = vmatprep.subr.mxu0 0.0
      %1318 = vmatpush1.msra.mxu0 0.0
      %1319 = vmatprep.subr.mxu0 0.0
      %1320 = vmatpush1.msra.mxu0 0.0
      %1321 = vmatprep.subr.mxu0 0.0
      %1322 = vmatpush1.msra.mxu0 0.0
      %1323 = vmatprep.subr.mxu0 0.0
      %1324 = vmatpush1.msra.mxu0 0.0
      %1325 = vmatprep.subr.mxu0 0.0
      %1326 = vmatpush1.msra.mxu0 0.0
      %1327 = vmatprep.subr.mxu0 0.0
      %1328 = vmatpush1.msra.mxu0 0.0
      %1329 = vmatprep.subr.mxu0 0.0
      %1330 = vmatpush1.msra.mxu0 0.0
      %1331 = vmatprep.subr.mxu0 0.0
      %1332 = vmatpush1.msra.mxu0 0.0
      %1333 = vmatprep.subr.mxu0 0.0
      %1334 = vmatpush1.msra.mxu0 0.0
      %1335 = vmatprep.subr.mxu0 0.0
      %1336 = vmatpush1.msra.mxu0 0.0
      %1337 = vmatprep.subr.mxu0 0.0
      %1338 = vmatpush1.msra.mxu0 0.0
      %1339 = vmatprep.subr.mxu0 0.0
      %1340 = vmatpush1.msra.mxu0 0.0
      %1341 = vmatprep.subr.mxu0 0.0
      %1342 = vmatpush1.msra.mxu0 0.0
      %1343 = vmatprep.subr.mxu0 0.0
      %1344 = vmatpush1.msra.mxu0 0.0
      %1345 = vmatprep.subr.mxu0 0.0
      %1346 = vmatpush1.msra.mxu0 0.0
      %1347 = vmatprep.subr.mxu0 0.0
      %1348 = vmatpush1.msra.mxu0 0.0
      %1349 = vmatprep.subr.mxu0 0.0
      %1350 = vmatpush1.msra.mxu0 0.0
      %1351 = vmatprep.subr.mxu0 0.0
      %1352 = vmatpush1.msra.mxu0 0.0
      %1353 = vmatprep.subr.mxu0 0.0
      %1354 = vmatpush1.msra.mxu0 0.0
      %1355 = vmatprep.subr.mxu0 0.0
      %1356 = vmatpush1.msra.mxu0 0.0
      %1357 = vmatprep.subr.mxu0 0.0
      %1358 = vmatpush1.msra.mxu0 0.0
      %1359 = vmatprep.subr.mxu0 0.0
      %1360 = vmatpush1.msra.mxu0 0.0
      %1361 = vmatprep.subr.mxu0 0.0
      %1362 = vmatpush1.msra.mxu0 0.0
      %1363 = vmatprep.subr.mxu0 0.0
      %1364 = vmatpush1.msra.mxu0 0.0
      %1365 = vmatprep.subr.mxu0 0.0
      %1366 = vmatpush1.msra.mxu0 0.0
      %1367 = vmatprep.subr.mxu0 0.0
      %1368 = vmatpush1.msra.mxu0 0.0
      %1369 = vmatprep.subr.mxu0 0.0
      %1370 = vmatpush1.msra.mxu0 0.0
      %1371 = vmatprep.subr.mxu0 0.0
      %1372 = vmatpush1.msra.mxu0 0.0
      %1373 = vmatprep.subr.mxu0 0.0
      %1374 = vmatpush1.msra.mxu0 0.0
      %1375 = vmatprep.mubr.f32.mxu0 0.0
      %1376 = vmatmul.mubr.f32.gmra.mrb[0].mxu0 %v560
      %v1377 = vpop.f32.mrb[0].mxu0
      %v1378 = vadd.f32 0.0, %v1377
      %v1379 = vpop.f32.mrb[0].mxu0
      %1380 = vmatprep.mubr.f32.mxu0 0.0
      %1381 = vmatmul.mubr.f32.gmra.mrb[0].mxu0 %v562
      %v1382 = vpop.f32.mrb[0].mxu0
      %v1383 = vadd.f32 0.0, %v1382
      %v1384 = vpop.f32.mrb[0].mxu0
      %1385 = vmatprep.mubr.f32.mxu0 0.0
      %1386 = vmatmul.mubr.f32.gmra.mrb[0].mxu0 %v564
      %v1387 = vpop.f32.mrb[0].mxu0
      %v1388 = vadd.f32 0.0, %v1387
      %v1389 = vpop.f32.mrb[0].mxu0
      %1390 = vmatprep.mubr.f32.mxu0 0.0
      %1391 = vmatmul.mubr.f32.gmra.mrb[0].mxu0 %v566
      %v1392 = vpop.f32.mrb[0].mxu0
      %v1393 = vadd.f32 0.0, %v1392
      %v1394 = vpop.f32.mrb[0].mxu0
      %1395 = vmatprep.mubr.f32.mxu0 0.0
      %1396 = vmatmul.mubr.f32.gmra.mrb[0].mxu0 %v568
      %v1397 = vpop.f32.mrb[0].mxu0
      %v1398 = vadd.f32 0.0, %v1397
      %v1399 = vpop.f32.mrb[0].mxu0
      %1400 = vmatprep.mubr.f32.mxu0 0.0
      %1401 = vmatmul.mubr.f32.gmra.mrb[0].mxu0 %v570
      %v1402 = vpop.f32.mrb[0].mxu0
      %v1403 = vadd.f32 0.0, %v1402
      %v1404 = vpop.f32.mrb[0].mxu0
      %1405 = vmatprep.mubr.f32.mxu0 0.0
      %1406 = vmatmul.mubr.f32.gmra.mrb[0].mxu0 %v938
      %v1407 = vpop.f32.mrb[0].mxu0
      %v1408 = vadd.f32 0.0, %v1407
      %v1409 = vpop.f32.mrb[0].mxu0
      %1410 = vmatprep.mubr.f32.mxu0 0.0
      %1411 = vmatmul.mubr.f32.gmra.mrb[0].mxu0 %v1306
      %v1412 = vpop.f32.mrb[0].mxu0
      %v1413 = vadd.f32 0.0, %v1412
      %v1414 = vpop.f32.mrb[0].mxu0
      %1415 = vdwg.mxu0
      %v1416 = vadd.f32 %v1293, %v1378
      %v1417 = vadd.f32 %v1294, %v1383
      %v1418 = vadd.f32 %v1295, %v1388
      %v1419 = vadd.f32 %v1296, %v1393
      %v1420 = vadd.f32 %v1297, %v1398
      %v1421 = vadd.f32 %v1298, %v1403
      %v1422 = vadd.f32 %v1299, %v1408
      %v1423 = vadd.f32 %v1300, %v1413
      %vm1424 = vcmask 64512
      %1425 = vst.msk [vmem:[%s208] sm:$0xff] %vm1424, %v1416
      %1426 = vst.msk [vmem:[%s208 + $0x8] sm:$0xff] %vm1424, %v1417
      %1427 = vst.msk [vmem:[%s208 + $0x10] sm:$0xff] %vm1424, %v1418
      %1428 = vst.msk [vmem:[%s208 + $0x18] sm:$0xff] %vm1424, %v1419
      %1429 = vst.msk [vmem:[%s208 + $0x20] sm:$0xff] %vm1424, %v1420
      %1430 = vst.msk [vmem:[%s208 + $0x28] sm:$0xff] %vm1424, %v1421
      %1431 = vst.msk [vmem:[%s208 + $0x30] sm:$0xff] %vm1424, %v1422
      %1432 = vst.msk [vmem:[%s208 + $0x38] sm:$0xff] %vm1424, %v1423
      %v1433 = vsel %vm1424, %v1416, 0.0
      %v1434 = vsel %vm1424, %v1417, 0.0
      %v1435 = vadd.f32 %v1433, %v1434
      %v1436 = vsel %vm1424, %v1418, 0.0
      %v1437 = vadd.f32 %v1435, %v1436
      %v1438 = vsel %vm1424, %v1419, 0.0
      %v1439 = vadd.f32 %v1437, %v1438
      %v1440 = vsel %vm1424, %v1420, 0.0
      %v1441 = vadd.f32 %v1439, %v1440
      %v1442 = vsel %vm1424, %v1421, 0.0
      %v1443 = vadd.f32 %v1441, %v1442
      %v1444 = vsel %vm1424, %v1422, 0.0
      %v1445 = vadd.f32 %v1443, %v1444
      %v1446 = vsel %vm1424, %v1423, 0.0
      %v1447 = vadd.f32 %v1445, %v1446
      %v1448 = vrot.slane %v1447, 4
      %v1449 = vadd.f32 %v1447, %v1448
      %v1450 = vrot.slane %v1449, 2
      %v1451 = vadd.f32 %v1449, %v1450
      %v1452 = vrot.slane %v1451, 1
      %v1453 = vadd.f32 %v1451, %v1452
      %vm1454 = vcmask 57344
      %1455 = vst.msk [vmem:[%s211] sm:$0x1] %vm1454, %v1453
      %v1456 = vmul.f32 %v1416, %v1416
      %v1457 = vmul.f32 %v1417, %v1417
      %v1458 = vmul.f32 %v1418, %v1418
      %v1459 = vmul.f32 %v1419, %v1419
      %v1460 = vmul.f32 %v1420, %v1420
      %v1461 = vmul.f32 %v1421, %v1421
      %v1462 = vmul.f32 %v1422, %v1422
      %v1463 = vmul.f32 %v1423, %v1423
      %v1464 = vsel %vm1424, %v1456, 0.0
      %v1465 = vsel %vm1424, %v1457, 0.0
      %v1466 = vadd.f32 %v1464, %v1465
      %v1467 = vsel %vm1424, %v1458, 0.0
      %v1468 = vadd.f32 %v1466, %v1467
      %v1469 = vsel %vm1424, %v1459, 0.0
      %v1470 = vadd.f32 %v1468, %v1469
      %v1471 = vsel %vm1424, %v1460, 0.0
      %v1472 = vadd.f32 %v1470, %v1471
      %v1473 = vsel %vm1424, %v1461, 0.0
      %v1474 = vadd.f32 %v1472, %v1473
      %v1475 = vsel %vm1424, %v1462, 0.0
      %v1476 = vadd.f32 %v1474, %v1475
      %v1477 = vsel %vm1424, %v1463, 0.0
      %v1478 = vadd.f32 %v1476, %v1477
      %v1479 = vrot.slane %v1478, 4
      %v1480 = vadd.f32 %v1478, %v1479
      %v1481 = vrot.slane %v1480, 2
      %v1482 = vadd.f32 %v1480, %v1481
      %v1483 = vrot.slane %v1482, 1
      %v1484 = vadd.f32 %v1482, %v1483
      %1485 = vst.msk [vmem:[%s214] sm:$0x1] %vm1454, %v1484
      %p1486 = scmp.lt.s32.totalorder %s16, 1
      %s1487 = scalar_select %p1486, %s16, 1
      %s1488 = smul.addr %s1487, 8
      %s1489 = smul.addr %s1488, 8
      %s1490 = scalar_lea.vmem %s2, %s1489
      %p1491 = scmp.lt.s32.totalorder %s16, 1
      %s1492 = scalar_select %p1491, %s16, 1
      %s1493 = scalar_lea.vmem %s3, %s1492
      %p1494 = scmp.lt.s32.totalorder %s16, 1
      %s1495 = scalar_select %p1494, %s16, 1
      %s1496 = scalar_lea.vmem %s4, %s1495
      // Predicated region
      $region29: #{_lambda_.5} parent=27 // pred_check
        %p1497 = pneg %p81
      $region30: #{_lambda_.5} parent=27 // pred_check_branch
        %1499 = sbr.rel (%p1497) target = $region32
      $region31: #{_lambda_.5} parent=27 // pred_region
        _
      $region32: #{_lambda_.5} parent=27 // pred_fallthru
        _
      // Predicated region
      $region33: #{_lambda_.5} parent=27 // pred_check
        %p1500 = pneg %p107
      $region34: #{_lambda_.5} parent=27 // pred_check_branch
        %1502 = sbr.rel (%p1500) target = $region36
      $region35: #{_lambda_.5} parent=27 // pred_region
        _
      $region36: #{_lambda_.5} parent=27 // pred_fallthru
        _
      // Predicated region
      $region37: #{_lambda_.5} parent=27 // pred_check
        %p1503 = pneg %p133
      $region38: #{_lambda_.5} parent=27 // pred_check_branch
        %1505 = sbr.rel (%p1503) target = $region40
      $region39: #{_lambda_.5} parent=27 // pred_region
        _
      $region40: #{_lambda_.5} parent=27 // pred_fallthru
        _
    $region28: #{_lambda_.5} parent=5 // pred_fallthru
      _
    %p1506 = scmp.le.s32.totalorder 2, %s11
    // Predicated region
    $region41: #{_lambda_.5} parent=5 // pred_check
      %p1507 = pneg %p1506
    $region42: #{_lambda_.5} parent=5 // pred_check_branch
      %1509 = sbr.rel (%p1507) target = $region44
    $region43: #{_lambda_.5} parent=5 // pred_region
      %s1510 = ssub.s32 %s11, 2
      // Predicated region
      $region45: #{_lambda_.5} parent=43 // pred_check
        %p1511 = pneg %p87
      $region46: #{_lambda_.5} parent=43 // pred_check_branch
        %1513 = sbr.rel (%p1511) target = $region48
      $region47: #{_lambda_.5} parent=43 // pred_region
        %p1514 = scmp.lt.s32.totalorder %s17, 1
        %s1515 = scalar_select %p1514, %s17, 1
        %s1516 = smul.addr %s1515, 8
        %s1517 = smul.addr %s1516, 8
        %s1518 = scalar_lea.vmem %s2, %s1517
      $region48: #{_lambda_.5} parent=43 // pred_fallthru
        _
      // Predicated region
      $region49: #{_lambda_.5} parent=43 // pred_check
        %p1519 = pneg %p113
      $region50: #{_lambda_.5} parent=43 // pred_check_branch
        %1521 = sbr.rel (%p1519) target = $region52
      $region51: #{_lambda_.5} parent=43 // pred_region
        %p1522 = scmp.lt.s32.totalorder %s17, 1
        %s1523 = scalar_select %p1522, %s17, 1
        %s1524 = scalar_lea.vmem %s3, %s1523
      $region52: #{_lambda_.5} parent=43 // pred_fallthru
        _
      // Predicated region
      $region53: #{_lambda_.5} parent=43 // pred_check
        %p1525 = pneg %p139
      $region54: #{_lambda_.5} parent=43 // pred_check_branch
        %1527 = sbr.rel (%p1525) target = $region56
      $region55: #{_lambda_.5} parent=43 // pred_region
        %p1528 = scmp.lt.s32.totalorder %s17, 1
        %s1529 = scalar_select %p1528, %s17, 1
        %s1530 = scalar_lea.vmem %s4, %s1529
      $region56: #{_lambda_.5} parent=43 // pred_fallthru
        _
    $region44: #{_lambda_.5} parent=5 // pred_fallthru
      _
  $region6: #{_lambda_.5} parent=0 // loop_footer
    %s15 = sadd.s32 1, %s11
  $region7: #{_lambda_.5} parent=0 // loop_footer_branch
    %10 = sbr.rel target = $region3
  $region8: #{_lambda_.5} parent=0 // loop_exit
    _

// kernel: _lambda_.6
$region0: #{_lambda_.6}
  #allocation0 [shape = 'u32[]', space=smem, size = 0x4, offset = 0x4, fixed_abs, tag = 'smem constant byte address 0x4 - core index']
  #allocation1 [shape = 'u32[144,128]{1,0:T(1,128)}', space=vmem, size = 0x12000, scoped, tag = 'internal scratch']
  %s0 = inlined_call_operand.vmem [shape: f32[2,10,10,8], index: 0, kind: input, shape index: {}]
  %s1 = inlined_call_operand.vmem [shape: f32[1,8], index: 1, kind: input, shape index: {}]
  %s2 = inlined_call_operand.vmem [shape: f32[1,8], index: 2, kind: input, shape index: {}]
  %s3 = inlined_call_operand.vmem [shape: f32[9,8,8], index: 3, kind: input, shape index: {}]
  %s4 = inlined_call_operand.vmem [shape: f32[2,64,8], index: 4, kind: output, shape index: {0}]
  %s5 = inlined_call_operand.vmem [shape: f32[2,1,8], index: 5, kind: output, shape index: {1}]
  %s6 = inlined_call_operand.vmem [shape: f32[2,1,8], index: 6, kind: output, shape index: {2}]
  %7 = xla_tuple %s4, %s5, %s6
  %s8 = sld [smem:[#allocation0]]
  $region65: #{_lambda_.6} parent=0
    _
  %s10 = ssub.s32 1, %s8
  %s11 = scalar_select 0, %s10, %s8
  loop: start=0, step=1, limit=4
  $region2: #{_lambda_.6} parent=0 // loop_pre_header
    _
  $region3: #{_lambda_.6} parent=0 // loop_header
    %s13 = sphi 0, %s17
    %p14 = scmp.ge.s32.totalorder %s13, 4
    %s23 = sphi 0, %s25
    %s26 = sphi 0, %s23
    %s27 = sphi 0, %s26
    %s43 = sphi 0, %s27
    %s47 = sphi 0, %s47
    %s49 = sphi 0, %s47
    %s50 = sphi 0, %s49
    %s64 = sphi 0, %s50
    %s68 = sphi 0, %s68
    %s70 = sphi 0, %s68
    %s71 = sphi 0, %s70
    %s85 = sphi 0, %s71
    %s89 = sphi 0, %s89
    %s91 = sphi 0, %s89
    %s92 = sphi 0, %s91
    %s106 = sphi 0, %s92
    %s112 = sphi 0, %s114
    %s115 = sphi 0, %s112
    %s116 = sphi 0, %s115
    %s132 = sphi 0, %s116
    %s138 = sphi 0, %s140
    %s141 = sphi 0, %s138
    %s142 = sphi 0, %s141
    %s158 = sphi 0, %s142
    %s164 = sphi 0, %s166
    %s167 = sphi 0, %s164
    %s168 = sphi 0, %s167
    %s184 = sphi 0, %s168
  $region4: #{_lambda_.6} parent=0 // loop_header_branch
    %16 = sbr.rel (%p14) target = $region8
  $region5: #{_lambda_.6} parent=0 // loop_body
    %s18 = ssub.s32 %s13, 1
    %s19 = ssub.s32 %s13, 2
    %s20 = sadd.s32 %s13, 1
    %s21 = ssub.s32 %s13, %s20
    %p22 = scmp.eq.s32.totalorder %s21, 0
    %s24 = sadd.s32 %s23, 1
    %s25 = scalar_select %p22, %s23, %s24
    %p28 = pneg %p22
    %p29 = scmp.eq.s32.totalorder %s13, 1
    %p30 = por %p28, %p29
    %p31 = scmp.ne.s32.totalorder %s23, %s26
    %p32 = scmp.eq.s32.totalorder %s13, 0
    %p33 = por %p31, %p32
    %p34 = scmp.ne.s32.totalorder %s23, %s26
    %p35 = scmp.eq.s32.totalorder %s18, 1
    %p36 = por %p34, %p35
    %p37 = scmp.ne.s32.totalorder %s26, %s27
    %p38 = scmp.eq.s32.totalorder %s18, 0
    %p39 = por %p37, %p38
    %p40 = scmp.ne.s32.totalorder %s26, %s27
    %p41 = scmp.eq.s32.totalorder %s19, 1
    %p42 = por %p40, %p41
    %p44 = scmp.ne.s32.totalorder %s27, %s43
    %p45 = scmp.eq.s32.totalorder %s19, 0
    %p46 = por %p44, %p45
    %s48 = sadd.s32 %s47, 1
    %p51 = scmp.eq.s32.totalorder %s13, 1
    %p52 = scmp.ne.s32.totalorder %s47, %s49
    %p53 = scmp.eq.s32.totalorder %s13, 0
    %p54 = por %p52, %p53
    %p55 = scmp.ne.s32.totalorder %s47, %s49
    %p56 = scmp.eq.s32.totalorder %s18, 1
    %p57 = por %p55, %p56
    %p58 = scmp.ne.s32.totalorder %s49, %s50
    %p59 = scmp.eq.s32.totalorder %s18, 0
    %p60 = por %p58, %p59
    %p61 = scmp.ne.s32.totalorder %s49, %s50
    %p62 = scmp.eq.s32.totalorder %s19, 1
    %p63 = por %p61, %p62
    %p65 = scmp.ne.s32.totalorder %s50, %s64
    %p66 = scmp.eq.s32.totalorder %s19, 0
    %p67 = por %p65, %p66
    %s69 = sadd.s32 %s68, 1
    %p72 = scmp.eq.s32.totalorder %s13, 1
    %p73 = scmp.ne.s32.totalorder %s68, %s70
    %p74 = scmp.eq.s32.totalorder %s13, 0
    %p75 = por %p73, %p74
    %p76 = scmp.ne.s32.totalorder %s68, %s70
    %p77 = scmp.eq.s32.totalorder %s18, 1
    %p78 = por %p76, %p77
    %p79 = scmp.ne.s32.totalorder %s70, %s71
    %p80 = scmp.eq.s32.totalorder %s18, 0
    %p81 = por %p79, %p80
    %p82 = scmp.ne.s32.totalorder %s70, %s71
    %p83 = scmp.eq.s32.totalorder %s19, 1
    %p84 = por %p82, %p83
    %p86 = scmp.ne.s32.totalorder %s71, %s85
    %p87 = scmp.eq.s32.totalorder %s19, 0
    %p88 = por %p86, %p87
    %s90 = sadd.s32 %s89, 1
    %p93 = scmp.eq.s32.totalorder %s13, 1
    %p94 = scmp.ne.s32.totalorder %s89, %s91
    %p95 = scmp.eq.s32.totalorder %s13, 0
    %p96 = por %p94, %p95
    %p97 = scmp.ne.s32.totalorder %s89, %s91
    %p98 = scmp.eq.s32.totalorder %s18, 1
    %p99 = por %p97, %p98
    %p100 = scmp.ne.s32.totalorder %s91, %s92
    %p101 = scmp.eq.s32.totalorder %s18, 0
    %p102 = por %p100, %p101
    %p103 = scmp.ne.s32.totalorder %s91, %s92
    %p104 = scmp.eq.s32.totalorder %s19, 1
    %p105 = por %p103, %p104
    %p107 = scmp.ne.s32.totalorder %s92, %s106
    %p108 = scmp.eq.s32.totalorder %s19, 0
    %p109 = por %p107, %p108
    %s110 = ssub.s32 %s13, %s20
    %p111 = scmp.eq.s32.totalorder %s110, 0
    %s113 = sadd.s32 %s112, 1
    %s114 = scalar_select %p111, %s112, %s113
    %p117 = pneg %p111
    %p118 = scmp.eq.s32.totalorder %s13, 1
    %p119 = por %p117, %p118
    %p120 = scmp.ne.s32.totalorder %s112, %s115
    %p121 = scmp.eq.s32.totalorder %s13, 0
    %p122 = por %p120, %p121
    %p123 = scmp.ne.s32.totalorder %s112, %s115
    %p124 = scmp.eq.s32.totalorder %s18, 1
    %p125 = por %p123, %p124
    %p126 = scmp.ne.s32.totalorder %s115, %s116
    %p127 = scmp.eq.s32.totalorder %s18, 0
    %p128 = por %p126, %p127
    %p129 = scmp.ne.s32.totalorder %s115, %s116
    %p130 = scmp.eq.s32.totalorder %s19, 1
    %p131 = por %p129, %p130
    %p133 = scmp.ne.s32.totalorder %s116, %s132
    %p134 = scmp.eq.s32.totalorder %s19, 0
    %p135 = por %p133, %p134
    %s136 = ssub.s32 %s13, %s20
    %p137 = scmp.eq.s32.totalorder %s136, 0
    %s139 = sadd.s32 %s138, 1
    %s140 = scalar_select %p137, %s138, %s139
    %p143 = pneg %p137
    %p144 = scmp.eq.s32.totalorder %s13, 1
    %p145 = por %p143, %p144
    %p146 = scmp.ne.s32.totalorder %s138, %s141
    %p147 = scmp.eq.s32.totalorder %s13, 0
    %p148 = por %p146, %p147
    %p149 = scmp.ne.s32.totalorder %s138, %s141
    %p150 = scmp.eq.s32.totalorder %s18, 1
    %p151 = por %p149, %p150
    %p152 = scmp.ne.s32.totalorder %s141, %s142
    %p153 = scmp.eq.s32.totalorder %s18, 0
    %p154 = por %p152, %p153
    %p155 = scmp.ne.s32.totalorder %s141, %s142
    %p156 = scmp.eq.s32.totalorder %s19, 1
    %p157 = por %p155, %p156
    %p159 = scmp.ne.s32.totalorder %s142, %s158
    %p160 = scmp.eq.s32.totalorder %s19, 0
    %p161 = por %p159, %p160
    %s162 = ssub.s32 %s13, %s20
    %p163 = scmp.eq.s32.totalorder %s162, 0
    %s165 = sadd.s32 %s164, 1
    %s166 = scalar_select %p163, %s164, %s165
    %p169 = pneg %p163
    %p170 = scmp.eq.s32.totalorder %s13, 1
    %p171 = por %p169, %p170
    %p172 = scmp.ne.s32.totalorder %s164, %s167
    %p173 = scmp.eq.s32.totalorder %s13, 0
    %p174 = por %p172, %p173
    %p175 = scmp.ne.s32.totalorder %s164, %s167
    %p176 = scmp.eq.s32.totalorder %s18, 1
    %p177 = por %p175, %p176
    %p178 = scmp.ne.s32.totalorder %s167, %s168
    %p179 = scmp.eq.s32.totalorder %s18, 0
    %p180 = por %p178, %p179
    %p181 = scmp.ne.s32.totalorder %s167, %s168
    %p182 = scmp.eq.s32.totalorder %s19, 1
    %p183 = por %p181, %p182
    %p185 = scmp.ne.s32.totalorder %s168, %s184
    %p186 = scmp.eq.s32.totalorder %s19, 0
    %p187 = por %p185, %p186
    %p188 = scmp.le.s32.totalorder 1, %s13
    %p189 = scmp.lt.s32.totalorder %s13, 3
    %p190 = pnand %p188, %p189
    %p191 = pneg %p190
    // Predicated region
    $region9: #{_lambda_.6} parent=5 // pred_check
      _
    $region10: #{_lambda_.6} parent=5 // pred_check_branch
      %193 = sbr.rel (%p190) target = $region12
    $region11: #{_lambda_.6} parent=5 // pred_region
      %s194 = ssub.s32 %s13, 1
      // Predicated region
      $region13: #{_lambda_.6} parent=11 // pred_check
        %p195 = pneg %p60
      $region14: #{_lambda_.6} parent=11 // pred_check_branch
        %197 = sbr.rel (%p195) target = $region16
      $region15: #{_lambda_.6} parent=11 // pred_region
        _
      $region16: #{_lambda_.6} parent=11 // pred_fallthru
        _
      // Predicated region
      $region17: #{_lambda_.6} parent=11 // pred_check
        %p198 = pneg %p81
      $region18: #{_lambda_.6} parent=11 // pred_check_branch
        %200 = sbr.rel (%p198) target = $region20
      $region19: #{_lambda_.6} parent=11 // pred_region
        _
      $region20: #{_lambda_.6} parent=11 // pred_fallthru
        _
      // Predicated region
      $region21: #{_lambda_.6} parent=11 // pred_check
        %p201 = pneg %p102
      $region22: #{_lambda_.6} parent=11 // pred_check_branch
        %203 = sbr.rel (%p201) target = $region24
      $region23: #{_lambda_.6} parent=11 // pred_region
        _
      $region24: #{_lambda_.6} parent=11 // pred_fallthru
        _
    $region12: #{_lambda_.6} parent=5 // pred_fallthru
      _
    %p204 = scmp.lt.s32.totalorder %s13, 2
    // Predicated region
    $region25: #{_lambda_.6} parent=5 // pred_check
      %p205 = pneg %p204
    $region26: #{_lambda_.6} parent=5 // pred_check_branch
      %207 = sbr.rel (%p205) target = $region28
    $region27: #{_lambda_.6} parent=5 // pred_region
      // Predicated region
      $region29: #{_lambda_.6} parent=27 // pred_check
        %p208 = pneg %p33
      $region30: #{_lambda_.6} parent=27 // pred_check_branch
        %210 = sbr.rel (%p208) target = $region32
      $region31: #{_lambda_.6} parent=27 // pred_region
        %p211 = scmp.lt.s32.totalorder %s13, 1
        %s212 = scalar_select %p211, %s13, 1
        %s213 = smul.addr %s212, 20
        %s214 = smul.addr %s213, 8
        %s215 = scalar_lea.vmem %s0, %s214
      $region32: #{_lambda_.6} parent=27 // pred_fallthru
        _
    $region28: #{_lambda_.6} parent=5 // pred_fallthru
      _
    %p216 = scmp.le.s32.totalorder 1, %s13
    %p217 = scmp.lt.s32.totalorder %s13, 3
    %p218 = pnand %p216, %p217
    %p219 = pneg %p218
    // Predicated region
    $region33: #{_lambda_.6} parent=5 // pred_check
      _
    $region34: #{_lambda_.6} parent=5 // pred_check_branch
      %221 = sbr.rel (%p218) target = $region36
    $region35: #{_lambda_.6} parent=5 // pred_region
      %s222 = ssub.s32 %s13, 1
      %p223 = scmp.lt.s32.totalorder %s18, 1
      %s224 = scalar_select %p223, %s18, 1
      %s225 = smul.addr %s224, 20
      %s226 = smul.addr %s225, 8
      %s227 = scalar_lea.vmem %s0, %s226
      %p228 = pneg %p39
      %p229 = pneg %p36
      %p230 = pneg %p60
      %p231 = pneg %p57
      %p232 = pneg %p81
      %p233 = pneg %p78
      %p234 = pneg %p102
      %p235 = pneg %p99
      %p236 = pneg %p128
      %p237 = pneg %p125
      %p238 = scmp.lt.s32.totalorder %s18, 1
      %s239 = scalar_select %p238, %s18, 1
      %s240 = smul.addr %s239, 8
      %s241 = smul.addr %s240, 8
      %s242 = scalar_lea.vmem %s4, %s241
      %p243 = pneg %p154
      %p244 = pneg %p151
      %p245 = scmp.lt.s32.totalorder %s18, 1
      %s246 = scalar_select %p245, %s18, 1
      %s247 = scalar_lea.vmem %s5, %s246
      %p248 = pneg %p180
      %p249 = pneg %p177
      %p250 = scmp.lt.s32.totalorder %s18, 1
      %s251 = scalar_select %p250, %s18, 1
      %s252 = scalar_lea.vmem %s6, %s251
      %p253 = scmp.lt.s32.totalorder %s18, 1
      %s254 = scalar_select %p253, %s18, 1
      %s255 = smul.addr %s254, 20
      %s256 = smul.addr %s255, 8
      %s257 = scalar_lea.vmem %s0, %s256
      %p258 = scmp.lt.s32.totalorder %s18, 1
      %s259 = scalar_select %p258, %s18, 1
      %s260 = smul.addr %s259, 8
      %s261 = smul.addr %s260, 8
      %s262 = scalar_lea.vmem %s4, %s261
      %p263 = scmp.lt.s32.totalorder %s18, 1
      %s264 = scalar_select %p263, %s18, 1
      %s265 = scalar_lea.vmem %s5, %s264
      %p266 = scmp.lt.s32.totalorder %s18, 1
      %s267 = scalar_select %p266, %s18, 1
      %s268 = scalar_lea.vmem %s6, %s267
      %v269 = vld [vmem:[%s257] sm:$0xff]
      %v270 = vld [vmem:[%s257 + $0x8] sm:$0x3]
      %v271 = vld [vmem:[%s257 + $0x10] sm:$0xff]
      %v272 = vld [vmem:[%s257 + $0x18] sm:$0x3]
      %v273 = vld [vmem:[%s257 + $0x20] sm:$0xff]
      %v274 = vld [vmem:[%s257 + $0x28] sm:$0x3]
      %v275 = vld [vmem:[%s257 + $0x30] sm:$0xff]
      %v276 = vld [vmem:[%s257 + $0x38] sm:$0x3]
      %v277 = vld [vmem:[%s257 + $0x40] sm:$0xff]
      %v278 = vld [vmem:[%s257 + $0x48] sm:$0x3]
      %v279 = vld [vmem:[%s257 + $0x50] sm:$0xff]
      %v280 = vld [vmem:[%s257 + $0x58] sm:$0x3]
      %v281 = vld [vmem:[%s257 + $0x60] sm:$0xff]
      %v282 = vld [vmem:[%s257 + $0x68] sm:$0x3]
      %v283 = vld [vmem:[%s257 + $0x70] sm:$0xff]
      %v284 = vld [vmem:[%s257 + $0x78] sm:$0x3]
      %v285 = vld [vmem:[%s257 + $0x80] sm:$0xff]
      %v286 = vld [vmem:[%s257 + $0x88] sm:$0x3]
      %v287 = vld [vmem:[%s257 + $0x90] sm:$0xff]
      %v288 = vld [vmem:[%s257 + $0x98] sm:$0x3]
      %v289 = vld [vmem:[%s1] sm:$0x1]
      %v291 = vlaneseq
      %v292 = vshrl.u32 %v291, 7
      %v293 = vsub.s32 0, %v292
      %v294 = vrot.slane %v289, %v293
      %v296 = vmul.f32 %v269, %v294
      %v297 = vmul.f32 %v270, %v294
      %v298 = vmul.f32 %v271, %v294
      %v299 = vmul.f32 %v272, %v294
      %v300 = vmul.f32 %v273, %v294
      %v301 = vmul.f32 %v274, %v294
      %v302 = vmul.f32 %v275, %v294
      %v303 = vmul.f32 %v276, %v294
      %v304 = vmul.f32 %v277, %v294
      %v305 = vmul.f32 %v278, %v294
      %v306 = vmul.f32 %v279, %v294
      %v307 = vmul.f32 %v280, %v294
      %v308 = vmul.f32 %v281, %v294
      %v309 = vmul.f32 %v282, %v294
      %v310 = vmul.f32 %v283, %v294
      %v311 = vmul.f32 %v284, %v294
      %v312 = vmul.f32 %v285, %v294
      %v313 = vmul.f32 %v286, %v294
      %v314 = vmul.f32 %v287, %v294
      %v315 = vmul.f32 %v288, %v294
      %v316 = vld [vmem:[%s2] sm:$0x1]
      %v318 = vlaneseq
      %v319 = vshrl.u32 %v318, 7
      %v320 = vsub.s32 0, %v319
      %v321 = vrot.slane %v316, %v320
      %v323 = vadd.f32 %v296, %v321
      %v324 = vadd.f32 %v297, %v321
      %v325 = vadd.f32 %v298, %v321
      %v326 = vadd.f32 %v299, %v321
      %v327 = vadd.f32 %v300, %v321
      %v328 = vadd.f32 %v301, %v321
      %v329 = vadd.f32 %v302, %v321
      %v330 = vadd.f32 %v303, %v321
      %v331 = vadd.f32 %v304, %v321
      %v332 = vadd.f32 %v305, %v321
      %v333 = vadd.f32 %v306, %v321
      %v334 = vadd.f32 %v307, %v321
      %v335 = vadd.f32 %v308, %v321
      %v336 = vadd.f32 %v309, %v321
      %v337 = vadd.f32 %v310, %v321
      %v338 = vadd.f32 %v311, %v321
      %v339 = vadd.f32 %v312, %v321
      %v340 = vadd.f32 %v313, %v321
      %v341 = vadd.f32 %v314, %v321
      %v342 = vadd.f32 %v315, %v321
      %v343 = vmax.f32 %v323, 0.0
      %v344 = vmax.f32 %v324, 0.0
      %v345 = vmax.f32 %v325, 0.0
      %v346 = vmax.f32 %v326, 0.0
      %v347 = vmax.f32 %v327, 0.0
      %v348 = vmax.f32 %v328, 0.0
      %v349 = vmax.f32 %v329, 0.0
      %v350 = vmax.f32 %v330, 0.0
      %v351 = vmax.f32 %v331, 0.0
      %v352 = vmax.f32 %v332, 0.0
      %v353 = vmax.f32 %v333, 0.0
      %v354 = vmax.f32 %v334, 0.0
      %v355 = vmax.f32 %v335, 0.0
      %v356 = vmax.f32 %v336, 0.0
      %v357 = vmax.f32 %v337, 0.0
      %v358 = vmax.f32 %v338, 0.0
      %v359 = vmax.f32 %v339, 0.0
      %v360 = vmax.f32 %v340, 0.0
      %v361 = vmax.f32 %v341, 0.0
      %v362 = vmax.f32 %v342, 0.0
      %v363 = vlaneseq
      %v364 = vshrl.u32 %v363, 7
      %v365 = vadd.s32 %v364, 8
      %vm366 = vcmp.ge.s32.totalorder %v364, 1
      %vm367 = vcmp.ge.s32.totalorder %v365, 1
      %vm368 = vmand 0, %vm366
      %vm369 = vmand 0, %vm367
      %vm370 = vmand 1, %vm366
      %vm371 = vmand 1, %vm367
      %vm372 = vcmp.lt.s32.totalorder %v364, 9
      %vm373 = vcmp.lt.s32.totalorder %v365, 9
      %vm374 = vmand %vm368, %vm372
      %vm375 = vmand %vm369, %vm373
      %vm376 = vmand %vm370, %vm372
      %vm377 = vmand %vm371, %vm373
      %v378 = vsel %vm374, 1, 0
      %v379 = vsel %vm375, 1, 0
      %v380 = vsel %vm376, 1, 0
      %v381 = vsel %vm377, 1, 0
      %vm382 = vcmp.eq.s32.totalorder %v378, 1
      %vm383 = vcmp.eq.s32.totalorder %v379, 1
      %vm384 = vcmp.eq.s32.totalorder %v380, 1
      %vm385 = vcmp.eq.s32.totalorder %v381, 1
      %v386 = vsel %vm382, %v343, 0.0
      %v387 = vsel %vm383, %v344, 0.0
      %v388 = vsel %vm384, %v345, 0.0
      %v389 = vsel %vm385, %v346, 0.0
      %v390 = vsel %vm384, %v347, 0.0
      %v391 = vsel %vm385, %v348, 0.0
      %v392 = vsel %vm384, %v349, 0.0
      %v393 = vsel %vm385, %v350, 0.0
      %v394 = vsel %vm384, %v351, 0.0
      %v395 = vsel %vm385, %v352, 0.0
      %v396 = vsel %vm384, %v353, 0.0
      %v397 = vsel %vm385, %v354, 0.0
      %v398 = vsel %vm384, %v355, 0.0
      %v399 = vsel %vm385, %v356, 0.0
      %v400 = vsel %vm384, %v357, 0.0
      %v401 = vsel %vm385, %v358, 0.0
      %v402 = vsel %vm384, %v359, 0.0
      %v403 = vsel %vm385, %v360, 0.0
      %v404 = vsel %vm382, %v361, 0.0
      %v405 = vsel %vm383, %v362, 0.0
      %v406 = vld [vmem:[%s3] sm:$0xff]
      %vm423 = vcmask 1046528
      %v424 = vrot.slane %v386, 1
      %v425 = vrot.slane %v387, 1
      %v426 = vsel %vm423, %v424, %v425
      %v427 = vrot.slane %v388, 1
      %v428 = vrot.slane %v389, 1
      %v429 = vsel %vm423, %v427, %v428
      %v430 = vrot.slane %v390, 1
      %v431 = vrot.slane %v391, 1
      %v432 = vsel %vm423, %v430, %v431
      %v433 = vrot.slane %v392, 1
      %v434 = vrot.slane %v393, 1
      %v435 = vsel %vm423, %v433, %v434
      %v436 = vrot.slane %v394, 1
      %v437 = vrot.slane %v395, 1
      %v438 = vsel %vm423, %v436, %v437
      %v439 = vrot.slane %v396, 1
      %v440 = vrot.slane %v397, 1
      %v441 = vsel %vm423, %v439, %v440
      %v442 = vrot.slane %v398, 1
      %v443 = vrot.slane %v399, 1
      %v444 = vsel %vm423, %v442, %v443
      %v445 = vrot.slane %v400, 1
      %v446 = vrot.slane %v401, 1
      %v447 = vsel %vm423, %v445, %v446
      %s448 = scalar_lea.vmem %s3, 8
      %v449 = vld [vmem:[%s448] sm:$0xff]
      %vm450 = vcmask 64512
      %v451 = vsel %vm450, %v426, 0
      %v453 = vsel %vm450, %v429, 0
      %v455 = vsel %vm450, %v432, 0
      %v457 = vsel %vm450, %v435, 0
      %v459 = vsel %vm450, %v438, 0
      %v461 = vsel %vm450, %v441, 0
      %v463 = vsel %vm450, %v444, 0
      %v465 = vsel %vm450, %v447, 0
      %467 = vmatprep.subr.mxu0 0.0
      %468 = vmatpush1.msra.mxu0 %v449
      %469 = vmatprep.subr.mxu0 0.0
      %470 = vmatpush1.msra.mxu0 0.0
      %471 = vmatprep.subr.mxu0 0.0
      %472 = vmatpush1.msra.mxu0 0.0
      %473 = vmatprep.subr.mxu0 0.0
      %474 = vmatpush1.msra.mxu0 0.0
      %475 = vmatprep.subr.mxu0 0.0
      %476 = vmatpush1.msra.mxu0 0.0
      %477 = vmatprep.subr.mxu0 0.0
      %478 = vmatpush1.msra.mxu0 0.0
      %479 = vmatprep.subr.mxu0 0.0
      %480 = vmatpush1.msra.mxu0 0.0
      %481 = vmatprep.subr.mxu0 0.0
      %482 = vmatpush1.msra.mxu0 0.0
      %483 = vmatprep.subr.mxu0 0.0
      %484 = vmatpush1.msra.mxu0 0.0
      %485 = vmatprep.subr.mxu0 0.0
      %486 = vmatpush1.msra.mxu0 0.0
      %487 = vmatprep.subr.mxu0 0.0
      %488 = vmatpush1.msra.mxu0 0.0
      %489 = vmatprep.subr.mxu0 0.0
      %490 = vmatpush1.msra.mxu0 0.0
      %491 = vmatprep.subr.mxu0 0.0
      %492 = vmatpush1.msra.mxu0 0.0
      %493 = vmatprep.subr.mxu0 0.0
      %494 = vmatpush1.msra.mxu0 0.0
      %495 = vmatprep.subr.mxu0 0.0
      %496 = vmatpush1.msra.mxu0 0.0
      %497 = vmatprep.subr.mxu0 0.0
      %498 = vmatpush1.msra.mxu0 0.0
      %499 = vmatprep.subr.mxu0 0.0
      %500 = vmatpush1.msra.mxu0 0.0
      %501 = vmatprep.subr.mxu0 0.0
      %502 = vmatpush1.msra.mxu0 0.0
      %503 = vmatprep.subr.mxu0 0.0
      %504 = vmatpush1.msra.mxu0 0.0
      %505 = vmatprep.subr.mxu0 0.0
      %506 = vmatpush1.msra.mxu0 0.0
      %507 = vmatprep.subr.mxu0 0.0
      %508 = vmatpush1.msra.mxu0 0.0
      %509 = vmatprep.subr.mxu0 0.0
      %510 = vmatpush1.msra.mxu0 0.0
      %511 = vmatprep.subr.mxu0 0.0
      %512 = vmatpush1.msra.mxu0 0.0
      %513 = vmatprep.subr.mxu0 0.0
      %514 = vmatpush1.msra.mxu0 0.0
      %515 = vmatprep.subr.mxu0 0.0
      %516 = vmatpush1.msra.mxu0 0.0
      %517 = vmatprep.subr.mxu0 0.0
      %518 = vmatpush1.msra.mxu0 0.0
      %519 = vmatprep.subr.mxu0 0.0
      %520 = vmatpush1.msra.mxu0 0.0
      %521 = vmatprep.subr.mxu0 0.0
      %522 = vmatpush1.msra.mxu0 0.0
      %523 = vmatprep.subr.mxu0 0.0
      %524 = vmatpush1.msra.mxu0 0.0
      %525 = vmatprep.subr.mxu0 0.0
      %526 = vmatpush1.msra.mxu0 0.0
      %527 = vmatprep.subr.mxu0 0.0
      %528 = vmatpush1.msra.mxu0 0.0
      %529 = vmatprep.subr.mxu0 0.0
      %530 = vmatpush1.msra.mxu0 0.0
      %531 = vmatprep.mubr.f32.mxu0 0.0
      %532 = vmatmul.mubr.f32.gmra.mrb[0].mxu0 %v451
      %v533 = vpop.f32.mrb[0].mxu0
      %v534 = vadd.f32 0.0, %v533
      %v535 = vpop.f32.mrb[0].mxu0
      %536 = vmatprep.mubr.f32.mxu0 0.0
      %537 = vmatmul.mubr.f32.gmra.mrb[0].mxu0 %v453
      %v538 = vpop.f32.mrb[0].mxu0
      %v539 = vadd.f32 0.0, %v538
      %v540 = vpop.f32.mrb[0].mxu0
      %541 = vmatprep.mubr.f32.mxu0 0.0
      %542 = vmatmul.mubr.f32.gmra.mrb[0].mxu0 %v455
      %v543 = vpop.f32.mrb[0].mxu0
      %v544 = vadd.f32 0.0, %v543
      %v545 = vpop.f32.mrb[0].mxu0
      %546 = vmatprep.mubr.f32.mxu0 0.0
      %547 = vmatmul.mubr.f32.gmra.mrb[0].mxu0 %v457
      %v548 = vpop.f32.mrb[0].mxu0
      %v549 = vadd.f32 0.0, %v548
      %v550 = vpop.f32.mrb[0].mxu0
      %551 = vmatprep.mubr.f32.mxu0 0.0
      %552 = vmatmul.mubr.f32.gmra.mrb[0].mxu0 %v459
      %v553 = vpop.f32.mrb[0].mxu0
      %v554 = vadd.f32 0.0, %v553
      %v555 = vpop.f32.mrb[0].mxu0
      %556 = vmatprep.mubr.f32.mxu0 0.0
      %557 = vmatmul.mubr.f32.gmra.mrb[0].mxu0 %v461
      %v558 = vpop.f32.mrb[0].mxu0
      %v559 = vadd.f32 0.0, %v558
      %v560 = vpop.f32.mrb[0].mxu0
      %561 = vmatprep.mubr.f32.mxu0 0.0
      %562 = vmatmul.mubr.f32.gmra.mrb[0].mxu0 %v463
      %v563 = vpop.f32.mrb[0].mxu0
      %v564 = vadd.f32 0.0, %v563
      %v565 = vpop.f32.mrb[0].mxu0
      %566 = vmatprep.mubr.f32.mxu0 0.0
      %567 = vmatmul.mubr.f32.gmra.mrb[0].mxu0 %v465
      %v568 = vpop.f32.mrb[0].mxu0
      %v569 = vadd.f32 0.0, %v568
      %v570 = vpop.f32.mrb[0].mxu0
      %571 = vdwg.mxu0
      %v572 = vsel %vm450, %v386, 0
      %v574 = vsel %vm450, %v388, 0
      %v576 = vsel %vm450, %v390, 0
      %v578 = vsel %vm450, %v392, 0
      %v580 = vsel %vm450, %v394, 0
      %v582 = vsel %vm450, %v396, 0
      %v584 = vsel %vm450, %v398, 0
      %v586 = vsel %vm450, %v400, 0
      %588 = vmatprep.subr.mxu0 0.0
      %589 = vmatpush1.msra.mxu0 %v406
      %590 = vmatprep.subr.mxu0 0.0
      %591 = vmatpush1.msra.mxu0 0.0
      %592 = vmatprep.subr.mxu0 0.0
      %593 = vmatpush1.msra.mxu0 0.0
      %594 = vmatprep.subr.mxu0 0.0
      %595 = vmatpush1.msra.mxu0 0.0
      %596 = vmatprep.subr.mxu0 0.0
      %597 = vmatpush1.msra.mxu0 0.0
      %598 = vmatprep.subr.mxu0 0.0
      %599 = vmatpush1.msra.mxu0 0.0
      %600 = vmatprep.subr.mxu0 0.0
      %601 = vmatpush1.msra.mxu0 0.0
      %602 = vmatprep.subr.mxu0 0.0
      %603 = vmatpush1.msra.mxu0 0.0
      %604 = vmatprep.subr.mxu0 0.0
      %605 = vmatpush1.msra.mxu0 0.0
      %606 = vmatprep.subr.mxu0 0.0
      %607 = vmatpush1.msra.mxu0 0.0
      %608 = vmatprep.subr.mxu0 0.0
      %609 = vmatpush1.msra.mxu0 0.0
      %610 = vmatprep.subr.mxu0 0.0
      %611 = vmatpush1.msra.mxu0 0.0
      %612 = vmatprep.subr.mxu0 0.0
      %613 = vmatpush1.msra.mxu0 0.0
      %614 = vmatprep.subr.mxu0 0.0
      %615 = vmatpush1.msra.mxu0 0.0
      %616 = vmatprep.subr.mxu0 0.0
      %617 = vmatpush1.msra.mxu0 0.0
      %618 = vmatprep.subr.mxu0 0.0
      %619 = vmatpush1.msra.mxu0 0.0
      %620 = vmatprep.subr.mxu0 0.0
      %621 = vmatpush1.msra.mxu0 0.0
      %622 = vmatprep.subr.mxu0 0.0
      %623 = vmatpush1.msra.mxu0 0.0
      %624 = vmatprep.subr.mxu0 0.0
      %625 = vmatpush1.msra.mxu0 0.0
      %626 = vmatprep.subr.mxu0 0.0
      %627 = vmatpush1.msra.mxu0 0.0
      %628 = vmatprep.subr.mxu0 0.0
      %629 = vmatpush1.msra.mxu0 0.0
      %630 = vmatprep.subr.mxu0 0.0
      %631 = vmatpush1.msra.mxu0 0.0
      %632 = vmatprep.subr.mxu0 0.0
      %633 = vmatpush1.msra.mxu0 0.0
      %634 = vmatprep.subr.mxu0 0.0
      %635 = vmatpush1.msra.mxu0 0.0
      %636 = vmatprep.subr.mxu0 0.0
      %637 = vmatpush1.msra.mxu0 0.0
      %638 = vmatprep.subr.mxu0 0.0
      %639 = vmatpush1.msra.mxu0 0.0
      %640 = vmatprep.subr.mxu0 0.0
      %641 = vmatpush1.msra.mxu0 0.0
      %642 = vmatprep.subr.mxu0 0.0
      %643 = vmatpush1.msra.mxu0 0.0
      %644 = vmatprep.subr.mxu0 0.0
      %645 = vmatpush1.msra.mxu0 0.0
      %646 = vmatprep.subr.mxu0 0.0
      %647 = vmatpush1.msra.mxu0 0.0
      %648 = vmatprep.subr.mxu0 0.0
      %649 = vmatpush1.msra.mxu0 0.0
      %650 = vmatprep.subr.mxu0 0.0
      %651 = vmatpush1.msra.mxu0 0.0
      %652 = vmatprep.mubr.f32.mxu0 0.0
      %653 = vmatmul.mubr.f32.gmra.mrb[0].mxu0 %v572
      %v654 = vpop.f32.mrb[0].mxu0
      %v655 = vadd.f32 %v534, %v654
      %v656 = vpop.f32.mrb[0].mxu0
      %657 = vmatprep.mubr.f32.mxu0 0.0
      %658 = vmatmul.mubr.f32.gmra.mrb[0].mxu0 %v574
      %v659 = vpop.f32.mrb[0].mxu0
      %v660 = vadd.f32 %v539, %v659
      %v661 = vpop.f32.mrb[0].mxu0
      %662 = vmatprep.mubr.f32.mxu0 0.0
      %663 = vmatmul.mubr.f32.gmra.mrb[0].mxu0 %v576
      %v664 = vpop.f32.mrb[0].mxu0
      %v665 = vadd.f32 %v544, %v664
      %v666 = vpop.f32.mrb[0].mxu0
      %667 = vmatprep.mubr.f32.mxu0 0.0
      %668 = vmatmul.mubr.f32.gmra.mrb[0].mxu0 %v578
      %v669 = vpop.f32.mrb[0].mxu0
      %v670 = vadd.f32 %v549, %v669
      %v671 = vpop.f32.mrb[0].mxu0
      %672 = vmatprep.mubr.f32.mxu0 0.0
      %673 = vmatmul.mubr.f32.gmra.mrb[0].mxu0 %v580
      %v674 = vpop.f32.mrb[0].mxu0
      %v675 = vadd.f32 %v554, %v674
      %v676 = vpop.f32.mrb[0].mxu0
      %677 = vmatprep.mubr.f32.mxu0 0.0
      %678 = vmatmul.mubr.f32.gmra.mrb[0].mxu0 %v582
      %v679 = vpop.f32.mrb[0].mxu0
      %v680 = vadd.f32 %v559, %v679
      %v681 = vpop.f32.mrb[0].mxu0
      %682 = vmatprep.mubr.f32.mxu0 0.0
      %683 = vmatmul.mubr.f32.gmra.mrb[0].mxu0 %v584
      %v684 = vpop.f32.mrb[0].mxu0
      %v685 = vadd.f32 %v564, %v684
      %v686 = vpop.f32.mrb[0].mxu0
      %687 = vmatprep.mubr.f32.mxu0 0.0
      %688 = vmatmul.mubr.f32.gmra.mrb[0].mxu0 %v586
      %v689 = vpop.f32.mrb[0].mxu0
      %v690 = vadd.f32 %v569, %v689
      %v691 = vpop.f32.mrb[0].mxu0
      %692 = vdwg.mxu0
      %vm693 = vcmask 1045504
      %v694 = vrot.slane %v386, 2
      %v695 = vrot.slane %v387, 2
      %v696 = vsel %vm693, %v694, %v695
      %v697 = vrot.slane %v388, 2
      %v698 = vrot.slane %v389, 2
      %v699 = vsel %vm693, %v697, %v698
      %v700 = vrot.slane %v390, 2
      %v701 = vrot.slane %v391, 2
      %v702 = vsel %vm693, %v700, %v701
      %v703 = vrot.slane %v392, 2
      %v704 = vrot.slane %v393, 2
      %v705 = vsel %vm693, %v703, %v704
      %v706 = vrot.slane %v394, 2
      %v707 = vrot.slane %v395, 2
      %v708 = vsel %vm693, %v706, %v707
      %v709 = vrot.slane %v396, 2
      %v710 = vrot.slane %v397, 2
      %v711 = vsel %vm693, %v709, %v710
      %v712 = vrot.slane %v398, 2
      %v713 = vrot.slane %v399, 2
      %v714 = vsel %vm693, %v712, %v713
      %v715 = vrot.slane %v400, 2
      %v716 = vrot.slane %v401, 2
      %v717 = vsel %vm693, %v715, %v716
      %s718 = scalar_lea.vmem %s3, 16
      %v719 = vld [vmem:[%s718] sm:$0xff]
      %v720 = vsel %vm450, %v696, 0
      %v722 = vsel %vm450, %v699, 0
      %v724 = vsel %vm450, %v702, 0
      %v726 = vsel %vm450, %v705, 0
      %v728 = vsel %vm450, %v708, 0
      %v730 = vsel %vm450, %v711, 0
      %v732 = vsel %vm450, %v714, 0
      %v734 = vsel %vm450, %v717, 0
      %736 = vmatprep.subr.mxu0 0.0
      %737 = vmatpush1.msra.mxu0 %v719
      %738 = vmatprep.subr.mxu0 0.0
      %739 = vmatpush1.msra.mxu0 0.0
      %740 = vmatprep.subr.mxu0 0.0
      %741 = vmatpush1.msra.mxu0 0.0
      %742 = vmatprep.subr.mxu0 0.0
      %743 = vmatpush1.msra.mxu0 0.0
      %744 = vmatprep.subr.mxu0 0.0
      %745 = vmatpush1.msra.mxu0 0.0
      %746 = vmatprep.subr.mxu0 0.0
      %747 = vmatpush1.msra.mxu0 0.0
      %748 = vmatprep.subr.mxu0 0.0
      %749 = vmatpush1.msra.mxu0 0.0
      %750 = vmatprep.subr.mxu0 0.0
      %751 = vmatpush1.msra.mxu0 0.0
      %752 = vmatprep.subr.mxu0 0.0
      %753 = vmatpush1.msra.mxu0 0.0
      %754 = vmatprep.subr.mxu0 0.0
      %755 = vmatpush1.msra.mxu0 0.0
      %756 = vmatprep.subr.mxu0 0.0
      %757 = vmatpush1.msra.mxu0 0.0
      %758 = vmatprep.subr.mxu0 0.0
      %759 = vmatpush1.msra.mxu0 0.0
      %760 = vmatprep.subr.mxu0 0.0
      %761 = vmatpush1.msra.mxu0 0.0
      %762 = vmatprep.subr.mxu0 0.0
      %763 = vmatpush1.msra.mxu0 0.0
      %764 = vmatprep.subr.mxu0 0.0
      %765 = vmatpush1.msra.mxu0 0.0
      %766 = vmatprep.subr.mxu0 0.0
      %767 = vmatpush1.msra.mxu0 0.0
      %768 = vmatprep.subr.mxu0 0.0
      %769 = vmatpush1.msra.mxu0 0.0
      %770 = vmatprep.subr.mxu0 0.0
      %771 = vmatpush1.msra.mxu0 0.0
      %772 = vmatprep.subr.mxu0 0.0
      %773 = vmatpush1.msra.mxu0 0.0
      %774 = vmatprep.subr.mxu0 0.0
      %775 = vmatpush1.msra.mxu0 0.0
      %776 = vmatprep.subr.mxu0 0.0
      %777 = vmatpush1.msra.mxu0 0.0
      %778 = vmatprep.subr.mxu0 0.0
      %779 = vmatpush1.msra.mxu0 0.0
      %780 = vmatprep.subr.mxu0 0.0
      %781 = vmatpush1.msra.mxu0 0.0
      %782 = vmatprep.subr.mxu0 0.0
      %783 = vmatpush1.msra.mxu0 0.0
      %784 = vmatprep.subr.mxu0 0.0
      %785 = vmatpush1.msra.mxu0 0.0
      %786 = vmatprep.subr.mxu0 0.0
      %787 = vmatpush1.msra.mxu0 0.0
      %788 = vmatprep.subr.mxu0 0.0
      %789 = vmatpush1.msra.mxu0 0.0
      %790 = vmatprep.subr.mxu0 0.0
      %791 = vmatpush1.msra.mxu0 0.0
      %792 = vmatprep.subr.mxu0 0.0
      %793 = vmatpush1.msra.mxu0 0.0
      %794 = vmatprep.subr.mxu0 0.0
      %795 = vmatpush1.msra.mxu0 0.0
      %796 = vmatprep.subr.mxu0 0.0
      %797 = vmatpush1.msra.mxu0 0.0
      %798 = vmatprep.subr.mxu0 0.0
      %799 = vmatpush1.msra.mxu0 0.0
      %800 = vmatprep.mubr.f32.mxu0 0.0
      %801 = vmatmul.mubr.f32.gmra.mrb[0].mxu0 %v720
      %v802 = vpop.f32.mrb[0].mxu0
      %v803 = vadd.f32 0.0, %v802
      %v804 = vpop.f32.mrb[0].mxu0
      %805 = vmatprep.mubr.f32.mxu0 0.0
      %806 = vmatmul.mubr.f32.gmra.mrb[0].mxu0 %v722
      %v807 = vpop.f32.mrb[0].mxu0
      %v808 = vadd.f32 0.0, %v807
      %v809 = vpop.f32.mrb[0].mxu0
      %810 = vmatprep.mubr.f32.mxu0 0.0
      %811 = vmatmul.mubr.f32.gmra.mrb[0].mxu0 %v724
      %v812 = vpop.f32.mrb[0].mxu0
      %v813 = vadd.f32 0.0, %v812
      %v814 = vpop.f32.mrb[0].mxu0
      %815 = vmatprep.mubr.f32.mxu0 0.0
      %816 = vmatmul.mubr.f32.gmra.mrb[0].mxu0 %v726
      %v817 = vpop.f32.mrb[0].mxu0
      %v818 = vadd.f32 0.0, %v817
      %v819 = vpop.f32.mrb[0].mxu0
      %820 = vmatprep.mubr.f32.mxu0 0.0
      %821 = vmatmul.mubr.f32.gmra.mrb[0].mxu0 %v728
      %v822 = vpop.f32.mrb[0].mxu0
      %v823 = vadd.f32 0.0, %v822
      %v824 = vpop.f32.mrb[0].mxu0
      %825 = vmatprep.mubr.f32.mxu0 0.0
      %826 = vmatmul.mubr.f32.gmra.mrb[0].mxu0 %v730
      %v827 = vpop.f32.mrb[0].mxu0
      %v828 = vadd.f32 0.0, %v827
      %v829 = vpop.f32.mrb[0].mxu0
      %830 = vmatprep.mubr.f32.mxu0 0.0
      %831 = vmatmul.mubr.f32.gmra.mrb[0].mxu0 %v732
      %v832 = vpop.f32.mrb[0].mxu0
      %v833 = vadd.f32 0.0, %v832
      %v834 = vpop.f32.mrb[0].mxu0
      %835 = vmatprep.mubr.f32.mxu0 0.0
      %836 = vmatmul.mubr.f32.gmra.mrb[0].mxu0 %v734
      %v837 = vpop.f32.mrb[0].mxu0
      %v838 = vadd.f32 0.0, %v837
      %v839 = vpop.f32.mrb[0].mxu0
      %840 = vdwg.mxu0
      %v841 = vadd.f32 %v655, %v803
      %v842 = vadd.f32 %v660, %v808
      %v843 = vadd.f32 %v665, %v813
      %v844 = vadd.f32 %v670, %v818
      %v845 = vadd.f32 %v675, %v823
      %v846 = vadd.f32 %v680, %v828
      %v847 = vadd.f32 %v685, %v833
      %v848 = vadd.f32 %v690, %v838
      %s849 = scalar_lea.vmem %s3, 24
      %v850 = vld [vmem:[%s849] sm:$0xff]
      %v852 = vsel %vm450, %v402, 0
      %854 = vmatprep.subr.mxu0 0.0
      %855 = vmatpush1.msra.mxu0 %v850
      %856 = vmatprep.subr.mxu0 0.0
      %857 = vmatpush1.msra.mxu0 0.0
      %858 = vmatprep.subr.mxu0 0.0
      %859 = vmatpush1.msra.mxu0 0.0
      %860 = vmatprep.subr.mxu0 0.0
      %861 = vmatpush1.msra.mxu0 0.0
      %862 = vmatprep.subr.mxu0 0.0
      %863 = vmatpush1.msra.mxu0 0.0
      %864 = vmatprep.subr.mxu0 0.0
      %865 = vmatpush1.msra.mxu0 0.0
      %866 = vmatprep.subr.mxu0 0.0
      %867 = vmatpush1.msra.mxu0 0.0
      %868 = vmatprep.subr.mxu0 0.0
      %869 = vmatpush1.msra.mxu0 0.0
      %870 = vmatprep.subr.mxu0 0.0
      %871 = vmatpush1.msra.mxu0 0.0
      %872 = vmatprep.subr.mxu0 0.0
      %873 = vmatpush1.msra.mxu0 0.0
      %874 = vmatprep.subr.mxu0 0.0
      %875 = vmatpush1.msra.mxu0 0.0
      %876 = vmatprep.subr.mxu0 0.0
      %877 = vmatpush1.msra.mxu0 0.0
      %878 = vmatprep.subr.mxu0 0.0
      %879 = vmatpush1.msra.mxu0 0.0
      %880 = vmatprep.subr.mxu0 0.0
      %881 = vmatpush1.msra.mxu0 0.0
      %882 = vmatprep.subr.mxu0 0.0
      %883 = vmatpush1.msra.mxu0 0.0
      %884 = vmatprep.subr.mxu0 0.0
      %885 = vmatpush1.msra.mxu0 0.0
      %886 = vmatprep.subr.mxu0 0.0
      %887 = vmatpush1.msra.mxu0 0.0
      %888 = vmatprep.subr.mxu0 0.0
      %889 = vmatpush1.msra.mxu0 0.0
      %890 = vmatprep.subr.mxu0 0.0
      %891 = vmatpush1.msra.mxu0 0.0
      %892 = vmatprep.subr.mxu0 0.0
      %893 = vmatpush1.msra.mxu0 0.0
      %894 = vmatprep.subr.mxu0 0.0
      %895 = vmatpush1.msra.mxu0 0.0
      %896 = vmatprep.subr.mxu0 0.0
      %897 = vmatpush1.msra.mxu0 0.0
      %898 = vmatprep.subr.mxu0 0.0
      %899 = vmatpush1.msra.mxu0 0.0
      %900 = vmatprep.subr.mxu0 0.0
      %901 = vmatpush1.msra.mxu0 0.0
      %902 = vmatprep.subr.mxu0 0.0
      %903 = vmatpush1.msra.mxu0 0.0
      %904 = vmatprep.subr.mxu0 0.0
      %905 = vmatpush1.msra.mxu0 0.0
      %906 = vmatprep.subr.mxu0 0.0
      %907 = vmatpush1.msra.mxu0 0.0
      %908 = vmatprep.subr.mxu0 0.0
      %909 = vmatpush1.msra.mxu0 0.0
      %910 = vmatprep.subr.mxu0 0.0
      %911 = vmatpush1.msra.mxu0 0.0
      %912 = vmatprep.subr.mxu0 0.0
      %913 = vmatpush1.msra.mxu0 0.0
      %914 = vmatprep.subr.mxu0 0.0
      %915 = vmatpush1.msra.mxu0 0.0
      %916 = vmatprep.subr.mxu0 0.0
      %917 = vmatpush1.msra.mxu0 0.0
      %918 = vmatprep.mubr.f32.mxu0 0.0
      %919 = vmatmul.mubr.f32.gmra.mrb[0].mxu0 %v574
      %v920 = vpop.f32.mrb[0].mxu0
      %v921 = vadd.f32 0.0, %v920
      %v922 = vpop.f32.mrb[0].mxu0
      %923 = vmatprep.mubr.f32.mxu0 0.0
      %924 = vmatmul.mubr.f32.gmra.mrb[0].mxu0 %v576
      %v925 = vpop.f32.mrb[0].mxu0
      %v926 = vadd.f32 0.0, %v925
      %v927 = vpop.f32.mrb[0].mxu0
      %928 = vmatprep.mubr.f32.mxu0 0.0
      %929 = vmatmul.mubr.f32.gmra.mrb[0].mxu0 %v578
      %v930 = vpop.f32.mrb[0].mxu0
      %v931 = vadd.f32 0.0, %v930
      %v932 = vpop.f32.mrb[0].mxu0
      %933 = vmatprep.mubr.f32.mxu0 0.0
      %934 = vmatmul.mubr.f32.gmra.mrb[0].mxu0 %v580
      %v935 = vpop.f32.mrb[0].mxu0
      %v936 = vadd.f32 0.0, %v935
      %v937 = vpop.f32.mrb[0].mxu0
      %938 = vmatprep.mubr.f32.mxu0 0.0
      %939 = vmatmul.mubr.f32.gmra.mrb[0].mxu0 %v582
      %v940 = vpop.f32.mrb[0].mxu0
      %v941 = vadd.f32 0.0, %v940
      %v942 = vpop.f32.mrb[0].mxu0
      %943 = vmatprep.mubr.f32.mxu0 0.0
      %944 = vmatmul.mubr.f32.gmra.mrb[0].mxu0 %v584
      %v945 = vpop.f32.mrb[0].mxu0
      %v946 = vadd.f32 0.0, %v945
      %v947 = vpop.f32.mrb[0].mxu0
      %948 = vmatprep.mubr.f32.mxu0 0.0
      %949 = vmatmul.mubr.f32.gmra.mrb[0].mxu0 %v586
      %v950 = vpop.f32.mrb[0].mxu0
      %v951 = vadd.f32 0.0, %v950
      %v952 = vpop.f32.mrb[0].mxu0
      %953 = vmatprep.mubr.f32.mxu0 0.0
      %954 = vmatmul.mubr.f32.gmra.mrb[0].mxu0 %v852
      %v955 = vpop.f32.mrb[0].mxu0
      %v956 = vadd.f32 0.0, %v955
      %v957 = vpop.f32.mrb[0].mxu0
      %958 = vdwg.mxu0
      %v959 = vadd.f32 %v841, %v921
      %v960 = vadd.f32 %v842, %v926
      %v961 = vadd.f32 %v843, %v931
      %v962 = vadd.f32 %v844, %v936
      %v963 = vadd.f32 %v845, %v941
      %v964 = vadd.f32 %v846, %v946
      %v965 = vadd.f32 %v847, %v951
      %v966 = vadd.f32 %v848, %v956
      %v968 = vrot.slane %v402, 1
      %v969 = vrot.slane %v403, 1
      %v970 = vsel %vm423, %v968, %v969
      %s971 = scalar_lea.vmem %s3, 32
      %v972 = vld [vmem:[%s971] sm:$0xff]
      %v973 = vsel %vm450, %v970, 0
      %975 = vmatprep.subr.mxu0 0.0
      %976 = vmatpush1.msra.mxu0 %v972
      %977 = vmatprep.subr.mxu0 0.0
      %978 = vmatpush1.msra.mxu0 0.0
      %979 = vmatprep.subr.mxu0 0.0
      %980 = vmatpush1.msra.mxu0 0.0
      %981 = vmatprep.subr.mxu0 0.0
      %982 = vmatpush1.msra.mxu0 0.0
      %983 = vmatprep.subr.mxu0 0.0
      %984 = vmatpush1.msra.mxu0 0.0
      %985 = vmatprep.subr.mxu0 0.0
      %986 = vmatpush1.msra.mxu0 0.0
      %987 = vmatprep.subr.mxu0 0.0
      %988 = vmatpush1.msra.mxu0 0.0
      %989 = vmatprep.subr.mxu0 0.0
      %990 = vmatpush1.msra.mxu0 0.0
      %991 = vmatprep.subr.mxu0 0.0
      %992 = vmatpush1.msra.mxu0 0.0
      %993 = vmatprep.subr.mxu0 0.0
      %994 = vmatpush1.msra.mxu0 0.0
      %995 = vmatprep.subr.mxu0 0.0
      %996 = vmatpush1.msra.mxu0 0.0
      %997 = vmatprep.subr.mxu0 0.0
      %998 = vmatpush1.msra.mxu0 0.0
      %999 = vmatprep.subr.mxu0 0.0
      %1000 = vmatpush1.msra.mxu0 0.0
      %1001 = vmatprep.subr.mxu0 0.0
      %1002 = vmatpush1.msra.mxu0 0.0
      %1003 = vmatprep.subr.mxu0 0.0
      %1004 = vmatpush1.msra.mxu0 0.0
      %1005 = vmatprep.subr.mxu0 0.0
      %1006 = vmatpush1.msra.mxu0 0.0
      %1007 = vmatprep.subr.mxu0 0.0
      %1008 = vmatpush1.msra.mxu0 0.0
      %1009 = vmatprep.subr.mxu0 0.0
      %1010 = vmatpush1.msra.mxu0 0.0
      %1011 = vmatprep.subr.mxu0 0.0
      %1012 = vmatpush1.msra.mxu0 0.0
      %1013 = vmatprep.subr.mxu0 0.0
      %1014 = vmatpush1.msra.mxu0 0.0
      %1015 = vmatprep.subr.mxu0 0.0
      %1016 = vmatpush1.msra.mxu0 0.0
      %1017 = vmatprep.subr.mxu0 0.0
      %1018 = vmatpush1.msra.mxu0 0.0
      %1019 = vmatprep.subr.mxu0 0.0
      %1020 = vmatpush1.msra.mxu0 0.0
      %1021 = vmatprep.subr.mxu0 0.0
      %1022 = vmatpush1.msra.mxu0 0.0
      %1023 = vmatprep.subr.mxu0 0.0
      %1024 = vmatpush1.msra.mxu0 0.0
      %1025 = vmatprep.subr.mxu0 0.0
      %1026 = vmatpush1.msra.mxu0 0.0
      %1027 = vmatprep.subr.mxu0 0.0
      %1028 = vmatpush1.msra.mxu0 0.0
      %1029 = vmatprep.subr.mxu0 0.0
      %1030 = vmatpush1.msra.mxu0 0.0
      %1031 = vmatprep.subr.mxu0 0.0
      %1032 = vmatpush1.msra.mxu0 0.0
      %1033 = vmatprep.subr.mxu0 0.0
      %1034 = vmatpush1.msra.mxu0 0.0
      %1035 = vmatprep.subr.mxu0 0.0
      %1036 = vmatpush1.msra.mxu0 0.0
      %1037 = vmatprep.subr.mxu0 0.0
      %1038 = vmatpush1.msra.mxu0 0.0
      %1039 = vmatprep.mubr.f32.mxu0 0.0
      %1040 = vmatmul.mubr.f32.gmra.mrb[0].mxu0 %v453
      %v1041 = vpop.f32.mrb[0].mxu0
      %v1042 = vadd.f32 0.0, %v1041
      %v1043 = vpop.f32.mrb[0].mxu0
      %1044 = vmatprep.mubr.f32.mxu0 0.0
      %1045 = vmatmul.mubr.f32.gmra.mrb[0].mxu0 %v455
      %v1046 = vpop.f32.mrb[0].mxu0
      %v1047 = vadd.f32 0.0, %v1046
      %v1048 = vpop.f32.mrb[0].mxu0
      %1049 = vmatprep.mubr.f32.mxu0 0.0
      %1050 = vmatmul.mubr.f32.gmra.mrb[0].mxu0 %v457
      %v1051 = vpop.f32.mrb[0].mxu0
      %v1052 = vadd.f32 0.0, %v1051
      %v1053 = vpop.f32.mrb[0].mxu0
      %1054 = vmatprep.mubr.f32.mxu0 0.0
      %1055 = vmatmul.mubr.f32.gmra.mrb[0].mxu0 %v459
      %v1056 = vpop.f32.mrb[0].mxu0
      %v1057 = vadd.f32 0.0, %v1056
      %v1058 = vpop.f32.mrb[0].mxu0
      %1059 = vmatprep.mubr.f32.mxu0 0.0
      %1060 = vmatmul.mubr.f32.gmra.mrb[0].mxu0 %v461
      %v1061 = vpop.f32.mrb[0].mxu0
      %v1062 = vadd.f32 0.0, %v1061
      %v1063 = vpop.f32.mrb[0].mxu0
      %1064 = vmatprep.mubr.f32.mxu0 0.0
      %1065 = vmatmul.mubr.f32.gmra.mrb[0].mxu0 %v463
      %v1066 = vpop.f32.mrb[0].mxu0
      %v1067 = vadd.f32 0.0, %v1066
      %v1068 = vpop.f32.mrb[0].mxu0
      %1069 = vmatprep.mubr.f32.mxu0 0.0
      %1070 = vmatmul.mubr.f32.gmra.mrb[0].mxu0 %v465
      %v1071 = vpop.f32.mrb[0].mxu0
      %v1072 = vadd.f32 0.0, %v1071
      %v1073 = vpop.f32.mrb[0].mxu0
      %1074 = vmatprep.mubr.f32.mxu0 0.0
      %1075 = vmatmul.mubr.f32.gmra.mrb[0].mxu0 %v973
      %v1076 = vpop.f32.mrb[0].mxu0
      %v1077 = vadd.f32 0.0, %v1076
      %v1078 = vpop.f32.mrb[0].mxu0
      %1079 = vdwg.mxu0
      %v1080 = vadd.f32 %v959, %v1042
      %v1081 = vadd.f32 %v960, %v1047
      %v1082 = vadd.f32 %v961, %v1052
      %v1083 = vadd.f32 %v962, %v1057
      %v1084 = vadd.f32 %v963, %v1062
      %v1085 = vadd.f32 %v964, %v1067
      %v1086 = vadd.f32 %v965, %v1072
      %v1087 = vadd.f32 %v966, %v1077
      %v1088 = vrot.slane %v402, 2
      %v1089 = vrot.slane %v403, 2
      %v1090 = vsel %vm693, %v1088, %v1089
      %s1091 = scalar_lea.vmem %s3, 40
      %v1092 = vld [vmem:[%s1091] sm:$0xff]
      %v1093 = vsel %vm450, %v1090, 0
      %1095 = vmatprep.subr.mxu0 0.0
      %1096 = vmatpush1.msra.mxu0 %v1092
      %1097 = vmatprep.subr.mxu0 0.0
      %1098 = vmatpush1.msra.mxu0 0.0
      %1099 = vmatprep.subr.mxu0 0.0
      %1100 = vmatpush1.msra.mxu0 0.0
      %1101 = vmatprep.subr.mxu0 0.0
      %1102 = vmatpush1.msra.mxu0 0.0
      %1103 = vmatprep.subr.mxu0 0.0
      %1104 = vmatpush1.msra.mxu0 0.0
      %1105 = vmatprep.subr.mxu0 0.0
      %1106 = vmatpush1.msra.mxu0 0.0
      %1107 = vmatprep.subr.mxu0 0.0
      %1108 = vmatpush1.msra.mxu0 0.0
      %1109 = vmatprep.subr.mxu0 0.0
      %1110 = vmatpush1.msra.mxu0 0.0
      %1111 = vmatprep.subr.mxu0 0.0
      %1112 = vmatpush1.msra.mxu0 0.0
      %1113 = vmatprep.subr.mxu0 0.0
      %1114 = vmatpush1.msra.mxu0 0.0
      %1115 = vmatprep.subr.mxu0 0.0
      %1116 = vmatpush1.msra.mxu0 0.0
      %1117 = vmatprep.subr.mxu0 0.0
      %1118 = vmatpush1.msra.mxu0 0.0
      %1119 = vmatprep.subr.mxu0 0.0
      %1120 = vmatpush1.msra.mxu0 0.0
      %1121 = vmatprep.subr.mxu0 0.0
      %1122 = vmatpush1.msra.mxu0 0.0
      %1123 = vmatprep.subr.mxu0 0.0
      %1124 = vmatpush1.msra.mxu0 0.0
      %1125 = vmatprep.subr.mxu0 0.0
      %1126 = vmatpush1.msra.mxu0 0.0
      %1127 = vmatprep.subr.mxu0 0.0
      %1128 = vmatpush1.msra.mxu0 0.0
      %1129 = vmatprep.subr.mxu0 0.0
      %1130 = vmatpush1.msra.mxu0 0.0
      %1131 = vmatprep.subr.mxu0 0.0
      %1132 = vmatpush1.msra.mxu0 0.0
      %1133 = vmatprep.subr.mxu0 0.0
      %1134 = vmatpush1.msra.mxu0 0.0
      %1135 = vmatprep.subr.mxu0 0.0
      %1136 = vmatpush1.msra.mxu0 0.0
      %1137 = vmatprep.subr.mxu0 0.0
      %1138 = vmatpush1.msra.mxu0 0.0
      %1139 = vmatprep.subr.mxu0 0.0
      %1140 = vmatpush1.msra.mxu0 0.0
      %1141 = vmatprep.subr.mxu0 0.0
      %1142 = vmatpush1.msra.mxu0 0.0
      %1143 = vmatprep.subr.mxu0 0.0
      %1144 = vmatpush1.msra.mxu0 0.0
      %1145 = vmatprep.subr.mxu0 0.0
      %1146 = vmatpush1.msra.mxu0 0.0
      %1147 = vmatprep.subr.mxu0 0.0
      %1148 = vmatpush1.msra.mxu0 0.0
      %1149 = vmatprep.subr.mxu0 0.0
      %1150 = vmatpush1.msra.mxu0 0.0
      %1151 = vmatprep.subr.mxu0 0.0
      %1152 = vmatpush1.msra.mxu0 0.0
      %1153 = vmatprep.subr.mxu0 0.0
      %1154 = vmatpush1.msra.mxu0 0.0
      %1155 = vmatprep.subr.mxu0 0.0
      %1156 = vmatpush1.msra.mxu0 0.0
      %1157 = vmatprep.subr.mxu0 0.0
      %1158 = vmatpush1.msra.mxu0 0.0
      %1159 = vmatprep.mubr.f32.mxu0 0.0
      %1160 = vmatmul.mubr.f32.gmra.mrb[0].mxu0 %v722
      %v1161 = vpop.f32.mrb[0].mxu0
      %v1162 = vadd.f32 0.0, %v1161
      %v1163 = vpop.f32.mrb[0].mxu0
      %1164 = vmatprep.mubr.f32.mxu0 0.0
      %1165 = vmatmul.mubr.f32.gmra.mrb[0].mxu0 %v724
      %v1166 = vpop.f32.mrb[0].mxu0
      %v1167 = vadd.f32 0.0, %v1166
      %v1168 = vpop.f32.mrb[0].mxu0
      %1169 = vmatprep.mubr.f32.mxu0 0.0
      %1170 = vmatmul.mubr.f32.gmra.mrb[0].mxu0 %v726
      %v1171 = vpop.f32.mrb[0].mxu0
      %v1172 = vadd.f32 0.0, %v1171
      %v1173 = vpop.f32.mrb[0].mxu0
      %1174 = vmatprep.mubr.f32.mxu0 0.0
      %1175 = vmatmul.mubr.f32.gmra.mrb[0].mxu0 %v728
      %v1176 = vpop.f32.mrb[0].mxu0
      %v1177 = vadd.f32 0.0, %v1176
      %v1178 = vpop.f32.mrb[0].mxu0
      %1179 = vmatprep.mubr.f32.mxu0 0.0
      %1180 = vmatmul.mubr.f32.gmra.mrb[0].mxu0 %v730
      %v1181 = vpop.f32.mrb[0].mxu0
      %v1182 = vadd.f32 0.0, %v1181
      %v1183 = vpop.f32.mrb[0].mxu0
      %1184 = vmatprep.mubr.f32.mxu0 0.0
      %1185 = vmatmul.mubr.f32.gmra.mrb[0].mxu0 %v732
      %v1186 = vpop.f32.mrb[0].mxu0
      %v1187 = vadd.f32 0.0, %v1186
      %v1188 = vpop.f32.mrb[0].mxu0
      %1189 = vmatprep.mubr.f32.mxu0 0.0
      %1190 = vmatmul.mubr.f32.gmra.mrb[0].mxu0 %v734
      %v1191 = vpop.f32.mrb[0].mxu0
      %v1192 = vadd.f32 0.0, %v1191
      %v1193 = vpop.f32.mrb[0].mxu0
      %1194 = vmatprep.mubr.f32.mxu0 0.0
      %1195 = vmatmul.mubr.f32.gmra.mrb[0].mxu0 %v1093
      %v1196 = vpop.f32.mrb[0].mxu0
      %v1197 = vadd.f32 0.0, %v1196
      %v1198 = vpop.f32.mrb[0].mxu0
      %1199 = vdwg.mxu0
      %v1200 = vadd.f32 %v1080, %v1162
      %v1201 = vadd.f32 %v1081, %v1167
      %v1202 = vadd.f32 %v1082, %v1172
      %v1203 = vadd.f32 %v1083, %v1177
      %v1204 = vadd.f32 %v1084, %v1182
      %v1205 = vadd.f32 %v1085, %v1187
      %v1206 = vadd.f32 %v1086, %v1192
      %v1207 = vadd.f32 %v1087, %v1197
      %s1208 = scalar_lea.vmem %s3, 48
      %v1209 = vld [vmem:[%s1208] sm:$0xff]
      %v1211 = vsel %vm450, %v404, 0
      %1213 = vmatprep.subr.mxu0 0.0
      %1214 = vmatpush1.msra.mxu0 %v1209
      %1215 = vmatprep.subr.mxu0 0.0
      %1216 = vmatpush1.msra.mxu0 0.0
      %1217 = vmatprep.subr.mxu0 0.0
      %1218 = vmatpush1.msra.mxu0 0.0
      %1219 = vmatprep.subr.mxu0 0.0
      %1220 = vmatpush1.msra.mxu0 0.0
      %1221 = vmatprep.subr.mxu0 0.0
      %1222 = vmatpush1.msra.mxu0 0.0
      %1223 = vmatprep.subr.mxu0 0.0
      %1224 = vmatpush1.msra.mxu0 0.0
      %1225 = vmatprep.subr.mxu0 0.0
      %1226 = vmatpush1.msra.mxu0 0.0
      %1227 = vmatprep.subr.mxu0 0.0
      %1228 = vmatpush1.msra.mxu0 0.0
      %1229 = vmatprep.subr.mxu0 0.0
      %1230 = vmatpush1.msra.mxu0 0.0
      %1231 = vmatprep.subr.mxu0 0.0
      %1232 = vmatpush1.msra.mxu0 0.0
      %1233 = vmatprep.subr.mxu0 0.0
      %1234 = vmatpush1.msra.mxu0 0.0
      %1235 = vmatprep.subr.mxu0 0.0
      %1236 = vmatpush1.msra.mxu0 0.0
      %1237 = vmatprep.subr.mxu0 0.0
      %1238 = vmatpush1.msra.mxu0 0.0
      %1239 = vmatprep.subr.mxu0 0.0
      %1240 = vmatpush1.msra.mxu0 0.0
      %1241 = vmatprep.subr.mxu0 0.0
      %1242 = vmatpush1.msra.mxu0 0.0
      %1243 = vmatprep.subr.mxu0 0.0
      %1244 = vmatpush1.msra.mxu0 0.0
      %1245 = vmatprep.subr.mxu0 0.0
      %1246 = vmatpush1.msra.mxu0 0.0
      %1247 = vmatprep.subr.mxu0 0.0
      %1248 = vmatpush1.msra.mxu0 0.0
      %1249 = vmatprep.subr.mxu0 0.0
      %1250 = vmatpush1.msra.mxu0 0.0
      %1251 = vmatprep.subr.mxu0 0.0
      %1252 = vmatpush1.msra.mxu0 0.0
      %1253 = vmatprep.subr.mxu0 0.0
      %1254 = vmatpush1.msra.mxu0 0.0
      %1255 = vmatprep.subr.mxu0 0.0
      %1256 = vmatpush1.msra.mxu0 0.0
      %1257 = vmatprep.subr.mxu0 0.0
      %1258 = vmatpush1.msra.mxu0 0.0
      %1259 = vmatprep.subr.mxu0 0.0
      %1260 = vmatpush1.msra.mxu0 0.0
      %1261 = vmatprep.subr.mxu0 0.0
      %1262 = vmatpush1.msra.mxu0 0.0
      %1263 = vmatprep.subr.mxu0 0.0
      %1264 = vmatpush1.msra.mxu0 0.0
      %1265 = vmatprep.subr.mxu0 0.0
      %1266 = vmatpush1.msra.mxu0 0.0
      %1267 = vmatprep.subr.mxu0 0.0
      %1268 = vmatpush1.msra.mxu0 0.0
      %1269 = vmatprep.subr.mxu0 0.0
      %1270 = vmatpush1.msra.mxu0 0.0
      %1271 = vmatprep.subr.mxu0 0.0
      %1272 = vmatpush1.msra.mxu0 0.0
      %1273 = vmatprep.subr.mxu0 0.0
      %1274 = vmatpush1.msra.mxu0 0.0
      %1275 = vmatprep.subr.mxu0 0.0
      %1276 = vmatpush1.msra.mxu0 0.0
      %1277 = vmatprep.mubr.f32.mxu0 0.0
      %1278 = vmatmul.mubr.f32.gmra.mrb[0].mxu0 %v576
      %v1279 = vpop.f32.mrb[0].mxu0
      %v1280 = vadd.f32 0.0, %v1279
      %v1281 = vpop.f32.mrb[0].mxu0
      %1282 = vmatprep.mubr.f32.mxu0 0.0
      %1283 = vmatmul.mubr.f32.gmra.mrb[0].mxu0 %v578
      %v1284 = vpop.f32.mrb[0].mxu0
      %v1285 = vadd.f32 0.0, %v1284
      %v1286 = vpop.f32.mrb[0].mxu0
      %1287 = vmatprep.mubr.f32.mxu0 0.0
      %1288 = vmatmul.mubr.f32.gmra.mrb[0].mxu0 %v580
      %v1289 = vpop.f32.mrb[0].mxu0
      %v1290 = vadd.f32 0.0, %v1289
      %v1291 = vpop.f32.mrb[0].mxu0
      %1292 = vmatprep.mubr.f32.mxu0 0.0
      %1293 = vmatmul.mubr.f32.gmra.mrb[0].mxu0 %v582
      %v1294 = vpop.f32.mrb[0].mxu0
      %v1295 = vadd.f32 0.0, %v1294
      %v1296 = vpop.f32.mrb[0].mxu0
      %1297 = vmatprep.mubr.f32.mxu0 0.0
      %1298 = vmatmul.mubr.f32.gmra.mrb[0].mxu0 %v584
      %v1299 = vpop.f32.mrb[0].mxu0
      %v1300 = vadd.f32 0.0, %v1299
      %v1301 = vpop.f32.mrb[0].mxu0
      %1302 = vmatprep.mubr.f32.mxu0 0.0
      %1303 = vmatmul.mubr.f32.gmra.mrb[0].mxu0 %v586
      %v1304 = vpop.f32.mrb[0].mxu0
      %v1305 = vadd.f32 0.0, %v1304
      %v1306 = vpop.f32.mrb[0].mxu0
      %1307 = vmatprep.mubr.f32.mxu0 0.0
      %1308 = vmatmul.mubr.f32.gmra.mrb[0].mxu0 %v852
      %v1309 = vpop.f32.mrb[0].mxu0
      %v1310 = vadd.f32 0.0, %v1309
      %v1311 = vpop.f32.mrb[0].mxu0
      %1312 = vmatprep.mubr.f32.mxu0 0.0
      %1313 = vmatmul.mubr.f32.gmra.mrb[0].mxu0 %v1211
      %v1314 = vpop.f32.mrb[0].mxu0
      %v1315 = vadd.f32 0.0, %v1314
      %v1316 = vpop.f32.mrb[0].mxu0
      %1317 = vdwg.mxu0
      %v1318 = vadd.f32 %v1200, %v1280
      %v1319 = vadd.f32 %v1201, %v1285
      %v1320 = vadd.f32 %v1202, %v1290
      %v1321 = vadd.f32 %v1203, %v1295
      %v1322 = vadd.f32 %v1204, %v1300
      %v1323 = vadd.f32 %v1205, %v1305
      %v1324 = vadd.f32 %v1206, %v1310
      %v1325 = vadd.f32 %v1207, %v1315
      %v1327 = vrot.slane %v404, 1
      %v1328 = vrot.slane %v405, 1
      %v1329 = vsel %vm423, %v1327, %v1328
      %s1330 = scalar_lea.vmem %s3, 56
      %v1331 = vld [vmem:[%s1330] sm:$0xff]
      %v1332 = vsel %vm450, %v1329, 0
      %1334 = vmatprep.subr.mxu0 0.0
      %1335 = vmatpush1.msra.mxu0 %v1331
      %1336 = vmatprep.subr.mxu0 0.0
      %1337 = vmatpush1.msra.mxu0 0.0
      %1338 = vmatprep.subr.mxu0 0.0
      %1339 = vmatpush1.msra.mxu0 0.0
      %1340 = vmatprep.subr.mxu0 0.0
      %1341 = vmatpush1.msra.mxu0 0.0
      %1342 = vmatprep.subr.mxu0 0.0
      %1343 = vmatpush1.msra.mxu0 0.0
      %1344 = vmatprep.subr.mxu0 0.0
      %1345 = vmatpush1.msra.mxu0 0.0
      %1346 = vmatprep.subr.mxu0 0.0
      %1347 = vmatpush1.msra.mxu0 0.0
      %1348 = vmatprep.subr.mxu0 0.0
      %1349 = vmatpush1.msra.mxu0 0.0
      %1350 = vmatprep.subr.mxu0 0.0
      %1351 = vmatpush1.msra.mxu0 0.0
      %1352 = vmatprep.subr.mxu0 0.0
      %1353 = vmatpush1.msra.mxu0 0.0
      %1354 = vmatprep.subr.mxu0 0.0
      %1355 = vmatpush1.msra.mxu0 0.0
      %1356 = vmatprep.subr.mxu0 0.0
      %1357 = vmatpush1.msra.mxu0 0.0
      %1358 = vmatprep.subr.mxu0 0.0
      %1359 = vmatpush1.msra.mxu0 0.0
      %1360 = vmatprep.subr.mxu0 0.0
      %1361 = vmatpush1.msra.mxu0 0.0
      %1362 = vmatprep.subr.mxu0 0.0
      %1363 = vmatpush1.msra.mxu0 0.0
      %1364 = vmatprep.subr.mxu0 0.0
      %1365 = vmatpush1.msra.mxu0 0.0
      %1366 = vmatprep.subr.mxu0 0.0
      %1367 = vmatpush1.msra.mxu0 0.0
      %1368 = vmatprep.subr.mxu0 0.0
      %1369 = vmatpush1.msra.mxu0 0.0
      %1370 = vmatprep.subr.mxu0 0.0
      %1371 = vmatpush1.msra.mxu0 0.0
      %1372 = vmatprep.subr.mxu0 0.0
      %1373 = vmatpush1.msra.mxu0 0.0
      %1374 = vmatprep.subr.mxu0 0.0
      %1375 = vmatpush1.msra.mxu0 0.0
      %1376 = vmatprep.subr.mxu0 0.0
      %1377 = vmatpush1.msra.mxu0 0.0
      %1378 = vmatprep.subr.mxu0 0.0
      %1379 = vmatpush1.msra.mxu0 0.0
      %1380 = vmatprep.subr.mxu0 0.0
      %1381 = vmatpush1.msra.mxu0 0.0
      %1382 = vmatprep.subr.mxu0 0.0
      %1383 = vmatpush1.msra.mxu0 0.0
      %1384 = vmatprep.subr.mxu0 0.0
      %1385 = vmatpush1.msra.mxu0 0.0
      %1386 = vmatprep.subr.mxu0 0.0
      %1387 = vmatpush1.msra.mxu0 0.0
      %1388 = vmatprep.subr.mxu0 0.0
      %1389 = vmatpush1.msra.mxu0 0.0
      %1390 = vmatprep.subr.mxu0 0.0
      %1391 = vmatpush1.msra.mxu0 0.0
      %1392 = vmatprep.subr.mxu0 0.0
      %1393 = vmatpush1.msra.mxu0 0.0
      %1394 = vmatprep.subr.mxu0 0.0
      %1395 = vmatpush1.msra.mxu0 0.0
      %1396 = vmatprep.subr.mxu0 0.0
      %1397 = vmatpush1.msra.mxu0 0.0
      %1398 = vmatprep.mubr.f32.mxu0 0.0
      %1399 = vmatmul.mubr.f32.gmra.mrb[0].mxu0 %v455
      %v1400 = vpop.f32.mrb[0].mxu0
      %v1401 = vadd.f32 0.0, %v1400
      %v1402 = vpop.f32.mrb[0].mxu0
      %1403 = vmatprep.mubr.f32.mxu0 0.0
      %1404 = vmatmul.mubr.f32.gmra.mrb[0].mxu0 %v457
      %v1405 = vpop.f32.mrb[0].mxu0
      %v1406 = vadd.f32 0.0, %v1405
      %v1407 = vpop.f32.mrb[0].mxu0
      %1408 = vmatprep.mubr.f32.mxu0 0.0
      %1409 = vmatmul.mubr.f32.gmra.mrb[0].mxu0 %v459
      %v1410 = vpop.f32.mrb[0].mxu0
      %v1411 = vadd.f32 0.0, %v1410
      %v1412 = vpop.f32.mrb[0].mxu0
      %1413 = vmatprep.mubr.f32.mxu0 0.0
      %1414 = vmatmul.mubr.f32.gmra.mrb[0].mxu0 %v461
      %v1415 = vpop.f32.mrb[0].mxu0
      %v1416 = vadd.f32 0.0, %v1415
      %v1417 = vpop.f32.mrb[0].mxu0
      %1418 = vmatprep.mubr.f32.mxu0 0.0
      %1419 = vmatmul.mubr.f32.gmra.mrb[0].mxu0 %v463
      %v1420 = vpop.f32.mrb[0].mxu0
      %v1421 = vadd.f32 0.0, %v1420
      %v1422 = vpop.f32.mrb[0].mxu0
      %1423 = vmatprep.mubr.f32.mxu0 0.0
      %1424 = vmatmul.mubr.f32.gmra.mrb[0].mxu0 %v465
      %v1425 = vpop.f32.mrb[0].mxu0
      %v1426 = vadd.f32 0.0, %v1425
      %v1427 = vpop.f32.mrb[0].mxu0
      %1428 = vmatprep.mubr.f32.mxu0 0.0
      %1429 = vmatmul.mubr.f32.gmra.mrb[0].mxu0 %v973
      %v1430 = vpop.f32.mrb[0].mxu0
      %v1431 = vadd.f32 0.0, %v1430
      %v1432 = vpop.f32.mrb[0].mxu0
      %1433 = vmatprep.mubr.f32.mxu0 0.0
      %1434 = vmatmul.mubr.f32.gmra.mrb[0].mxu0 %v1332
      %v1435 = vpop.f32.mrb[0].mxu0
      %v1436 = vadd.f32 0.0, %v1435
      %v1437 = vpop.f32.mrb[0].mxu0
      %1438 = vdwg.mxu0
      %v1439 = vadd.f32 %v1318, %v1401
      %v1440 = vadd.f32 %v1319, %v1406
      %v1441 = vadd.f32 %v1320, %v1411
      %v1442 = vadd.f32 %v1321, %v1416
      %v1443 = vadd.f32 %v1322, %v1421
      %v1444 = vadd.f32 %v1323, %v1426
      %v1445 = vadd.f32 %v1324, %v1431
      %v1446 = vadd.f32 %v1325, %v1436
      %v1447 = vrot.slane %v404, 2
      %v1448 = vrot.slane %v405, 2
      %v1449 = vsel %vm693, %v1447, %v1448
      %s1450 = scalar_lea.vmem %s3, 64
      %v1451 = vld [vmem:[%s1450] sm:$0xff]
      %v1452 = vsel %vm450, %v1449, 0
      %1454 = vmatprep.subr.mxu0 0.0
      %1455 = vmatpush1.msra.mxu0 %v1451
      %1456 = vmatprep.subr.mxu0 0.0
      %1457 = vmatpush1.msra.mxu0 0.0
      %1458 = vmatprep.subr.mxu0 0.0
      %1459 = vmatpush1.msra.mxu0 0.0
      %1460 = vmatprep.subr.mxu0 0.0
      %1461 = vmatpush1.msra.mxu0 0.0
      %1462 = vmatprep.subr.mxu0 0.0
      %1463 = vmatpush1.msra.mxu0 0.0
      %1464 = vmatprep.subr.mxu0 0.0
      %1465 = vmatpush1.msra.mxu0 0.0
      %1466 = vmatprep.subr.mxu0 0.0
      %1467 = vmatpush1.msra.mxu0 0.0
      %1468 = vmatprep.subr.mxu0 0.0
      %1469 = vmatpush1.msra.mxu0 0.0
      %1470 = vmatprep.subr.mxu0 0.0
      %1471 = vmatpush1.msra.mxu0 0.0
      %1472 = vmatprep.subr.mxu0 0.0
      %1473 = vmatpush1.msra.mxu0 0.0
      %1474 = vmatprep.subr.mxu0 0.0
      %1475 = vmatpush1.msra.mxu0 0.0
      %1476 = vmatprep.subr.mxu0 0.0
      %1477 = vmatpush1.msra.mxu0 0.0
      %1478 = vmatprep.subr.mxu0 0.0
      %1479 = vmatpush1.msra.mxu0 0.0
      %1480 = vmatprep.subr.mxu0 0.0
      %1481 = vmatpush1.msra.mxu0 0.0
      %1482 = vmatprep.subr.mxu0 0.0
      %1483 = vmatpush1.msra.mxu0 0.0
      %1484 = vmatprep.subr.mxu0 0.0
      %1485 = vmatpush1.msra.mxu0 0.0
      %1486 = vmatprep.subr.mxu0 0.0
      %1487 = vmatpush1.msra.mxu0 0.0
      %1488 = vmatprep.subr.mxu0 0.0
      %1489 = vmatpush1.msra.mxu0 0.0
      %1490 = vmatprep.subr.mxu0 0.0
      %1491 = vmatpush1.msra.mxu0 0.0
      %1492 = vmatprep.subr.mxu0 0.0
      %1493 = vmatpush1.msra.mxu0 0.0
      %1494 = vmatprep.subr.mxu0 0.0
      %1495 = vmatpush1.msra.mxu0 0.0
      %1496 = vmatprep.subr.mxu0 0.0
      %1497 = vmatpush1.msra.mxu0 0.0
      %1498 = vmatprep.subr.mxu0 0.0
      %1499 = vmatpush1.msra.mxu0 0.0
      %1500 = vmatprep.subr.mxu0 0.0
      %1501 = vmatpush1.msra.mxu0 0.0
      %1502 = vmatprep.subr.mxu0 0.0
      %1503 = vmatpush1.msra.mxu0 0.0
      %1504 = vmatprep.subr.mxu0 0.0
      %1505 = vmatpush1.msra.mxu0 0.0
      %1506 = vmatprep.subr.mxu0 0.0
      %1507 = vmatpush1.msra.mxu0 0.0
      %1508 = vmatprep.subr.mxu0 0.0
      %1509 = vmatpush1.msra.mxu0 0.0
      %1510 = vmatprep.subr.mxu0 0.0
      %1511 = vmatpush1.msra.mxu0 0.0
      %1512 = vmatprep.subr.mxu0 0.0
      %1513 = vmatpush1.msra.mxu0 0.0
      %1514 = vmatprep.subr.mxu0 0.0
      %1515 = vmatpush1.msra.mxu0 0.0
      %1516 = vmatprep.subr.mxu0 0.0
      %1517 = vmatpush1.msra.mxu0 0.0
      %1518 = vmatprep.mubr.f32.mxu0 0.0
      %1519 = vmatmul.mubr.f32.gmra.mrb[0].mxu0 %v724
      %v1520 = vpop.f32.mrb[0].mxu0
      %v1521 = vadd.f32 0.0, %v1520
      %v1522 = vpop.f32.mrb[0].mxu0
      %1523 = vmatprep.mubr.f32.mxu0 0.0
      %1524 = vmatmul.mubr.f32.gmra.mrb[0].mxu0 %v726
      %v1525 = vpop.f32.mrb[0].mxu0
      %v1526 = vadd.f32 0.0, %v1525
      %v1527 = vpop.f32.mrb[0].mxu0
      %1528 = vmatprep.mubr.f32.mxu0 0.0
      %1529 = vmatmul.mubr.f32.gmra.mrb[0].mxu0 %v728
      %v1530 = vpop.f32.mrb[0].mxu0
      %v1531 = vadd.f32 0.0, %v1530
      %v1532 = vpop.f32.mrb[0].mxu0
      %1533 = vmatprep.mubr.f32.mxu0 0.0
      %1534 = vmatmul.mubr.f32.gmra.mrb[0].mxu0 %v730
      %v1535 = vpop.f32.mrb[0].mxu0
      %v1536 = vadd.f32 0.0, %v1535
      %v1537 = vpop.f32.mrb[0].mxu0
      %1538 = vmatprep.mubr.f32.mxu0 0.0
      %1539 = vmatmul.mubr.f32.gmra.mrb[0].mxu0 %v732
      %v1540 = vpop.f32.mrb[0].mxu0
      %v1541 = vadd.f32 0.0, %v1540
      %v1542 = vpop.f32.mrb[0].mxu0
      %1543 = vmatprep.mubr.f32.mxu0 0.0
      %1544 = vmatmul.mubr.f32.gmra.mrb[0].mxu0 %v734
      %v1545 = vpop.f32.mrb[0].mxu0
      %v1546 = vadd.f32 0.0, %v1545
      %v1547 = vpop.f32.mrb[0].mxu0
      %1548 = vmatprep.mubr.f32.mxu0 0.0
      %1549 = vmatmul.mubr.f32.gmra.mrb[0].mxu0 %v1093
      %v1550 = vpop.f32.mrb[0].mxu0
      %v1551 = vadd.f32 0.0, %v1550
      %v1552 = vpop.f32.mrb[0].mxu0
      %1553 = vmatprep.mubr.f32.mxu0 0.0
      %1554 = vmatmul.mubr.f32.gmra.mrb[0].mxu0 %v1452
      %v1555 = vpop.f32.mrb[0].mxu0
      %v1556 = vadd.f32 0.0, %v1555
      %v1557 = vpop.f32.mrb[0].mxu0
      %1558 = vdwg.mxu0
      %v1559 = vadd.f32 %v1439, %v1521
      %v1560 = vadd.f32 %v1440, %v1526
      %v1561 = vadd.f32 %v1441, %v1531
      %v1562 = vadd.f32 %v1442, %v1536
      %v1563 = vadd.f32 %v1443, %v1541
      %v1564 = vadd.f32 %v1444, %v1546
      %v1565 = vadd.f32 %v1445, %v1551
      %v1566 = vadd.f32 %v1446, %v1556
      %1567 = vst.msk [vmem:[%s262] sm:$0xff] %vm450, %v1559
      %1568 = vst.msk [vmem:[%s262 + $0x8] sm:$0xff] %vm450, %v1560
      %1569 = vst.msk [vmem:[%s262 + $0x10] sm:$0xff] %vm450, %v1561
      %1570 = vst.msk [vmem:[%s262 + $0x18] sm:$0xff] %vm450, %v1562
      %1571 = vst.msk [vmem:[%s262 + $0x20] sm:$0xff] %vm450, %v1563
      %1572 = vst.msk [vmem:[%s262 + $0x28] sm:$0xff] %vm450, %v1564
      %1573 = vst.msk [vmem:[%s262 + $0x30] sm:$0xff] %vm450, %v1565
      %1574 = vst.msk [vmem:[%s262 + $0x38] sm:$0xff] %vm450, %v1566
      %v1575 = vsel %vm450, %v1559, 0.0
      %v1576 = vsel %vm450, %v1560, 0.0
      %v1577 = vadd.f32 %v1575, %v1576
      %v1578 = vsel %vm450, %v1561, 0.0
      %v1579 = vadd.f32 %v1577, %v1578
      %v1580 = vsel %vm450, %v1562, 0.0
      %v1581 = vadd.f32 %v1579, %v1580
      %v1582 = vsel %vm450, %v1563, 0.0
      %v1583 = vadd.f32 %v1581, %v1582
      %v1584 = vsel %vm450, %v1564, 0.0
      %v1585 = vadd.f32 %v1583, %v1584
      %v1586 = vsel %vm450, %v1565, 0.0
      %v1587 = vadd.f32 %v1585, %v1586
      %v1588 = vsel %vm450, %v1566, 0.0
      %v1589 = vadd.f32 %v1587, %v1588
      %v1590 = vrot.slane %v1589, 4
      %v1591 = vadd.f32 %v1589, %v1590
      %v1592 = vrot.slane %v1591, 2
      %v1593 = vadd.f32 %v1591, %v1592
      %v1594 = vrot.slane %v1593, 1
      %v1595 = vadd.f32 %v1593, %v1594
      %vm1596 = vcmask 57344
      %1597 = vst.msk [vmem:[%s265] sm:$0x1] %vm1596, %v1595
      %v1598 = vmul.f32 %v1559, %v1559
      %v1599 = vmul.f32 %v1560, %v1560
      %v1600 = vmul.f32 %v1561, %v1561
      %v1601 = vmul.f32 %v1562, %v1562
      %v1602 = vmul.f32 %v1563, %v1563
      %v1603 = vmul.f32 %v1564, %v1564
      %v1604 = vmul.f32 %v1565, %v1565
      %v1605 = vmul.f32 %v1566, %v1566
      %v1606 = vsel %vm450, %v1598, 0.0
      %v1607 = vsel %vm450, %v1599, 0.0
      %v1608 = vadd.f32 %v1606, %v1607
      %v1609 = vsel %vm450, %v1600, 0.0
      %v1610 = vadd.f32 %v1608, %v1609
      %v1611 = vsel %vm450, %v1601, 0.0
      %v1612 = vadd.f32 %v1610, %v1611
      %v1613 = vsel %vm450, %v1602, 0.0
      %v1614 = vadd.f32 %v1612, %v1613
      %v1615 = vsel %vm450, %v1603, 0.0
      %v1616 = vadd.f32 %v1614, %v1615
      %v1617 = vsel %vm450, %v1604, 0.0
      %v1618 = vadd.f32 %v1616, %v1617
      %v1619 = vsel %vm450, %v1605, 0.0
      %v1620 = vadd.f32 %v1618, %v1619
      %v1621 = vrot.slane %v1620, 4
      %v1622 = vadd.f32 %v1620, %v1621
      %v1623 = vrot.slane %v1622, 2
      %v1624 = vadd.f32 %v1622, %v1623
      %v1625 = vrot.slane %v1624, 1
      %v1626 = vadd.f32 %v1624, %v1625
      %1627 = vst.msk [vmem:[%s268] sm:$0x1] %vm1596, %v1626
      %p1628 = scmp.lt.s32.totalorder %s18, 1
      %s1629 = scalar_select %p1628, %s18, 1
      %s1630 = smul.addr %s1629, 8
      %s1631 = smul.addr %s1630, 8
      %s1632 = scalar_lea.vmem %s4, %s1631
      %p1633 = scmp.lt.s32.totalorder %s18, 1
      %s1634 = scalar_select %p1633, %s18, 1
      %s1635 = scalar_lea.vmem %s5, %s1634
      %p1636 = scmp.lt.s32.totalorder %s18, 1
      %s1637 = scalar_select %p1636, %s18, 1
      %s1638 = scalar_lea.vmem %s6, %s1637
      // Predicated region
      $region37: #{_lambda_.6} parent=35 // pred_check
        %p1639 = pneg %p125
      $region38: #{_lambda_.6} parent=35 // pred_check_branch
        %1641 = sbr.rel (%p1639) target = $region40
      $region39: #{_lambda_.6} parent=35 // pred_region
        _
      $region40: #{_lambda_.6} parent=35 // pred_fallthru
        _
      // Predicated region
      $region41: #{_lambda_.6} parent=35 // pred_check
        %p1642 = pneg %p151
      $region42: #{_lambda_.6} parent=35 // pred_check_branch
        %1644 = sbr.rel (%p1642) target = $region44
      $region43: #{_lambda_.6} parent=35 // pred_region
        _
      $region44: #{_lambda_.6} parent=35 // pred_fallthru
        _
      // Predicated region
      $region45: #{_lambda_.6} parent=35 // pred_check
        %p1645 = pneg %p177
      $region46: #{_lambda_.6} parent=35 // pred_check_branch
        %1647 = sbr.rel (%p1645) target = $region48
      $region47: #{_lambda_.6} parent=35 // pred_region
        _
      $region48: #{_lambda_.6} parent=35 // pred_fallthru
        _
    $region36: #{_lambda_.6} parent=5 // pred_fallthru
      _
    %p1648 = scmp.le.s32.totalorder 2, %s13
    // Predicated region
    $region49: #{_lambda_.6} parent=5 // pred_check
      %p1649 = pneg %p1648
    $region50: #{_lambda_.6} parent=5 // pred_check_branch
      %1651 = sbr.rel (%p1649) target = $region52
    $region51: #{_lambda_.6} parent=5 // pred_region
      %s1652 = ssub.s32 %s13, 2
      // Predicated region
      $region53: #{_lambda_.6} parent=51 // pred_check
        %p1653 = pneg %p131
      $region54: #{_lambda_.6} parent=51 // pred_check_branch
        %1655 = sbr.rel (%p1653) target = $region56
      $region55: #{_lambda_.6} parent=51 // pred_region
        %p1656 = scmp.lt.s32.totalorder %s19, 1
        %s1657 = scalar_select %p1656, %s19, 1
        %s1658 = smul.addr %s1657, 8
        %s1659 = smul.addr %s1658, 8
        %s1660 = scalar_lea.vmem %s4, %s1659
      $region56: #{_lambda_.6} parent=51 // pred_fallthru
        _
      // Predicated region
      $region57: #{_lambda_.6} parent=51 // pred_check
        %p1661 = pneg %p157
      $region58: #{_lambda_.6} parent=51 // pred_check_branch
        %1663 = sbr.rel (%p1661) target = $region60
      $region59: #{_lambda_.6} parent=51 // pred_region
        %p1664 = scmp.lt.s32.totalorder %s19, 1
        %s1665 = scalar_select %p1664, %s19, 1
        %s1666 = scalar_lea.vmem %s5, %s1665
      $region60: #{_lambda_.6} parent=51 // pred_fallthru
        _
      // Predicated region
      $region61: #{_lambda_.6} parent=51 // pred_check
        %p1667 = pneg %p183
      $region62: #{_lambda_.6} parent=51 // pred_check_branch
        %1669 = sbr.rel (%p1667) target = $region64
      $region63: #{_lambda_.6} parent=51 // pred_region
        %p1670 = scmp.lt.s32.totalorder %s19, 1
        %s1671 = scalar_select %p1670, %s19, 1
        %s1672 = scalar_lea.vmem %s6, %s1671
      $region64: #{_lambda_.6} parent=51 // pred_fallthru
        _
    $region52: #{_lambda_.6} parent=5 // pred_fallthru
      _
  $region6: #{_lambda_.6} parent=0 // loop_footer
    %s17 = sadd.s32 1, %s13
  $region7: #{_lambda_.6} parent=0 // loop_footer_branch
    %12 = sbr.rel target = $region3
  $region8: #{_lambda_.6} parent=0 // loop_exit
    _

</llo_original>
